<compile_context>
chip_gen: v7x
topology: tpu7x:2x2x1
jax: 0.10.0
libtpu: 0.0.40
codegen_flags: <defaults>
</compile_context>

<pallas_src>
import functools

import jax
import jax.numpy as jnp
from jax import lax
from jax.experimental import pallas as pl
from jax.experimental.pallas import tpu as pltpu

# ----------------------------- config -------------------------------------
IMG_SIZE = 16
PATCH_SIZE = 4
IN_CHANNELS = 3
NUM_CLASSES = 10
EMBED_DIM = 32
NUM_HEADS = 4
HEAD_DIM = EMBED_DIM // NUM_HEADS            # 8
HIDDEN_DIM = 64
NUM_LAYERS = 2
NUM_FEATURES = 32
NUM_PATCHES = (IMG_SIZE // PATCH_SIZE) ** 2  # 16
SEQ_LEN = NUM_PATCHES + 1                    # 17 (+ cls token)
SEQ_PAD = 24                                 # per-image row pad (multiple of 8)
BATCH = 2
PATCH_DIM = IN_CHANNELS * PATCH_SIZE * PATCH_SIZE  # 48
HF = NUM_HEADS * NUM_FEATURES                # 128
LOGIT_PAD = 128                              # lane-dense logits slab

MXU_DTYPE = jnp.bfloat16  # single-pass MXU path (perf review); set jnp.float32 for full f32

# ---- packed-slab layout (lane offsets inside per-layer slabs) ----
# w_embed slab: (L, EMBED_DIM, WE_W)
QKV_W = 2 * HF + EMBED_DIM                   # 288  = [Wq·K1 | Wk·K1 | Wv]
OFF_QKV = 0
OFF_FF1 = QKV_W                              # 288
OFF_WO = OFF_FF1 + HIDDEN_DIM                # 352
WE_W = OFF_WO + EMBED_DIM                    # 384

# w_hf slab: (L, HF, WH_W)
OFF_BD2 = 0                                  # block-diag kfm_w2 (128x128)
OFF_FF2 = HF                                 # 128 (ff_w2 in rows 0:64)
OFF_MASK = OFF_FF2 + EMBED_DIM               # 160 (head block-diag 0/1 mask)
WH_W = OFF_MASK + EMBED_DIM                  # 192

# vec slab: (L, 1, VEC_W) — all per-layer biases / LN params
OFF_B_QKV = 0
OFF_B_BD2 = QKV_W                            # 288
OFF_BO = OFF_B_BD2 + HF                      # 416
OFF_LN1G = OFF_BO + EMBED_DIM                # 448
OFF_LN1B = OFF_LN1G + EMBED_DIM              # 480
OFF_FB1 = OFF_LN1B + EMBED_DIM               # 512
OFF_FB2 = OFF_FB1 + HIDDEN_DIM               # 576
OFF_LN2G = OFF_FB2 + EMBED_DIM               # 608
OFF_LN2B = OFF_LN2G + EMBED_DIM              # 640
VEC_W = OFF_LN2B + EMBED_DIM                 # 672

# const slab: (CONST_ROWS, LOGIT_PAD) — patch_w + classification head
ROW_PATCH_W = 0                              # rows 0:48, lanes 0:32
ROW_HEAD_W = PATCH_DIM                       # rows 48:80
ROW_HEAD_B = ROW_HEAD_W + EMBED_DIM          # 80
ROW_HEAD_LNG = ROW_HEAD_B + 1                # 81
ROW_HEAD_LNB = ROW_HEAD_LNG + 1              # 82
CONST_ROWS = 88


# ----------------------------- in-kernel helpers ----------------------------
def _layernorm(x, g, b, eps=1e-5):
    mu = jnp.mean(x, axis=-1, keepdims=True)
    var = jnp.mean((x - mu) ** 2, axis=-1, keepdims=True)
    return (x - mu) * lax.rsqrt(var + eps) * g + b


def _softplus(y):
    # numerically stable softplus (matches torch.nn.Softplus, beta=1)
    return jnp.maximum(y, 0.0) + jnp.log(1.0 + jnp.exp(-jnp.abs(y)))


def _gelu(y):
    # exact (erf-based) GELU, matching torch.nn.GELU default
    return 0.5 * y * (1.0 + lax.erf(y * 0.7071067811865476))


# ----------------------------- fused kernel ---------------------------------
def _performer_fwd_kernel(patches_ref, tok_add_ref, const_ref,
                          w_embed_ref, w_hf_ref, vec_ref, o_ref, *, imgs):
    def mm(a, b):
        # single-pass MXU matmul (bf16 operands, f32 accumulate)
        return jnp.dot(a.astype(MXU_DTYPE), b.astype(MXU_DTYPE),
                       preferred_element_type=jnp.float32)

    # ---- token assembly: one matmul + add (cls / pos / patch-bias prefolded into tok_add)
    patch_w = const_ref[ROW_PATCH_W:ROW_PATCH_W + PATCH_DIM, 0:EMBED_DIM]   # (48, 32)
    src = mm(patches_ref[...], patch_w) + tok_add_ref[...]                  # (imgs*24, 32)

    # block-diagonal head mask (precomputed 0/1 constant, packed in the HF slab)
    head_mask = w_hf_ref[0, :, OFF_MASK:OFF_MASK + EMBED_DIM]               # (128, 32)

    for li in range(NUM_LAYERS):
        def vv(off, width, _li=li):
            return vec_ref[_li, :, off:off + width]                         # (1, width)

        # fused [Wq·K1 | Wk·K1 | Wv] projection, ReLU on the kfm hidden only
        qkv = mm(src, w_embed_ref[li, :, OFF_QKV:OFF_QKV + QKV_W]) + vv(OFF_B_QKV, QKV_W)
        qk_h = jnp.maximum(qkv[:, :2 * HF], 0.0)                            # (rows, 256)
        v = qkv[:, 2 * HF:]                                                 # (rows, 32)

        # block-diagonal kfm second linear (shared across heads & Q/K) + softplus
        w_bd2 = w_hf_ref[li, :, OFF_BD2:OFF_BD2 + HF]                       # (128, 128)
        b_bd2 = vv(OFF_B_BD2, HF)
        qf = _softplus(mm(qk_h[:, :HF], w_bd2) + b_bd2)                     # (rows, 128)
        kf = _softplus(mm(qk_h[:, HF:], w_bd2) + b_bd2)                     # (rows, 128)

        # linear attention per image (reference has no denominator / sqrt(d) scaling):
        #   KV = Kf^T V  (head block-diag via mask),  O = Qf KV
        o_parts = []
        for b in range(imgs):
            r0 = b * SEQ_PAD
            kv = lax.dot_general(kf[r0:r0 + SEQ_LEN], v[r0:r0 + SEQ_LEN],
                                 (((0,), (0,)), ((), ())),
                                 preferred_element_type=jnp.float32)        # (128, 32)
            kv = kv * head_mask
            o_parts.append(mm(qf[r0:r0 + SEQ_PAD], kv))                     # (24, 32)
        o = jnp.concatenate(o_parts, axis=0) if imgs > 1 else o_parts[0]

        attn = mm(o, w_embed_ref[li, :, OFF_WO:OFF_WO + EMBED_DIM]) + vv(OFF_BO, EMBED_DIM)
        src = _layernorm(src + attn, vv(OFF_LN1G, EMBED_DIM), vv(OFF_LN1B, EMBED_DIM))

        # feed-forward
        h = _gelu(mm(src, w_embed_ref[li, :, OFF_FF1:OFF_FF1 + HIDDEN_DIM])
                  + vv(OFF_FB1, HIDDEN_DIM))
        ff = mm(h, w_hf_ref[li, 0:HIDDEN_DIM, OFF_FF2:OFF_FF2 + EMBED_DIM]) \
            + vv(OFF_FB2, EMBED_DIM)
        src = _layernorm(src + ff, vv(OFF_LN2G, EMBED_DIM), vv(OFF_LN2B, EMBED_DIM))

    # ---- classification head on the cls row of each image (128-lane padded logits) ----
    hg = const_ref[ROW_HEAD_LNG:ROW_HEAD_LNG + 1, 0:EMBED_DIM]
    hb = const_ref[ROW_HEAD_LNB:ROW_HEAD_LNB + 1, 0:EMBED_DIM]
    head_w = const_ref[ROW_HEAD_W:ROW_HEAD_W + EMBED_DIM, :]                # (32, 128)
    head_b = const_ref[ROW_HEAD_B:ROW_HEAD_B + 1, :]                        # (1, 128)
    for b in range(imgs):
        cls = _layernorm(src[b * SEQ_PAD:b * SEQ_PAD + 1, :], hg, hb)
        o_ref[0, b:b + 1, :] = mm(cls, head_w) + head_b


# ----------------------------- one-time weight fusion / packing ----------------
def prepare_fused(params, imgs_per_step):
    """Precompute all fused / packed operand slabs (run ONCE, outside the jit path)."""
    imgs = imgs_per_step

    # per-row additive constant: cls+pos[0] on cls rows, patch_b+pos[1:] on patch rows, 0 on pads
    pos = params["pos_embed"]                                               # (17, 32)
    tok1 = jnp.zeros((SEQ_PAD, EMBED_DIM), jnp.float32)
    tok1 = tok1.at[0].set(params["cls_token"].reshape(EMBED_DIM) + pos[0])
    tok1 = tok1.at[1:SEQ_LEN].set(params["patch_b"][None, :] + pos[1:])
    tok_add = jnp.tile(tok1, (imgs, 1))                                     # (imgs*24, 32)

    # const slab: patch_w + classification head (lane-padded to 128)
    const = jnp.zeros((CONST_ROWS, LOGIT_PAD), jnp.float32)
    const = const.at[ROW_PATCH_W:ROW_PATCH_W + PATCH_DIM, 0:EMBED_DIM].set(params["patch_w"])
    const = const.at[ROW_HEAD_W:ROW_HEAD_W + EMBED_DIM, 0:NUM_CLASSES].set(params["head_w"])
    const = const.at[ROW_HEAD_B, 0:NUM_CLASSES].set(params["head_b"])
    const = const.at[ROW_HEAD_LNG, 0:EMBED_DIM].set(params["head_ln_g"])
    const = const.at[ROW_HEAD_LNB, 0:EMBED_DIM].set(params["head_ln_b"])

    # block-diagonal head mask: feature f (head f//F) matches value dim e (head e//Dh)
    head_mask = (jnp.arange(HF)[:, None] // NUM_FEATURES
                 == jnp.arange(EMBED_DIM)[None, :] // HEAD_DIM).astype(jnp.float32)

    w_embed, w_hf, vec = [], [], []
    for lp in params["layers"]:
        kfm_w1, kfm_b1 = lp["kfm_w1"], lp["kfm_b1"]                         # (8,32), (32,)

        def fuse(w, b):
            # precompose per-head projection slice with kfm first linear (exact: no
            # nonlinearity between the projection and kfm linear1 in the reference)
            wh = w.reshape(EMBED_DIM, NUM_HEADS, HEAD_DIM)
            wf = jnp.einsum("ehd,df->ehf", wh, kfm_w1).reshape(EMBED_DIM, HF)
            bf = (b.reshape(NUM_HEADS, HEAD_DIM) @ kfm_w1 + kfm_b1[None, :]).reshape(HF)
            return wf, bf

        wqf, bqf = fuse(lp["wq"], lp["bq"])
        wkf, bkf = fuse(lp["wk"], lp["bk"])

        we = jnp.zeros((EMBED_DIM, WE_W), jnp.float32)
        we = we.at[:, OFF_QKV:OFF_QKV + HF].set(wqf)
        we = we.at[:, OFF_QKV + HF:OFF_QKV + 2 * HF].set(wkf)
        we = we.at[:, OFF_QKV + 2 * HF:OFF_QKV + QKV_W].set(lp["wv"])
        we = we.at[:, OFF_FF1:OFF_FF1 + HIDDEN_DIM].set(lp["ff_w1"])
        we = we.at[:, OFF_WO:OFF_WO + EMBED_DIM].set(lp["wo"])
        w_embed.append(we)

        wh_ = jnp.zeros((HF, WH_W), jnp.float32)
        wh_ = wh_.at[:, OFF_BD2:OFF_BD2 + HF].set(
            jnp.kron(jnp.eye(NUM_HEADS, dtype=jnp.float32), lp["kfm_w2"]))
        wh_ = wh_.at[0:HIDDEN_DIM, OFF_FF2:OFF_FF2 + EMBED_DIM].set(lp["ff_w2"])
        wh_ = wh_.at[:, OFF_MASK:OFF_MASK + EMBED_DIM].set(head_mask)
        w_hf.append(wh_)

        ve = jnp.zeros((1, VEC_W), jnp.float32)
        ve = ve.at[0, OFF_B_QKV:OFF_B_QKV + HF].set(bqf)
        ve = ve.at[0, OFF_B_QKV + HF:OFF_B_QKV + 2 * HF].set(bkf)
        ve = ve.at[0, OFF_B_QKV + 2 * HF:OFF_B_QKV + QKV_W].set(lp["bv"])
        ve = ve.at[0, OFF_B_BD2:OFF_B_BD2 + HF].set(jnp.tile(lp["kfm_b2"], NUM_HEADS))
        ve = ve.at[0, OFF_BO:OFF_BO + EMBED_DIM].set(lp["bo"])
        ve = ve.at[0, OFF_LN1G:OFF_LN1G + EMBED_DIM].set(lp["ln1_g"])
        ve = ve.at[0, OFF_LN1B:OFF_LN1B + EMBED_DIM].set(lp["ln1_b"])
        ve = ve.at[0, OFF_FB1:OFF_FB1 + HIDDEN_DIM].set(lp["ff_b1"])
        ve = ve.at[0, OFF_FB2:OFF_FB2 + EMBED_DIM].set(lp["ff_b2"])
        ve = ve.at[0, OFF_LN2G:OFF_LN2G + EMBED_DIM].set(lp["ln2_g"])
        ve = ve.at[0, OFF_LN2B:OFF_LN2B + EMBED_DIM].set(lp["ln2_b"])
        vec.append(ve)

    return dict(tok_add=tok_add, const_slab=const,
                w_embed=jnp.stack(w_embed), w_hf=jnp.stack(w_hf), vec=jnp.stack(vec))


# ----------------------------- forward wrapper --------------------------------
def model_forward(x, fused):
    """x: (B, C, H, W) float32 -> logits (B, num_classes). `fused` from prepare_fused()."""
    B = x.shape[0]
    imgs = fused["tok_add"].shape[0] // SEQ_PAD      # images per grid step (static)
    assert B % imgs == 0
    num_steps = B // imgs
    p = PATCH_SIZE
    nph = IMG_SIZE // p

    # patch extraction (tiny XLA glue; the pixel gather is not expressible as a pure reshape)
    patches = x.reshape(B, IN_CHANNELS, nph, p, nph, p)
    patches = patches.transpose(0, 2, 4, 1, 3, 5).reshape(B, NUM_PATCHES, PATCH_DIM)
    # pad each image to SEQ_PAD token rows: [cls-slot(0), 16 patches, 7 zero rows]
    patches = jnp.pad(patches, ((0, 0), (1, SEQ_PAD - 1 - NUM_PATCHES), (0, 0)))
    patches = patches.reshape(B * SEQ_PAD, PATCH_DIM)

    kernel = functools.partial(_performer_fwd_kernel, imgs=imgs)
    out = pl.pallas_call(
        kernel,
        grid=(num_steps,),
        out_shape=jax.ShapeDtypeStruct((num_steps, imgs, LOGIT_PAD), jnp.float32),
        in_specs=[
            pl.BlockSpec((imgs * SEQ_PAD, PATCH_DIM), lambda g: (g, 0)),       # patches
            pl.BlockSpec((imgs * SEQ_PAD, EMBED_DIM), lambda g: (0, 0)),       # tok_add
            pl.BlockSpec((CONST_ROWS, LOGIT_PAD), lambda g: (0, 0)),           # const slab
            pl.BlockSpec((NUM_LAYERS, EMBED_DIM, WE_W), lambda g: (0, 0, 0)),  # w_embed slab
            pl.BlockSpec((NUM_LAYERS, HF, WH_W), lambda g: (0, 0, 0)),         # w_hf slab
            pl.BlockSpec((NUM_LAYERS, 1, VEC_W), lambda g: (0, 0, 0)),         # vec slab
        ],
        out_specs=pl.BlockSpec((1, imgs, LOGIT_PAD), lambda g: (g, 0, 0)),
        compiler_params=pltpu.CompilerParams(dimension_semantics=("parallel",)),
    )(patches, fused["tok_add"], fused["const_slab"],
      fused["w_embed"], fused["w_hf"], fused["vec"])
    return out.reshape(B, LOGIT_PAD)[:, :NUM_CLASSES]


# ----------------------------- parameters ------------------------------------
def sinusoidal_pos_encoding(max_len, d_model):
    pos = jnp.arange(max_len, dtype=jnp.float32)[:, None]
    i = jnp.arange(0, d_model, 2, dtype=jnp.float32)
    div = jnp.exp(-i * (jnp.log(10000.0) / d_model))
    pe = jnp.zeros((max_len, d_model), jnp.float32)
    pe = pe.at[:, 0::2].set(jnp.sin(pos * div))
    pe = pe.at[:, 1::2].set(jnp.cos(pos * div))
    return pe


def init_params(key):
    def dense(k, fan_in, fan_out):
        # torch Linear layout is (out, in); we store pre-transposed (in, out)
        kw, kb = jax.random.split(k)
        w = jax.random.normal(kw, (fan_in, fan_out), jnp.float32) * 0.02
        b = jax.random.normal(kb, (fan_out,), jnp.float32) * 0.02
        return w, b

    keys = jax.random.split(key, 4 + NUM_LAYERS)
    params = {}
    pw, pb = dense(keys[0], PATCH_DIM, EMBED_DIM)
    params["patch_w"], params["patch_b"] = pw, pb
    params["cls_token"] = jnp.zeros((1, 1, EMBED_DIM), jnp.float32)
    params["pos_embed"] = sinusoidal_pos_encoding(SEQ_LEN, EMBED_DIM)

    layers = []
    for li in range(NUM_LAYERS):
        lk = jax.random.split(keys[2 + li], 8)
        lp = {}
        lp["wq"], lp["bq"] = dense(lk[0], EMBED_DIM, EMBED_DIM)
        lp["wk"], lp["bk"] = dense(lk[1], EMBED_DIM, EMBED_DIM)
        lp["wv"], lp["bv"] = dense(lk[2], EMBED_DIM, EMBED_DIM)
        lp["wo"], lp["bo"] = dense(lk[3], EMBED_DIM, EMBED_DIM)
        lp["kfm_w1"], lp["kfm_b1"] = dense(lk[4], HEAD_DIM, NUM_FEATURES)
        lp["kfm_w2"], lp["kfm_b2"] = dense(lk[5], NUM_FEATURES, NUM_FEATURES)
        lp["ff_w1"], lp["ff_b1"] = dense(lk[6], EMBED_DIM, HIDDEN_DIM)
        lp["ff_w2"], lp["ff_b2"] = dense(lk[7], HIDDEN_DIM, EMBED_DIM)
        lp["ln1_g"] = jnp.ones((EMBED_DIM,), jnp.float32)
        lp["ln1_b"] = jnp.zeros((EMBED_DIM,), jnp.float32)
        lp["ln2_g"] = jnp.ones((EMBED_DIM,), jnp.float32)
        lp["ln2_b"] = jnp.zeros((EMBED_DIM,), jnp.float32)
        layers.append(lp)
    params["layers"] = layers

    params["head_ln_g"] = jnp.ones((EMBED_DIM,), jnp.float32)
    params["head_ln_b"] = jnp.zeros((EMBED_DIM,), jnp.float32)
    hw, hb = dense(keys[1], EMBED_DIM, NUM_CLASSES)
    params["head_w"], params["head_b"] = hw, hb
    return params


# ----------------------------- main -------------------------------------------
if __name__ == "__main__":
    key = jax.random.PRNGKey(0)
    pkey, xkey = jax.random.split(key)
    params = init_params(pkey)
    x = jax.random.normal(xkey, (BATCH, IN_CHANNELS, IMG_SIZE, IMG_SIZE), jnp.float32)

    # One-time weight fusion / packing (hoisted out of the per-call jit path).
    # Single-TC chips (v5e/v6e): fold the whole batch into one grid step (default below).
    # On v7x, use imgs_per_step=BATCH // 2 so each TensorCore gets one image.
    fused = prepare_fused(params, imgs_per_step=BATCH)

    fwd = jax.jit(model_forward)
    logits = fwd(x, fused)
    jax.block_until_ready(logits)
    assert logits.shape == (BATCH, NUM_CLASSES)
    assert bool(jnp.all(jnp.isfinite(logits)))
    print("KERNEL_OK")
</pallas_src>

<mosaic_0001>
module attributes {stable_mosaic.version = 11 : i64} {
  func.func @_performer_fwd_kernel(%arg0: i32, %arg1: memref<48x48xf32, #tpu.memory_space<vmem>>, %arg2: memref<48x32xf32, #tpu.memory_space<vmem>>, %arg3: memref<88x128xf32, #tpu.memory_space<vmem>>, %arg4: memref<2x32x384xf32, #tpu.memory_space<vmem>>, %arg5: memref<2x128x192xf32, #tpu.memory_space<vmem>>, %arg6: memref<2x1x672xf32, #tpu.memory_space<vmem>>, %arg7: memref<1x2x128xf32, #tpu.memory_space<vmem>>) attributes {dimension_semantics = [#tpu.dimension_semantics<parallel>], iteration_bounds = array<i64: 1>, scalar_prefetch = 0 : i64, scratch_operands = 0 : i64, tpu.core_type = #tpu.core_type<tc>, window_params = [{transform_indices = @transform_0, window_bounds = array<i64: 48, 48>}, {pipeline_mode = #tpu.pipeline_mode<synchronous>, transform_indices = @transform_1, window_bounds = array<i64: 48, 32>}, {pipeline_mode = #tpu.pipeline_mode<synchronous>, transform_indices = @transform_2, window_bounds = array<i64: 88, 128>}, {pipeline_mode = #tpu.pipeline_mode<synchronous>, transform_indices = @transform_3, window_bounds = array<i64: 2, 32, 384>}, {pipeline_mode = #tpu.pipeline_mode<synchronous>, transform_indices = @transform_4, window_bounds = array<i64: 2, 128, 192>}, {pipeline_mode = #tpu.pipeline_mode<synchronous>, transform_indices = @transform_5, window_bounds = array<i64: 2, 1, 672>}, {transform_indices = @transform_6, window_bounds = array<i64: 1, 2, 128>}]} {
    %c0 = arith.constant 0 : index
    %c0_0 = arith.constant 0 : index
    %0 = vector.load %arg3[%c0, %c0_0] : memref<88x128xf32, #tpu.memory_space<vmem>>, vector<48x32xf32>
    %c0_1 = arith.constant 0 : index
    %c0_2 = arith.constant 0 : index
    %1 = vector.load %arg1[%c0_1, %c0_2] : memref<48x48xf32, #tpu.memory_space<vmem>>, vector<48x48xf32>
    %2 = arith.truncf %1 : vector<48x48xf32> to vector<48x48xbf16>
    %3 = arith.truncf %0 : vector<48x32xf32> to vector<48x32xbf16>
    %cst = arith.constant dense<0.000000e+00> : vector<48x32xf32>
    %4 = tpu.matmul %2, %3, %cst {dimension_numbers = #tpu.dot_dimension_numbers<[1], [0], [0], [1], [0, 0, 1, 1], [], []>} : vector<48x48xbf16>, vector<48x32xbf16>, vector<48x32xf32> -> vector<48x32xf32>
    %c0_3 = arith.constant 0 : index
    %c0_4 = arith.constant 0 : index
    %5 = vector.load %arg2[%c0_3, %c0_4] : memref<48x32xf32, #tpu.memory_space<vmem>>, vector<48x32xf32>
    %6 = arith.addf %4, %5 : vector<48x32xf32>
    %c0_5 = arith.constant 0 : index
    %c0_6 = arith.constant 0 : index
    %c160 = arith.constant 160 : index
    %7 = vector.load %arg5[%c0_5, %c0_6, %c160] : memref<2x128x192xf32, #tpu.memory_space<vmem>>, vector<1x128x32xf32>
    %8 = vector.shape_cast %7 : vector<1x128x32xf32> to vector<128x32xf32>
    %c0_7 = arith.constant 0 : index
    %c0_8 = arith.constant 0 : index
    %c0_9 = arith.constant 0 : index
    %9 = vector.load %arg4[%c0_7, %c0_8, %c0_9] : memref<2x32x384xf32, #tpu.memory_space<vmem>>, vector<1x32x288xf32>
    %10 = vector.shape_cast %9 : vector<1x32x288xf32> to vector<32x288xf32>
    %11 = arith.truncf %6 : vector<48x32xf32> to vector<48x32xbf16>
    %12 = arith.truncf %10 : vector<32x288xf32> to vector<32x288xbf16>
    %cst_10 = arith.constant dense<0.000000e+00> : vector<48x288xf32>
    %13 = tpu.matmul %11, %12, %cst_10 {dimension_numbers = #tpu.dot_dimension_numbers<[1], [0], [0], [1], [0, 0, 1, 1], [], []>} : vector<48x32xbf16>, vector<32x288xbf16>, vector<48x288xf32> -> vector<48x288xf32>
    %c0_11 = arith.constant 0 : index
    %c0_12 = arith.constant 0 : index
    %c0_13 = arith.constant 0 : index
    %14 = vector.load %arg6[%c0_11, %c0_12, %c0_13] : memref<2x1x672xf32, #tpu.memory_space<vmem>>, vector<1x1x288xf32>
    %15 = vector.shape_cast %14 : vector<1x1x288xf32> to vector<1x288xf32>
    %16 = vector.broadcast %15 : vector<1x288xf32> to vector<48x288xf32>
    %17 = arith.addf %13, %16 : vector<48x288xf32>
    %18 = vector.extract_strided_slice %17 {offsets = [0, 0], sizes = [48, 256], strides = [1, 1]} : vector<48x288xf32> to vector<48x256xf32>
    %cst_14 = arith.constant 0.000000e+00 : f32
    %19 = vector.broadcast %cst_14 : f32 to vector<48x256xf32>
    %20 = arith.maximumf %18, %19 : vector<48x256xf32>
    %21 = vector.extract_strided_slice %17 {offsets = [0, 256], sizes = [48, 32], strides = [1, 1]} : vector<48x288xf32> to vector<48x32xf32>
    %c0_15 = arith.constant 0 : index
    %c0_16 = arith.constant 0 : index
    %c0_17 = arith.constant 0 : index
    %22 = vector.load %arg5[%c0_15, %c0_16, %c0_17] : memref<2x128x192xf32, #tpu.memory_space<vmem>>, vector<1x128x128xf32>
    %23 = vector.shape_cast %22 : vector<1x128x128xf32> to vector<128x128xf32>
    %c0_18 = arith.constant 0 : index
    %c0_19 = arith.constant 0 : index
    %c288 = arith.constant 288 : index
    %24 = vector.load %arg6[%c0_18, %c0_19, %c288] : memref<2x1x672xf32, #tpu.memory_space<vmem>>, vector<1x1x128xf32>
    %25 = vector.shape_cast %24 : vector<1x1x128xf32> to vector<1x128xf32>
    %26 = vector.extract_strided_slice %20 {offsets = [0, 0], sizes = [48, 128], strides = [1, 1]} : vector<48x256xf32> to vector<48x128xf32>
    %27 = arith.truncf %26 : vector<48x128xf32> to vector<48x128xbf16>
    %28 = arith.truncf %23 : vector<128x128xf32> to vector<128x128xbf16>
    %cst_20 = arith.constant dense<0.000000e+00> : vector<48x128xf32>
    %29 = tpu.matmul %27, %28, %cst_20 {dimension_numbers = #tpu.dot_dimension_numbers<[1], [0], [0], [1], [0, 0, 1, 1], [], []>} : vector<48x128xbf16>, vector<128x128xbf16>, vector<48x128xf32> -> vector<48x128xf32>
    %30 = vector.broadcast %25 : vector<1x128xf32> to vector<48x128xf32>
    %31 = arith.addf %29, %30 : vector<48x128xf32>
    %cst_21 = arith.constant 0.000000e+00 : f32
    %32 = vector.broadcast %cst_21 : f32 to vector<48x128xf32>
    %33 = arith.maximumf %31, %32 : vector<48x128xf32>
    %34 = math.absf %31 : vector<48x128xf32>
    %cst_22 = arith.constant 0.000000e+00 : f32
    %35 = vector.broadcast %cst_22 : f32 to vector<48x128xf32>
    %36 = arith.subf %35, %34 : vector<48x128xf32>
    %37 = math.exp %36 : vector<48x128xf32>
    %cst_23 = arith.constant 1.000000e+00 : f32
    %38 = vector.broadcast %cst_23 : f32 to vector<48x128xf32>
    %39 = arith.addf %38, %37 : vector<48x128xf32>
    %40 = math.log %39 : vector<48x128xf32>
    %41 = arith.addf %33, %40 : vector<48x128xf32>
    %42 = vector.extract_strided_slice %20 {offsets = [0, 128], sizes = [48, 128], strides = [1, 1]} : vector<48x256xf32> to vector<48x128xf32>
    %43 = arith.truncf %42 : vector<48x128xf32> to vector<48x128xbf16>
    %44 = arith.truncf %23 : vector<128x128xf32> to vector<128x128xbf16>
    %cst_24 = arith.constant dense<0.000000e+00> : vector<48x128xf32>
    %45 = tpu.matmul %43, %44, %cst_24 {dimension_numbers = #tpu.dot_dimension_numbers<[1], [0], [0], [1], [0, 0, 1, 1], [], []>} : vector<48x128xbf16>, vector<128x128xbf16>, vector<48x128xf32> -> vector<48x128xf32>
    %46 = vector.broadcast %25 : vector<1x128xf32> to vector<48x128xf32>
    %47 = arith.addf %45, %46 : vector<48x128xf32>
    %cst_25 = arith.constant 0.000000e+00 : f32
    %48 = vector.broadcast %cst_25 : f32 to vector<48x128xf32>
    %49 = arith.maximumf %47, %48 : vector<48x128xf32>
    %50 = math.absf %47 : vector<48x128xf32>
    %cst_26 = arith.constant 0.000000e+00 : f32
    %51 = vector.broadcast %cst_26 : f32 to vector<48x128xf32>
    %52 = arith.subf %51, %50 : vector<48x128xf32>
    %53 = math.exp %52 : vector<48x128xf32>
    %cst_27 = arith.constant 1.000000e+00 : f32
    %54 = vector.broadcast %cst_27 : f32 to vector<48x128xf32>
    %55 = arith.addf %54, %53 : vector<48x128xf32>
    %56 = math.log %55 : vector<48x128xf32>
    %57 = arith.addf %49, %56 : vector<48x128xf32>
    %58 = vector.extract_strided_slice %57 {offsets = [0, 0], sizes = [17, 128], strides = [1, 1]} : vector<48x128xf32> to vector<17x128xf32>
    %59 = vector.extract_strided_slice %21 {offsets = [0, 0], sizes = [17, 32], strides = [1, 1]} : vector<48x32xf32> to vector<17x32xf32>
    %cst_28 = arith.constant dense<0.000000e+00> : vector<128x32xf32>
    %60 = tpu.matmul %58, %59, %cst_28 {dimension_numbers = #tpu.dot_dimension_numbers<[0], [0], [1], [1], [0, 1, 1, 1], [], []>} : vector<17x128xf32>, vector<17x32xf32>, vector<128x32xf32> -> vector<128x32xf32>
    %61 = arith.mulf %60, %8 : vector<128x32xf32>
    %62 = vector.extract_strided_slice %41 {offsets = [0, 0], sizes = [24, 128], strides = [1, 1]} : vector<48x128xf32> to vector<24x128xf32>
    %63 = arith.truncf %62 : vector<24x128xf32> to vector<24x128xbf16>
    %64 = arith.truncf %61 : vector<128x32xf32> to vector<128x32xbf16>
    %cst_29 = arith.constant dense<0.000000e+00> : vector<24x32xf32>
    %65 = tpu.matmul %63, %64, %cst_29 {dimension_numbers = #tpu.dot_dimension_numbers<[1], [0], [0], [1], [0, 0, 1, 1], [], []>} : vector<24x128xbf16>, vector<128x32xbf16>, vector<24x32xf32> -> vector<24x32xf32>
    %66 = vector.extract_strided_slice %57 {offsets = [24, 0], sizes = [17, 128], strides = [1, 1]} : vector<48x128xf32> to vector<17x128xf32>
    %67 = vector.extract_strided_slice %21 {offsets = [24, 0], sizes = [17, 32], strides = [1, 1]} : vector<48x32xf32> to vector<17x32xf32>
    %cst_30 = arith.constant dense<0.000000e+00> : vector<128x32xf32>
    %68 = tpu.matmul %66, %67, %cst_30 {dimension_numbers = #tpu.dot_dimension_numbers<[0], [0], [1], [1], [0, 1, 1, 1], [], []>} : vector<17x128xf32>, vector<17x32xf32>, vector<128x32xf32> -> vector<128x32xf32>
    %69 = arith.mulf %68, %8 : vector<128x32xf32>
    %70 = vector.extract_strided_slice %41 {offsets = [24, 0], sizes = [24, 128], strides = [1, 1]} : vector<48x128xf32> to vector<24x128xf32>
    %71 = arith.truncf %70 : vector<24x128xf32> to vector<24x128xbf16>
    %72 = arith.truncf %69 : vector<128x32xf32> to vector<128x32xbf16>
    %cst_31 = arith.constant dense<0.000000e+00> : vector<24x32xf32>
    %73 = tpu.matmul %71, %72, %cst_31 {dimension_numbers = #tpu.dot_dimension_numbers<[1], [0], [0], [1], [0, 0, 1, 1], [], []>} : vector<24x128xbf16>, vector<128x32xbf16>, vector<24x32xf32> -> vector<24x32xf32>
    %74 = tpu.concatenate %65, %73 in 0 : vector<24x32xf32>, vector<24x32xf32> -> vector<48x32xf32>
    %c0_32 = arith.constant 0 : index
    %c0_33 = arith.constant 0 : index
    %c352 = arith.constant 352 : index
    %75 = vector.load %arg4[%c0_32, %c0_33, %c352] : memref<2x32x384xf32, #tpu.memory_space<vmem>>, vector<1x32x32xf32>
    %76 = vector.shape_cast %75 : vector<1x32x32xf32> to vector<32x32xf32>
    %77 = arith.truncf %74 : vector<48x32xf32> to vector<48x32xbf16>
    %78 = arith.truncf %76 : vector<32x32xf32> to vector<32x32xbf16>
    %cst_34 = arith.constant dense<0.000000e+00> : vector<48x32xf32>
    %79 = tpu.matmul %77, %78, %cst_34 {dimension_numbers = #tpu.dot_dimension_numbers<[1], [0], [0], [1], [0, 0, 1, 1], [], []>} : vector<48x32xbf16>, vector<32x32xbf16>, vector<48x32xf32> -> vector<48x32xf32>
    %c0_35 = arith.constant 0 : index
    %c0_36 = arith.constant 0 : index
    %c416 = arith.constant 416 : index
    %80 = vector.load %arg6[%c0_35, %c0_36, %c416] : memref<2x1x672xf32, #tpu.memory_space<vmem>>, vector<1x1x32xf32>
    %81 = vector.shape_cast %80 : vector<1x1x32xf32> to vector<1x32xf32>
    %82 = vector.broadcast %81 : vector<1x32xf32> to vector<48x32xf32>
    %83 = arith.addf %79, %82 : vector<48x32xf32>
    %84 = arith.addf %6, %83 : vector<48x32xf32>
    %c0_37 = arith.constant 0 : index
    %c0_38 = arith.constant 0 : index
    %c448 = arith.constant 448 : index
    %85 = vector.load %arg6[%c0_37, %c0_38, %c448] : memref<2x1x672xf32, #tpu.memory_space<vmem>>, vector<1x1x32xf32>
    %86 = vector.shape_cast %85 : vector<1x1x32xf32> to vector<1x32xf32>
    %c0_39 = arith.constant 0 : index
    %c0_40 = arith.constant 0 : index
    %c480 = arith.constant 480 : index
    %87 = vector.load %arg6[%c0_39, %c0_40, %c480] : memref<2x1x672xf32, #tpu.memory_space<vmem>>, vector<1x1x32xf32>
    %88 = vector.shape_cast %87 : vector<1x1x32xf32> to vector<1x32xf32>
    %cst_41 = arith.constant dense<0.000000e+00> : vector<48xf32>
    %89 = vector.multi_reduction <add>, %84, %cst_41 [1] : vector<48x32xf32> to vector<48xf32>
    %90 = vector.shape_cast %89 : vector<48xf32> to vector<48x1xf32>
    %cst_42 = arith.constant 3.200000e+01 : f32
    %91 = vector.broadcast %cst_42 : f32 to vector<48x1xf32>
    %92 = arith.divf %90, %91 : vector<48x1xf32>
    %93 = vector.broadcast %92 : vector<48x1xf32> to vector<48x32xf32>
    %94 = arith.subf %84, %93 : vector<48x32xf32>
    %95 = arith.mulf %94, %94 : vector<48x32xf32>
    %cst_43 = arith.constant dense<0.000000e+00> : vector<48xf32>
    %96 = vector.multi_reduction <add>, %95, %cst_43 [1] : vector<48x32xf32> to vector<48xf32>
    %97 = vector.shape_cast %96 : vector<48xf32> to vector<48x1xf32>
    %cst_44 = arith.constant 3.200000e+01 : f32
    %98 = vector.broadcast %cst_44 : f32 to vector<48x1xf32>
    %99 = arith.divf %97, %98 : vector<48x1xf32>
    %100 = vector.broadcast %92 : vector<48x1xf32> to vector<48x32xf32>
    %101 = arith.subf %84, %100 : vector<48x32xf32>
    %cst_45 = arith.constant 9.99999974E-6 : f32
    %102 = vector.broadcast %cst_45 : f32 to vector<48x1xf32>
    %103 = arith.addf %99, %102 : vector<48x1xf32>
    %104 = math.rsqrt %103 : vector<48x1xf32>
    %105 = vector.broadcast %104 : vector<48x1xf32> to vector<48x32xf32>
    %106 = arith.mulf %101, %105 : vector<48x32xf32>
    %107 = vector.broadcast %86 : vector<1x32xf32> to vector<48x32xf32>
    %108 = arith.mulf %106, %107 : vector<48x32xf32>
    %109 = vector.broadcast %88 : vector<1x32xf32> to vector<48x32xf32>
    %110 = arith.addf %108, %109 : vector<48x32xf32>
    %c0_46 = arith.constant 0 : index
    %c0_47 = arith.constant 0 : index
    %c288_48 = arith.constant 288 : index
    %111 = vector.load %arg4[%c0_46, %c0_47, %c288_48] : memref<2x32x384xf32, #tpu.memory_space<vmem>>, vector<1x32x64xf32>
    %112 = vector.shape_cast %111 : vector<1x32x64xf32> to vector<32x64xf32>
    %113 = arith.truncf %110 : vector<48x32xf32> to vector<48x32xbf16>
    %114 = arith.truncf %112 : vector<32x64xf32> to vector<32x64xbf16>
    %cst_49 = arith.constant dense<0.000000e+00> : vector<48x64xf32>
    %115 = tpu.matmul %113, %114, %cst_49 {dimension_numbers = #tpu.dot_dimension_numbers<[1], [0], [0], [1], [0, 0, 1, 1], [], []>} : vector<48x32xbf16>, vector<32x64xbf16>, vector<48x64xf32> -> vector<48x64xf32>
    %c0_50 = arith.constant 0 : index
    %c0_51 = arith.constant 0 : index
    %c512 = arith.constant 512 : index
    %116 = vector.load %arg6[%c0_50, %c0_51, %c512] : memref<2x1x672xf32, #tpu.memory_space<vmem>>, vector<1x1x64xf32>
    %117 = vector.shape_cast %116 : vector<1x1x64xf32> to vector<1x64xf32>
    %118 = vector.broadcast %117 : vector<1x64xf32> to vector<48x64xf32>
    %119 = arith.addf %115, %118 : vector<48x64xf32>
    %cst_52 = arith.constant 5.000000e-01 : f32
    %120 = vector.broadcast %cst_52 : f32 to vector<48x64xf32>
    %121 = arith.mulf %120, %119 : vector<48x64xf32>
    %cst_53 = arith.constant 0.707106769 : f32
    %122 = vector.broadcast %cst_53 : f32 to vector<48x64xf32>
    %123 = arith.mulf %119, %122 : vector<48x64xf32>
    %124 = math.erf %123 : vector<48x64xf32>
    %cst_54 = arith.constant 1.000000e+00 : f32
    %125 = vector.broadcast %cst_54 : f32 to vector<48x64xf32>
    %126 = arith.addf %125, %124 : vector<48x64xf32>
    %127 = arith.mulf %121, %126 : vector<48x64xf32>
    %c0_55 = arith.constant 0 : index
    %c0_56 = arith.constant 0 : index
    %c128 = arith.constant 128 : index
    %128 = vector.load %arg5[%c0_55, %c0_56, %c128] : memref<2x128x192xf32, #tpu.memory_space<vmem>>, vector<1x64x32xf32>
    %129 = vector.shape_cast %128 : vector<1x64x32xf32> to vector<64x32xf32>
    %130 = arith.truncf %127 : vector<48x64xf32> to vector<48x64xbf16>
    %131 = arith.truncf %129 : vector<64x32xf32> to vector<64x32xbf16>
    %cst_57 = arith.constant dense<0.000000e+00> : vector<48x32xf32>
    %132 = tpu.matmul %130, %131, %cst_57 {dimension_numbers = #tpu.dot_dimension_numbers<[1], [0], [0], [1], [0, 0, 1, 1], [], []>} : vector<48x64xbf16>, vector<64x32xbf16>, vector<48x32xf32> -> vector<48x32xf32>
    %c0_58 = arith.constant 0 : index
    %c0_59 = arith.constant 0 : index
    %c576 = arith.constant 576 : index
    %133 = vector.load %arg6[%c0_58, %c0_59, %c576] : memref<2x1x672xf32, #tpu.memory_space<vmem>>, vector<1x1x32xf32>
    %134 = vector.shape_cast %133 : vector<1x1x32xf32> to vector<1x32xf32>
    %135 = vector.broadcast %134 : vector<1x32xf32> to vector<48x32xf32>
    %136 = arith.addf %132, %135 : vector<48x32xf32>
    %137 = arith.addf %110, %136 : vector<48x32xf32>
    %c0_60 = arith.constant 0 : index
    %c0_61 = arith.constant 0 : index
    %c608 = arith.constant 608 : index
    %138 = vector.load %arg6[%c0_60, %c0_61, %c608] : memref<2x1x672xf32, #tpu.memory_space<vmem>>, vector<1x1x32xf32>
    %139 = vector.shape_cast %138 : vector<1x1x32xf32> to vector<1x32xf32>
    %c0_62 = arith.constant 0 : index
    %c0_63 = arith.constant 0 : index
    %c640 = arith.constant 640 : index
    %140 = vector.load %arg6[%c0_62, %c0_63, %c640] : memref<2x1x672xf32, #tpu.memory_space<vmem>>, vector<1x1x32xf32>
    %141 = vector.shape_cast %140 : vector<1x1x32xf32> to vector<1x32xf32>
    %cst_64 = arith.constant dense<0.000000e+00> : vector<48xf32>
    %142 = vector.multi_reduction <add>, %137, %cst_64 [1] : vector<48x32xf32> to vector<48xf32>
    %143 = vector.shape_cast %142 : vector<48xf32> to vector<48x1xf32>
    %cst_65 = arith.constant 3.200000e+01 : f32
    %144 = vector.broadcast %cst_65 : f32 to vector<48x1xf32>
    %145 = arith.divf %143, %144 : vector<48x1xf32>
    %146 = vector.broadcast %145 : vector<48x1xf32> to vector<48x32xf32>
    %147 = arith.subf %137, %146 : vector<48x32xf32>
    %148 = arith.mulf %147, %147 : vector<48x32xf32>
    %cst_66 = arith.constant dense<0.000000e+00> : vector<48xf32>
    %149 = vector.multi_reduction <add>, %148, %cst_66 [1] : vector<48x32xf32> to vector<48xf32>
    %150 = vector.shape_cast %149 : vector<48xf32> to vector<48x1xf32>
    %cst_67 = arith.constant 3.200000e+01 : f32
    %151 = vector.broadcast %cst_67 : f32 to vector<48x1xf32>
    %152 = arith.divf %150, %151 : vector<48x1xf32>
    %153 = vector.broadcast %145 : vector<48x1xf32> to vector<48x32xf32>
    %154 = arith.subf %137, %153 : vector<48x32xf32>
    %cst_68 = arith.constant 9.99999974E-6 : f32
    %155 = vector.broadcast %cst_68 : f32 to vector<48x1xf32>
    %156 = arith.addf %152, %155 : vector<48x1xf32>
    %157 = math.rsqrt %156 : vector<48x1xf32>
    %158 = vector.broadcast %157 : vector<48x1xf32> to vector<48x32xf32>
    %159 = arith.mulf %154, %158 : vector<48x32xf32>
    %160 = vector.broadcast %139 : vector<1x32xf32> to vector<48x32xf32>
    %161 = arith.mulf %159, %160 : vector<48x32xf32>
    %162 = vector.broadcast %141 : vector<1x32xf32> to vector<48x32xf32>
    %163 = arith.addf %161, %162 : vector<48x32xf32>
    %c1 = arith.constant 1 : index
    %c0_69 = arith.constant 0 : index
    %c0_70 = arith.constant 0 : index
    %164 = vector.load %arg4[%c1, %c0_69, %c0_70] : memref<2x32x384xf32, #tpu.memory_space<vmem>>, vector<1x32x288xf32>
    %165 = vector.shape_cast %164 : vector<1x32x288xf32> to vector<32x288xf32>
    %166 = arith.truncf %163 : vector<48x32xf32> to vector<48x32xbf16>
    %167 = arith.truncf %165 : vector<32x288xf32> to vector<32x288xbf16>
    %cst_71 = arith.constant dense<0.000000e+00> : vector<48x288xf32>
    %168 = tpu.matmul %166, %167, %cst_71 {dimension_numbers = #tpu.dot_dimension_numbers<[1], [0], [0], [1], [0, 0, 1, 1], [], []>} : vector<48x32xbf16>, vector<32x288xbf16>, vector<48x288xf32> -> vector<48x288xf32>
    %c1_72 = arith.constant 1 : index
    %c0_73 = arith.constant 0 : index
    %c0_74 = arith.constant 0 : index
    %169 = vector.load %arg6[%c1_72, %c0_73, %c0_74] : memref<2x1x672xf32, #tpu.memory_space<vmem>>, vector<1x1x288xf32>
    %170 = vector.shape_cast %169 : vector<1x1x288xf32> to vector<1x288xf32>
    %171 = vector.broadcast %170 : vector<1x288xf32> to vector<48x288xf32>
    %172 = arith.addf %168, %171 : vector<48x288xf32>
    %173 = vector.extract_strided_slice %172 {offsets = [0, 0], sizes = [48, 256], strides = [1, 1]} : vector<48x288xf32> to vector<48x256xf32>
    %cst_75 = arith.constant 0.000000e+00 : f32
    %174 = vector.broadcast %cst_75 : f32 to vector<48x256xf32>
    %175 = arith.maximumf %173, %174 : vector<48x256xf32>
    %176 = vector.extract_strided_slice %172 {offsets = [0, 256], sizes = [48, 32], strides = [1, 1]} : vector<48x288xf32> to vector<48x32xf32>
    %c1_76 = arith.constant 1 : index
    %c0_77 = arith.constant 0 : index
    %c0_78 = arith.constant 0 : index
    %177 = vector.load %arg5[%c1_76, %c0_77, %c0_78] : memref<2x128x192xf32, #tpu.memory_space<vmem>>, vector<1x128x128xf32>
    %178 = vector.shape_cast %177 : vector<1x128x128xf32> to vector<128x128xf32>
    %c1_79 = arith.constant 1 : index
    %c0_80 = arith.constant 0 : index
    %c288_81 = arith.constant 288 : index
    %179 = vector.load %arg6[%c1_79, %c0_80, %c288_81] : memref<2x1x672xf32, #tpu.memory_space<vmem>>, vector<1x1x128xf32>
    %180 = vector.shape_cast %179 : vector<1x1x128xf32> to vector<1x128xf32>
    %181 = vector.extract_strided_slice %175 {offsets = [0, 0], sizes = [48, 128], strides = [1, 1]} : vector<48x256xf32> to vector<48x128xf32>
    %182 = arith.truncf %181 : vector<48x128xf32> to vector<48x128xbf16>
    %183 = arith.truncf %178 : vector<128x128xf32> to vector<128x128xbf16>
    %cst_82 = arith.constant dense<0.000000e+00> : vector<48x128xf32>
    %184 = tpu.matmul %182, %183, %cst_82 {dimension_numbers = #tpu.dot_dimension_numbers<[1], [0], [0], [1], [0, 0, 1, 1], [], []>} : vector<48x128xbf16>, vector<128x128xbf16>, vector<48x128xf32> -> vector<48x128xf32>
    %185 = vector.broadcast %180 : vector<1x128xf32> to vector<48x128xf32>
    %186 = arith.addf %184, %185 : vector<48x128xf32>
    %cst_83 = arith.constant 0.000000e+00 : f32
    %187 = vector.broadcast %cst_83 : f32 to vector<48x128xf32>
    %188 = arith.maximumf %186, %187 : vector<48x128xf32>
    %189 = math.absf %186 : vector<48x128xf32>
    %cst_84 = arith.constant 0.000000e+00 : f32
    %190 = vector.broadcast %cst_84 : f32 to vector<48x128xf32>
    %191 = arith.subf %190, %189 : vector<48x128xf32>
    %192 = math.exp %191 : vector<48x128xf32>
    %cst_85 = arith.constant 1.000000e+00 : f32
    %193 = vector.broadcast %cst_85 : f32 to vector<48x128xf32>
    %194 = arith.addf %193, %192 : vector<48x128xf32>
    %195 = math.log %194 : vector<48x128xf32>
    %196 = arith.addf %188, %195 : vector<48x128xf32>
    %197 = vector.extract_strided_slice %175 {offsets = [0, 128], sizes = [48, 128], strides = [1, 1]} : vector<48x256xf32> to vector<48x128xf32>
    %198 = arith.truncf %197 : vector<48x128xf32> to vector<48x128xbf16>
    %199 = arith.truncf %178 : vector<128x128xf32> to vector<128x128xbf16>
    %cst_86 = arith.constant dense<0.000000e+00> : vector<48x128xf32>
    %200 = tpu.matmul %198, %199, %cst_86 {dimension_numbers = #tpu.dot_dimension_numbers<[1], [0], [0], [1], [0, 0, 1, 1], [], []>} : vector<48x128xbf16>, vector<128x128xbf16>, vector<48x128xf32> -> vector<48x128xf32>
    %201 = vector.broadcast %180 : vector<1x128xf32> to vector<48x128xf32>
    %202 = arith.addf %200, %201 : vector<48x128xf32>
    %cst_87 = arith.constant 0.000000e+00 : f32
    %203 = vector.broadcast %cst_87 : f32 to vector<48x128xf32>
    %204 = arith.maximumf %202, %203 : vector<48x128xf32>
    %205 = math.absf %202 : vector<48x128xf32>
    %cst_88 = arith.constant 0.000000e+00 : f32
    %206 = vector.broadcast %cst_88 : f32 to vector<48x128xf32>
    %207 = arith.subf %206, %205 : vector<48x128xf32>
    %208 = math.exp %207 : vector<48x128xf32>
    %cst_89 = arith.constant 1.000000e+00 : f32
    %209 = vector.broadcast %cst_89 : f32 to vector<48x128xf32>
    %210 = arith.addf %209, %208 : vector<48x128xf32>
    %211 = math.log %210 : vector<48x128xf32>
    %212 = arith.addf %204, %211 : vector<48x128xf32>
    %213 = vector.extract_strided_slice %212 {offsets = [0, 0], sizes = [17, 128], strides = [1, 1]} : vector<48x128xf32> to vector<17x128xf32>
    %214 = vector.extract_strided_slice %176 {offsets = [0, 0], sizes = [17, 32], strides = [1, 1]} : vector<48x32xf32> to vector<17x32xf32>
    %cst_90 = arith.constant dense<0.000000e+00> : vector<128x32xf32>
    %215 = tpu.matmul %213, %214, %cst_90 {dimension_numbers = #tpu.dot_dimension_numbers<[0], [0], [1], [1], [0, 1, 1, 1], [], []>} : vector<17x128xf32>, vector<17x32xf32>, vector<128x32xf32> -> vector<128x32xf32>
    %216 = arith.mulf %215, %8 : vector<128x32xf32>
    %217 = vector.extract_strided_slice %196 {offsets = [0, 0], sizes = [24, 128], strides = [1, 1]} : vector<48x128xf32> to vector<24x128xf32>
    %218 = arith.truncf %217 : vector<24x128xf32> to vector<24x128xbf16>
    %219 = arith.truncf %216 : vector<128x32xf32> to vector<128x32xbf16>
    %cst_91 = arith.constant dense<0.000000e+00> : vector<24x32xf32>
    %220 = tpu.matmul %218, %219, %cst_91 {dimension_numbers = #tpu.dot_dimension_numbers<[1], [0], [0], [1], [0, 0, 1, 1], [], []>} : vector<24x128xbf16>, vector<128x32xbf16>, vector<24x32xf32> -> vector<24x32xf32>
    %221 = vector.extract_strided_slice %212 {offsets = [24, 0], sizes = [17, 128], strides = [1, 1]} : vector<48x128xf32> to vector<17x128xf32>
    %222 = vector.extract_strided_slice %176 {offsets = [24, 0], sizes = [17, 32], strides = [1, 1]} : vector<48x32xf32> to vector<17x32xf32>
    %cst_92 = arith.constant dense<0.000000e+00> : vector<128x32xf32>
    %223 = tpu.matmul %221, %222, %cst_92 {dimension_numbers = #tpu.dot_dimension_numbers<[0], [0], [1], [1], [0, 1, 1, 1], [], []>} : vector<17x128xf32>, vector<17x32xf32>, vector<128x32xf32> -> vector<128x32xf32>
    %224 = arith.mulf %223, %8 : vector<128x32xf32>
    %225 = vector.extract_strided_slice %196 {offsets = [24, 0], sizes = [24, 128], strides = [1, 1]} : vector<48x128xf32> to vector<24x128xf32>
    %226 = arith.truncf %225 : vector<24x128xf32> to vector<24x128xbf16>
    %227 = arith.truncf %224 : vector<128x32xf32> to vector<128x32xbf16>
    %cst_93 = arith.constant dense<0.000000e+00> : vector<24x32xf32>
    %228 = tpu.matmul %226, %227, %cst_93 {dimension_numbers = #tpu.dot_dimension_numbers<[1], [0], [0], [1], [0, 0, 1, 1], [], []>} : vector<24x128xbf16>, vector<128x32xbf16>, vector<24x32xf32> -> vector<24x32xf32>
    %229 = tpu.concatenate %220, %228 in 0 : vector<24x32xf32>, vector<24x32xf32> -> vector<48x32xf32>
    %c1_94 = arith.constant 1 : index
    %c0_95 = arith.constant 0 : index
    %c352_96 = arith.constant 352 : index
    %230 = vector.load %arg4[%c1_94, %c0_95, %c352_96] : memref<2x32x384xf32, #tpu.memory_space<vmem>>, vector<1x32x32xf32>
    %231 = vector.shape_cast %230 : vector<1x32x32xf32> to vector<32x32xf32>
    %232 = arith.truncf %229 : vector<48x32xf32> to vector<48x32xbf16>
    %233 = arith.truncf %231 : vector<32x32xf32> to vector<32x32xbf16>
    %cst_97 = arith.constant dense<0.000000e+00> : vector<48x32xf32>
    %234 = tpu.matmul %232, %233, %cst_97 {dimension_numbers = #tpu.dot_dimension_numbers<[1], [0], [0], [1], [0, 0, 1, 1], [], []>} : vector<48x32xbf16>, vector<32x32xbf16>, vector<48x32xf32> -> vector<48x32xf32>
    %c1_98 = arith.constant 1 : index
    %c0_99 = arith.constant 0 : index
    %c416_100 = arith.constant 416 : index
    %235 = vector.load %arg6[%c1_98, %c0_99, %c416_100] : memref<2x1x672xf32, #tpu.memory_space<vmem>>, vector<1x1x32xf32>
    %236 = vector.shape_cast %235 : vector<1x1x32xf32> to vector<1x32xf32>
    %237 = vector.broadcast %236 : vector<1x32xf32> to vector<48x32xf32>
    %238 = arith.addf %234, %237 : vector<48x32xf32>
    %239 = arith.addf %163, %238 : vector<48x32xf32>
    %c1_101 = arith.constant 1 : index
    %c0_102 = arith.constant 0 : index
    %c448_103 = arith.constant 448 : index
    %240 = vector.load %arg6[%c1_101, %c0_102, %c448_103] : memref<2x1x672xf32, #tpu.memory_space<vmem>>, vector<1x1x32xf32>
    %241 = vector.shape_cast %240 : vector<1x1x32xf32> to vector<1x32xf32>
    %c1_104 = arith.constant 1 : index
    %c0_105 = arith.constant 0 : index
    %c480_106 = arith.constant 480 : index
    %242 = vector.load %arg6[%c1_104, %c0_105, %c480_106] : memref<2x1x672xf32, #tpu.memory_space<vmem>>, vector<1x1x32xf32>
    %243 = vector.shape_cast %242 : vector<1x1x32xf32> to vector<1x32xf32>
    %cst_107 = arith.constant dense<0.000000e+00> : vector<48xf32>
    %244 = vector.multi_reduction <add>, %239, %cst_107 [1] : vector<48x32xf32> to vector<48xf32>
    %245 = vector.shape_cast %244 : vector<48xf32> to vector<48x1xf32>
    %cst_108 = arith.constant 3.200000e+01 : f32
    %246 = vector.broadcast %cst_108 : f32 to vector<48x1xf32>
    %247 = arith.divf %245, %246 : vector<48x1xf32>
    %248 = vector.broadcast %247 : vector<48x1xf32> to vector<48x32xf32>
    %249 = arith.subf %239, %248 : vector<48x32xf32>
    %250 = arith.mulf %249, %249 : vector<48x32xf32>
    %cst_109 = arith.constant dense<0.000000e+00> : vector<48xf32>
    %251 = vector.multi_reduction <add>, %250, %cst_109 [1] : vector<48x32xf32> to vector<48xf32>
    %252 = vector.shape_cast %251 : vector<48xf32> to vector<48x1xf32>
    %cst_110 = arith.constant 3.200000e+01 : f32
    %253 = vector.broadcast %cst_110 : f32 to vector<48x1xf32>
    %254 = arith.divf %252, %253 : vector<48x1xf32>
    %255 = vector.broadcast %247 : vector<48x1xf32> to vector<48x32xf32>
    %256 = arith.subf %239, %255 : vector<48x32xf32>
    %cst_111 = arith.constant 9.99999974E-6 : f32
    %257 = vector.broadcast %cst_111 : f32 to vector<48x1xf32>
    %258 = arith.addf %254, %257 : vector<48x1xf32>
    %259 = math.rsqrt %258 : vector<48x1xf32>
    %260 = vector.broadcast %259 : vector<48x1xf32> to vector<48x32xf32>
    %261 = arith.mulf %256, %260 : vector<48x32xf32>
    %262 = vector.broadcast %241 : vector<1x32xf32> to vector<48x32xf32>
    %263 = arith.mulf %261, %262 : vector<48x32xf32>
    %264 = vector.broadcast %243 : vector<1x32xf32> to vector<48x32xf32>
    %265 = arith.addf %263, %264 : vector<48x32xf32>
    %c1_112 = arith.constant 1 : index
    %c0_113 = arith.constant 0 : index
    %c288_114 = arith.constant 288 : index
    %266 = vector.load %arg4[%c1_112, %c0_113, %c288_114] : memref<2x32x384xf32, #tpu.memory_space<vmem>>, vector<1x32x64xf32>
    %267 = vector.shape_cast %266 : vector<1x32x64xf32> to vector<32x64xf32>
    %268 = arith.truncf %265 : vector<48x32xf32> to vector<48x32xbf16>
    %269 = arith.truncf %267 : vector<32x64xf32> to vector<32x64xbf16>
    %cst_115 = arith.constant dense<0.000000e+00> : vector<48x64xf32>
    %270 = tpu.matmul %268, %269, %cst_115 {dimension_numbers = #tpu.dot_dimension_numbers<[1], [0], [0], [1], [0, 0, 1, 1], [], []>} : vector<48x32xbf16>, vector<32x64xbf16>, vector<48x64xf32> -> vector<48x64xf32>
    %c1_116 = arith.constant 1 : index
    %c0_117 = arith.constant 0 : index
    %c512_118 = arith.constant 512 : index
    %271 = vector.load %arg6[%c1_116, %c0_117, %c512_118] : memref<2x1x672xf32, #tpu.memory_space<vmem>>, vector<1x1x64xf32>
    %272 = vector.shape_cast %271 : vector<1x1x64xf32> to vector<1x64xf32>
    %273 = vector.broadcast %272 : vector<1x64xf32> to vector<48x64xf32>
    %274 = arith.addf %270, %273 : vector<48x64xf32>
    %cst_119 = arith.constant 5.000000e-01 : f32
    %275 = vector.broadcast %cst_119 : f32 to vector<48x64xf32>
    %276 = arith.mulf %275, %274 : vector<48x64xf32>
    %cst_120 = arith.constant 0.707106769 : f32
    %277 = vector.broadcast %cst_120 : f32 to vector<48x64xf32>
    %278 = arith.mulf %274, %277 : vector<48x64xf32>
    %279 = math.erf %278 : vector<48x64xf32>
    %cst_121 = arith.constant 1.000000e+00 : f32
    %280 = vector.broadcast %cst_121 : f32 to vector<48x64xf32>
    %281 = arith.addf %280, %279 : vector<48x64xf32>
    %282 = arith.mulf %276, %281 : vector<48x64xf32>
    %c1_122 = arith.constant 1 : index
    %c0_123 = arith.constant 0 : index
    %c128_124 = arith.constant 128 : index
    %283 = vector.load %arg5[%c1_122, %c0_123, %c128_124] : memref<2x128x192xf32, #tpu.memory_space<vmem>>, vector<1x64x32xf32>
    %284 = vector.shape_cast %283 : vector<1x64x32xf32> to vector<64x32xf32>
    %285 = arith.truncf %282 : vector<48x64xf32> to vector<48x64xbf16>
    %286 = arith.truncf %284 : vector<64x32xf32> to vector<64x32xbf16>
    %cst_125 = arith.constant dense<0.000000e+00> : vector<48x32xf32>
    %287 = tpu.matmul %285, %286, %cst_125 {dimension_numbers = #tpu.dot_dimension_numbers<[1], [0], [0], [1], [0, 0, 1, 1], [], []>} : vector<48x64xbf16>, vector<64x32xbf16>, vector<48x32xf32> -> vector<48x32xf32>
    %c1_126 = arith.constant 1 : index
    %c0_127 = arith.constant 0 : index
    %c576_128 = arith.constant 576 : index
    %288 = vector.load %arg6[%c1_126, %c0_127, %c576_128] : memref<2x1x672xf32, #tpu.memory_space<vmem>>, vector<1x1x32xf32>
    %289 = vector.shape_cast %288 : vector<1x1x32xf32> to vector<1x32xf32>
    %290 = vector.broadcast %289 : vector<1x32xf32> to vector<48x32xf32>
    %291 = arith.addf %287, %290 : vector<48x32xf32>
    %292 = arith.addf %265, %291 : vector<48x32xf32>
    %c1_129 = arith.constant 1 : index
    %c0_130 = arith.constant 0 : index
    %c608_131 = arith.constant 608 : index
    %293 = vector.load %arg6[%c1_129, %c0_130, %c608_131] : memref<2x1x672xf32, #tpu.memory_space<vmem>>, vector<1x1x32xf32>
    %294 = vector.shape_cast %293 : vector<1x1x32xf32> to vector<1x32xf32>
    %c1_132 = arith.constant 1 : index
    %c0_133 = arith.constant 0 : index
    %c640_134 = arith.constant 640 : index
    %295 = vector.load %arg6[%c1_132, %c0_133, %c640_134] : memref<2x1x672xf32, #tpu.memory_space<vmem>>, vector<1x1x32xf32>
    %296 = vector.shape_cast %295 : vector<1x1x32xf32> to vector<1x32xf32>
    %cst_135 = arith.constant dense<0.000000e+00> : vector<48xf32>
    %297 = vector.multi_reduction <add>, %292, %cst_135 [1] : vector<48x32xf32> to vector<48xf32>
    %298 = vector.shape_cast %297 : vector<48xf32> to vector<48x1xf32>
    %cst_136 = arith.constant 3.200000e+01 : f32
    %299 = vector.broadcast %cst_136 : f32 to vector<48x1xf32>
    %300 = arith.divf %298, %299 : vector<48x1xf32>
    %301 = vector.broadcast %300 : vector<48x1xf32> to vector<48x32xf32>
    %302 = arith.subf %292, %301 : vector<48x32xf32>
    %303 = arith.mulf %302, %302 : vector<48x32xf32>
    %cst_137 = arith.constant dense<0.000000e+00> : vector<48xf32>
    %304 = vector.multi_reduction <add>, %303, %cst_137 [1] : vector<48x32xf32> to vector<48xf32>
    %305 = vector.shape_cast %304 : vector<48xf32> to vector<48x1xf32>
    %cst_138 = arith.constant 3.200000e+01 : f32
    %306 = vector.broadcast %cst_138 : f32 to vector<48x1xf32>
    %307 = arith.divf %305, %306 : vector<48x1xf32>
    %308 = vector.broadcast %300 : vector<48x1xf32> to vector<48x32xf32>
    %309 = arith.subf %292, %308 : vector<48x32xf32>
    %cst_139 = arith.constant 9.99999974E-6 : f32
    %310 = vector.broadcast %cst_139 : f32 to vector<48x1xf32>
    %311 = arith.addf %307, %310 : vector<48x1xf32>
    %312 = math.rsqrt %311 : vector<48x1xf32>
    %313 = vector.broadcast %312 : vector<48x1xf32> to vector<48x32xf32>
    %314 = arith.mulf %309, %313 : vector<48x32xf32>
    %315 = vector.broadcast %294 : vector<1x32xf32> to vector<48x32xf32>
    %316 = arith.mulf %314, %315 : vector<48x32xf32>
    %317 = vector.broadcast %296 : vector<1x32xf32> to vector<48x32xf32>
    %318 = arith.addf %316, %317 : vector<48x32xf32>
    %c81 = arith.constant 81 : index
    %c0_140 = arith.constant 0 : index
    %319 = vector.load %arg3[%c81, %c0_140] : memref<88x128xf32, #tpu.memory_space<vmem>>, vector<1x32xf32>
    %c82 = arith.constant 82 : index
    %c0_141 = arith.constant 0 : index
    %320 = vector.load %arg3[%c82, %c0_141] : memref<88x128xf32, #tpu.memory_space<vmem>>, vector<1x32xf32>
    %c48 = arith.constant 48 : index
    %c0_142 = arith.constant 0 : index
    %321 = vector.load %arg3[%c48, %c0_142] : memref<88x128xf32, #tpu.memory_space<vmem>>, vector<32x128xf32>
    %c80 = arith.constant 80 : index
    %c0_143 = arith.constant 0 : index
    %322 = vector.load %arg3[%c80, %c0_143] : memref<88x128xf32, #tpu.memory_space<vmem>>, vector<1x128xf32>
    %323 = vector.extract_strided_slice %318 {offsets = [0, 0], sizes = [1, 32], strides = [1, 1]} : vector<48x32xf32> to vector<1x32xf32>
    %cst_144 = arith.constant dense<0.000000e+00> : vector<1xf32>
    %324 = vector.multi_reduction <add>, %323, %cst_144 [1] : vector<1x32xf32> to vector<1xf32>
    %325 = vector.shape_cast %324 : vector<1xf32> to vector<1x1xf32>
    %cst_145 = arith.constant 3.200000e+01 : f32
    %326 = vector.broadcast %cst_145 : f32 to vector<1x1xf32>
    %327 = arith.divf %325, %326 : vector<1x1xf32>
    %328 = vector.broadcast %327 : vector<1x1xf32> to vector<1x32xf32>
    %329 = arith.subf %323, %328 : vector<1x32xf32>
    %330 = arith.mulf %329, %329 : vector<1x32xf32>
    %cst_146 = arith.constant dense<0.000000e+00> : vector<1xf32>
    %331 = vector.multi_reduction <add>, %330, %cst_146 [1] : vector<1x32xf32> to vector<1xf32>
    %332 = vector.shape_cast %331 : vector<1xf32> to vector<1x1xf32>
    %cst_147 = arith.constant 3.200000e+01 : f32
    %333 = vector.broadcast %cst_147 : f32 to vector<1x1xf32>
    %334 = arith.divf %332, %333 : vector<1x1xf32>
    %335 = vector.broadcast %327 : vector<1x1xf32> to vector<1x32xf32>
    %336 = arith.subf %323, %335 : vector<1x32xf32>
    %cst_148 = arith.constant 9.99999974E-6 : f32
    %337 = vector.broadcast %cst_148 : f32 to vector<1x1xf32>
    %338 = arith.addf %334, %337 : vector<1x1xf32>
    %339 = math.rsqrt %338 : vector<1x1xf32>
    %340 = vector.broadcast %339 : vector<1x1xf32> to vector<1x32xf32>
    %341 = arith.mulf %336, %340 : vector<1x32xf32>
    %342 = arith.mulf %341, %319 : vector<1x32xf32>
    %343 = arith.addf %342, %320 : vector<1x32xf32>
    %344 = arith.truncf %343 : vector<1x32xf32> to vector<1x32xbf16>
    %345 = arith.truncf %321 : vector<32x128xf32> to vector<32x128xbf16>
    %cst_149 = arith.constant dense<0.000000e+00> : vector<1x128xf32>
    %346 = tpu.matmul %344, %345, %cst_149 {dimension_numbers = #tpu.dot_dimension_numbers<[1], [0], [0], [1], [0, 0, 1, 1], [], []>} : vector<1x32xbf16>, vector<32x128xbf16>, vector<1x128xf32> -> vector<1x128xf32>
    %347 = arith.addf %346, %322 : vector<1x128xf32>
    %c0_150 = arith.constant 0 : index
    %c0_151 = arith.constant 0 : index
    %c0_152 = arith.constant 0 : index
    %348 = vector.load %arg7[%c0_150, %c0_151, %c0_152] : memref<1x2x128xf32, #tpu.memory_space<vmem>>, vector<1x1x128xf32>
    %349 = vector.shape_cast %348 : vector<1x1x128xf32> to vector<1x128xf32>
    %350 = vector.shape_cast %347 : vector<1x128xf32> to vector<1x1x128xf32>
    tpu.vector_store %arg7[%c0_150, %c0_151, %c0_152], %350 {strides = array<i32>} : memref<1x2x128xf32, #tpu.memory_space<vmem>>, vector<1x1x128xf32>,
    %351 = vector.extract_strided_slice %318 {offsets = [24, 0], sizes = [1, 32], strides = [1, 1]} : vector<48x32xf32> to vector<1x32xf32>
    %cst_153 = arith.constant dense<0.000000e+00> : vector<1xf32>
    %352 = vector.multi_reduction <add>, %351, %cst_153 [1] : vector<1x32xf32> to vector<1xf32>
    %353 = vector.shape_cast %352 : vector<1xf32> to vector<1x1xf32>
    %cst_154 = arith.constant 3.200000e+01 : f32
    %354 = vector.broadcast %cst_154 : f32 to vector<1x1xf32>
    %355 = arith.divf %353, %354 : vector<1x1xf32>
    %356 = vector.broadcast %355 : vector<1x1xf32> to vector<1x32xf32>
    %357 = arith.subf %351, %356 : vector<1x32xf32>
    %358 = arith.mulf %357, %357 : vector<1x32xf32>
    %cst_155 = arith.constant dense<0.000000e+00> : vector<1xf32>
    %359 = vector.multi_reduction <add>, %358, %cst_155 [1] : vector<1x32xf32> to vector<1xf32>
    %360 = vector.shape_cast %359 : vector<1xf32> to vector<1x1xf32>
    %cst_156 = arith.constant 3.200000e+01 : f32
    %361 = vector.broadcast %cst_156 : f32 to vector<1x1xf32>
    %362 = arith.divf %360, %361 : vector<1x1xf32>
    %363 = vector.broadcast %355 : vector<1x1xf32> to vector<1x32xf32>
    %364 = arith.subf %351, %363 : vector<1x32xf32>
    %cst_157 = arith.constant 9.99999974E-6 : f32
    %365 = vector.broadcast %cst_157 : f32 to vector<1x1xf32>
    %366 = arith.addf %362, %365 : vector<1x1xf32>
    %367 = math.rsqrt %366 : vector<1x1xf32>
    %368 = vector.broadcast %367 : vector<1x1xf32> to vector<1x32xf32>
    %369 = arith.mulf %364, %368 : vector<1x32xf32>
    %370 = arith.mulf %369, %319 : vector<1x32xf32>
    %371 = arith.addf %370, %320 : vector<1x32xf32>
    %372 = arith.truncf %371 : vector<1x32xf32> to vector<1x32xbf16>
    %373 = arith.truncf %321 : vector<32x128xf32> to vector<32x128xbf16>
    %cst_158 = arith.constant dense<0.000000e+00> : vector<1x128xf32>
    %374 = tpu.matmul %372, %373, %cst_158 {dimension_numbers = #tpu.dot_dimension_numbers<[1], [0], [0], [1], [0, 0, 1, 1], [], []>} : vector<1x32xbf16>, vector<32x128xbf16>, vector<1x128xf32> -> vector<1x128xf32>
    %375 = arith.addf %374, %322 : vector<1x128xf32>
    %c0_159 = arith.constant 0 : index
    %c1_160 = arith.constant 1 : index
    %c0_161 = arith.constant 0 : index
    %376 = vector.load %arg7[%c0_159, %c1_160, %c0_161] : memref<1x2x128xf32, #tpu.memory_space<vmem>>, vector<1x1x128xf32>
    %377 = vector.shape_cast %376 : vector<1x1x128xf32> to vector<1x128xf32>
    %378 = vector.shape_cast %375 : vector<1x128xf32> to vector<1x1x128xf32>
    tpu.vector_store %arg7[%c0_159, %c1_160, %c0_161], %378 {strides = array<i32>} : memref<1x2x128xf32, #tpu.memory_space<vmem>>, vector<1x1x128xf32>,
    return
  }
  func.func @transform_0(%arg0: i32) -> (i32, i32) {
    %c0_i32 = arith.constant 0 : i32
    %c0_i32_0 = arith.constant 0 : i32
    return %arg0, %c0_i32 : i32, i32
  }
  func.func @transform_1(%arg0: i32) -> (i32, i32) {
    %c0_i32 = arith.constant 0 : i32
    %c0_i32_0 = arith.constant 0 : i32
    %c0_i32_1 = arith.constant 0 : i32
    return %c0_i32, %c0_i32_0 : i32, i32
  }
  func.func @transform_2(%arg0: i32) -> (i32, i32) {
    %c0_i32 = arith.constant 0 : i32
    %c0_i32_0 = arith.constant 0 : i32
    %c0_i32_1 = arith.constant 0 : i32
    return %c0_i32, %c0_i32_0 : i32, i32
  }
  func.func @transform_3(%arg0: i32) -> (i32, i32, i32) {
    %c0_i32 = arith.constant 0 : i32
    %c0_i32_0 = arith.constant 0 : i32
    %c0_i32_1 = arith.constant 0 : i32
    %c0_i32_2 = arith.constant 0 : i32
    return %c0_i32, %c0_i32_0, %c0_i32_1 : i32, i32, i32
  }
  func.func @transform_4(%arg0: i32) -> (i32, i32, i32) {
    %c0_i32 = arith.constant 0 : i32
    %c0_i32_0 = arith.constant 0 : i32
    %c0_i32_1 = arith.constant 0 : i32
    %c0_i32_2 = arith.constant 0 : i32
    return %c0_i32, %c0_i32_0, %c0_i32_1 : i32, i32, i32
  }
  func.func @transform_5(%arg0: i32) -> (i32, i32, i32) {
    %c0_i32 = arith.constant 0 : i32
    %c0_i32_0 = arith.constant 0 : i32
    %c0_i32_1 = arith.constant 0 : i32
    %c0_i32_2 = arith.constant 0 : i32
    return %c0_i32, %c0_i32_0, %c0_i32_1 : i32, i32, i32
  }
  func.func @transform_6(%arg0: i32) -> (i32, i32, i32) {
    %c0_i32 = arith.constant 0 : i32
    %c0_i32_0 = arith.constant 0 : i32
    %c0_i32_1 = arith.constant 0 : i32
    return %arg0, %c0_i32, %c0_i32_0 : i32, i32, i32
  }
}

</mosaic_0001>

<llo_original>
// kernel: model_forward.1
$region0: #{model_forward.1}
  #allocation0 [shape = 'u32[]', space=smem, size = 0x4, offset = 0x4, fixed_abs, tag = 'smem constant byte address 0x4 - core index']
  #allocation1 [shape = 'u32[144,128]{1,0:T(1,128)}', space=vmem, size = 0x12000, scoped, tag = 'internal scratch']
  %s0 = inlined_call_operand.vmem [shape: f32[48,48], index: 0, kind: input, shape index: {}]
  %s1 = inlined_call_operand.vmem [shape: f32[48,32], index: 1, kind: input, shape index: {}]
  %s2 = inlined_call_operand.vmem [shape: f32[88,128], index: 2, kind: input, shape index: {}]
  %s3 = inlined_call_operand.vmem [shape: f32[2,32,384], index: 3, kind: input, shape index: {}]
  %s4 = inlined_call_operand.vmem [shape: f32[2,128,192], index: 4, kind: input, shape index: {}]
  %s5 = inlined_call_operand.vmem [shape: f32[2,1,672], index: 5, kind: input, shape index: {}]
  %s6 = inlined_call_operand.hbm [shape: f32[1,2,128], index: 6, kind: output, shape index: {}]
  %s7 = sld [smem:[#allocation0]]
  $region34: #{model_forward.1} parent=0
    _
  %s9 = ssub.s32 1, %s7
  %s10 = scalar_select 0, %s9, %s7
  $region1: #{model_forward.1} parent=0
    #allocation2 [shape = 'u8[1024]{0}', space=vmem, size = 0x400, scoped, tag = 'output window, operand 0, single buffered']
    #allocation3 [shape = 's32[1]{0}', space=sflag, size = 0x4, scoped, tag = 'scoped memory for model_forward.1']
    %11 = vsyncpa [#allocation3], 0
    // Predicated region
    $region2: #{model_forward.1} parent=1 // pred_check
      _
    $region3: #{model_forward.1} parent=1 // pred_check_branch
      %13 = sbr.rel (0) target = $region5
    $region4: #{model_forward.1} parent=1 // pred_region
      _
    $region5: #{model_forward.1} parent=1 // pred_fallthru
      _
    // Predicated region
    $region6: #{model_forward.1} parent=1 // pred_check
      _
    $region7: #{model_forward.1} parent=1 // pred_check_branch
      %15 = sbr.rel (0) target = $region9
    $region8: #{model_forward.1} parent=1 // pred_region
      _
    $region9: #{model_forward.1} parent=1 // pred_fallthru
      _
    // Predicated region
    $region10: #{model_forward.1} parent=1 // pred_check
      _
    $region11: #{model_forward.1} parent=1 // pred_check_branch
      %17 = sbr.rel (0) target = $region13
    $region12: #{model_forward.1} parent=1 // pred_region
      _
    $region13: #{model_forward.1} parent=1 // pred_fallthru
      _
    // Predicated region
    $region14: #{model_forward.1} parent=1 // pred_check
      _
    $region15: #{model_forward.1} parent=1 // pred_check_branch
      %19 = sbr.rel (0) target = $region17
    $region16: #{model_forward.1} parent=1 // pred_region
      _
    $region17: #{model_forward.1} parent=1 // pred_fallthru
      _
    // Predicated region
    $region18: #{model_forward.1} parent=1 // pred_check
      _
    $region19: #{model_forward.1} parent=1 // pred_check_branch
      %21 = sbr.rel (0) target = $region21
    $region20: #{model_forward.1} parent=1 // pred_region
      _
    $region21: #{model_forward.1} parent=1 // pred_fallthru
      _
    // Predicated region
    $region22: #{model_forward.1} parent=1 // pred_check
      _
    $region23: #{model_forward.1} parent=1 // pred_check_branch
      %23 = sbr.rel (0) target = $region25
    $region24: #{model_forward.1} parent=1 // pred_region
      _
    $region25: #{model_forward.1} parent=1 // pred_fallthru
      _
    %v25 = vld [vmem:[%s2] sm:$0xff]
    %v26 = vld [vmem:[%s2 + $0x8] sm:$0xff]
    %v27 = vld [vmem:[%s2 + $0x10] sm:$0xff]
    %v28 = vld [vmem:[%s2 + $0x18] sm:$0xff]
    %v29 = vld [vmem:[%s2 + $0x20] sm:$0xff]
    %v30 = vld [vmem:[%s2 + $0x28] sm:$0xff]
    %v31 = vld [vmem:[%s0] sm:$0xff]
    %v32 = vld [vmem:[%s0 + $0x8] sm:$0xff]
    %v33 = vld [vmem:[%s0 + $0x10] sm:$0xff]
    %v34 = vld [vmem:[%s0 + $0x18] sm:$0xff]
    %v35 = vld [vmem:[%s0 + $0x20] sm:$0xff]
    %v36 = vld [vmem:[%s0 + $0x28] sm:$0xff]
    %v37 = vpack.c.bf16 %v32, %v31
    %v38 = vpack.c.bf16 %v34, %v33
    %v39 = vpack.c.bf16 %v36, %v35
    %v40 = vpack.c.bf16 %v26, %v25
    %v41 = vpack.c.bf16 %v28, %v27
    %v42 = vpack.c.bf16 %v30, %v29
    %v43 = vld [vmem:[%s1] sm:$0xff]
    %v44 = vld [vmem:[%s1 + $0x8] sm:$0xff]
    %v45 = vld [vmem:[%s1 + $0x10] sm:$0xff]
    %v46 = vld [vmem:[%s1 + $0x18] sm:$0xff]
    %v47 = vld [vmem:[%s1 + $0x20] sm:$0xff]
    %v48 = vld [vmem:[%s1 + $0x28] sm:$0xff]
    %vm49 = vcmask 392192
    %v51 = vsel %vm49, %v37, 0
    %v54 = vsel %vm49, %v38, 0
    %v57 = vsel %vm49, %v39, 0
    %59 = vmatprep.subr.bf16.mxu0 0
    %60 = vmatpush1.bf16.msra.mxu0 %v40
    %61 = vmatprep.subr.bf16.mxu0 0
    %62 = vmatpush1.bf16.msra.mxu0 %v41
    %63 = vmatprep.subr.bf16.mxu0 0
    %64 = vmatpush1.bf16.msra.mxu0 %v42
    %65 = vmatprep.subr.bf16.mxu0 0
    %66 = vmatpush1.bf16.msra.mxu0 0
    %67 = vmatprep.subr.bf16.mxu0 0
    %68 = vmatpush1.bf16.msra.mxu0 0
    %69 = vmatprep.subr.bf16.mxu0 0
    %70 = vmatpush1.bf16.msra.mxu0 0
    %71 = vmatprep.subr.bf16.mxu0 0
    %72 = vmatpush1.bf16.msra.mxu0 0
    %73 = vmatprep.subr.bf16.mxu0 0
    %74 = vmatpush1.bf16.msra.mxu0 0
    %75 = vmatprep.subr.bf16.mxu0 0
    %76 = vmatpush1.bf16.msra.mxu0 0
    %77 = vmatprep.subr.bf16.mxu0 0
    %78 = vmatpush1.bf16.msra.mxu0 0
    %79 = vmatprep.subr.bf16.mxu0 0
    %80 = vmatpush1.bf16.msra.mxu0 0
    %81 = vmatprep.subr.bf16.mxu0 0
    %82 = vmatpush1.bf16.msra.mxu0 0
    %83 = vmatprep.subr.bf16.mxu0 0
    %84 = vmatpush1.bf16.msra.mxu0 0
    %85 = vmatprep.subr.bf16.mxu0 0
    %86 = vmatpush1.bf16.msra.mxu0 0
    %87 = vmatprep.subr.bf16.mxu0 0
    %88 = vmatpush1.bf16.msra.mxu0 0
    %89 = vmatprep.subr.bf16.mxu0 0
    %90 = vmatpush1.bf16.msra.mxu0 0
    %91 = vmatprep.mubr.bf16.mxu0 0
    %92 = vmatmul.mubr.bf16.gmra.mrb[0].mxu0 %v51
    %v93 = vpop.f32.mrb[0].mxu0
    %v94 = vadd.f32 %v43, %v93
    %v95 = vpop.f32.mrb[0].mxu0
    %v96 = vpop.f32.mrb[0].mxu0
    %v97 = vadd.f32 %v44, %v96
    %v98 = vpop.f32.mrb[0].mxu0
    %99 = vmatprep.mubr.bf16.mxu0 0
    %100 = vmatmul.mubr.bf16.gmra.mrb[0].mxu0 %v54
    %v101 = vpop.f32.mrb[0].mxu0
    %v102 = vadd.f32 %v45, %v101
    %v103 = vpop.f32.mrb[0].mxu0
    %v104 = vpop.f32.mrb[0].mxu0
    %v105 = vadd.f32 %v46, %v104
    %v106 = vpop.f32.mrb[0].mxu0
    %107 = vmatprep.mubr.bf16.mxu0 0
    %108 = vmatmul.mubr.bf16.gmra.mrb[0].mxu0 %v57
    %v109 = vpop.f32.mrb[0].mxu0
    %v110 = vadd.f32 %v47, %v109
    %v111 = vpop.f32.mrb[0].mxu0
    %v112 = vpop.f32.mrb[0].mxu0
    %v113 = vadd.f32 %v48, %v112
    %v114 = vpop.f32.mrb[0].mxu0
    %115 = vdwg.mxu0
    %v116 = vld [vmem:[%s4 + $0x8] sm:$0xff]
    %v117 = vld [vmem:[%s4 + $0x18] sm:$0xff]
    %v118 = vld [vmem:[%s4 + $0x28] sm:$0xff]
    %v119 = vld [vmem:[%s4 + $0x38] sm:$0xff]
    %v120 = vld [vmem:[%s4 + $0x48] sm:$0xff]
    %v121 = vld [vmem:[%s4 + $0x58] sm:$0xff]
    %v122 = vld [vmem:[%s4 + $0x68] sm:$0xff]
    %v123 = vld [vmem:[%s4 + $0x78] sm:$0xff]
    %v124 = vld [vmem:[%s4 + $0x88] sm:$0xff]
    %v125 = vld [vmem:[%s4 + $0x98] sm:$0xff]
    %v126 = vld [vmem:[%s4 + $0xa8] sm:$0xff]
    %v127 = vld [vmem:[%s4 + $0xb8] sm:$0xff]
    %v128 = vld [vmem:[%s4 + $0xc8] sm:$0xff]
    %v129 = vld [vmem:[%s4 + $0xd8] sm:$0xff]
    %v130 = vld [vmem:[%s4 + $0xe8] sm:$0xff]
    %v131 = vld [vmem:[%s4 + $0xf8] sm:$0xff]
    %v132 = vld [vmem:[%s3] sm:$0xff]
    %v133 = vld [vmem:[%s3 + $0x8] sm:$0xff]
    %v134 = vld [vmem:[%s3 + $0x10] sm:$0xff]
    %v135 = vld [vmem:[%s3 + $0x18] sm:$0xff]
    %v136 = vld [vmem:[%s3 + $0x20] sm:$0xff]
    %v137 = vld [vmem:[%s3 + $0x28] sm:$0xff]
    %v138 = vld [vmem:[%s3 + $0x30] sm:$0xff]
    %v139 = vld [vmem:[%s3 + $0x38] sm:$0xff]
    %v140 = vld [vmem:[%s3 + $0x40] sm:$0xff]
    %v141 = vld [vmem:[%s3 + $0x48] sm:$0xff]
    %v142 = vld [vmem:[%s3 + $0x50] sm:$0xff]
    %v143 = vld [vmem:[%s3 + $0x58] sm:$0xff]
    %v144 = vpack.c.bf16 %v97, %v94
    %v145 = vpack.c.bf16 %v105, %v102
    %v146 = vpack.c.bf16 %v113, %v110
    %v147 = vpack.c.bf16 %v135, %v132
    %v148 = vpack.c.bf16 %v136, %v133
    %v149 = vpack.c.bf16 %v137, %v134
    %v150 = vpack.c.bf16 %v141, %v138
    %v151 = vpack.c.bf16 %v142, %v139
    %v152 = vpack.c.bf16 %v143, %v140
    %v153 = vld [vmem:[%s5] sm:$0x7]
    %v155 = vlaneseq
    %v156 = vshrl.u32 %v155, 7
    %v157 = vsub.s32 0, %v156
    %v158 = vrot.slane %v153, %v157
    %v159 = vlaneseq
    %v160 = vshrl.u32 %v159, 7
    %v161 = vsub.s32 1, %v160
    %v162 = vrot.slane %v153, %v161
    %v163 = vlaneseq
    %v164 = vshrl.u32 %v163, 7
    %v165 = vsub.s32 2, %v164
    %v166 = vrot.slane %v153, %v165
    %vm170 = vcmask 261120
    %v172 = vsel %vm170, %v144, 0
    %v175 = vsel %vm170, %v145, 0
    %v178 = vsel %vm170, %v146, 0
    %180 = vmatprep.subr.bf16.mxu0 %v148
    %181 = vmatpush1.bf16.msra.mxu0 %v147
    %182 = vmatprep.subr.bf16.mxu0 %v151
    %183 = vmatpush1.bf16.msra.mxu0 %v150
    %184 = vmatprep.subr.bf16.mxu0 0
    %185 = vmatpush1.bf16.msra.mxu0 0
    %186 = vmatprep.subr.bf16.mxu0 0
    %187 = vmatpush1.bf16.msra.mxu0 0
    %188 = vmatprep.subr.bf16.mxu0 0
    %189 = vmatpush1.bf16.msra.mxu0 0
    %190 = vmatprep.subr.bf16.mxu0 0
    %191 = vmatpush1.bf16.msra.mxu0 0
    %192 = vmatprep.subr.bf16.mxu0 0
    %193 = vmatpush1.bf16.msra.mxu0 0
    %194 = vmatprep.subr.bf16.mxu0 0
    %195 = vmatpush1.bf16.msra.mxu0 0
    %196 = vmatprep.subr.bf16.mxu0 0
    %197 = vmatpush1.bf16.msra.mxu0 0
    %198 = vmatprep.subr.bf16.mxu0 0
    %199 = vmatpush1.bf16.msra.mxu0 0
    %200 = vmatprep.subr.bf16.mxu0 0
    %201 = vmatpush1.bf16.msra.mxu0 0
    %202 = vmatprep.subr.bf16.mxu0 0
    %203 = vmatpush1.bf16.msra.mxu0 0
    %204 = vmatprep.subr.bf16.mxu0 0
    %205 = vmatpush1.bf16.msra.mxu0 0
    %206 = vmatprep.subr.bf16.mxu0 0
    %207 = vmatpush1.bf16.msra.mxu0 0
    %208 = vmatprep.subr.bf16.mxu0 0
    %209 = vmatpush1.bf16.msra.mxu0 0
    %210 = vmatprep.subr.bf16.mxu0 0
    %211 = vmatpush1.bf16.msra.mxu0 0
    %212 = vmatprep.mubr.bf16.mxu0 0
    %213 = vmatmul.mubr.bf16.gmra.mrb[0].mxu0 %v172
    %v214 = vpop.f32.mrb[0].mxu0
    %v215 = vadd.f32 %v158, %v214
    %v216 = vpop.f32.mrb[0].mxu0
    %v217 = vadd.f32 %v162, %v216
    %v218 = vpop.f32.mrb[0].mxu0
    %v219 = vadd.f32 %v158, %v218
    %v220 = vpop.f32.mrb[0].mxu0
    %v221 = vadd.f32 %v162, %v220
    %222 = vmatprep.mubr.bf16.mxu0 0
    %223 = vmatmul.mubr.bf16.gmra.mrb[0].mxu0 %v175
    %v224 = vpop.f32.mrb[0].mxu0
    %v225 = vadd.f32 %v158, %v224
    %v226 = vpop.f32.mrb[0].mxu0
    %v227 = vadd.f32 %v162, %v226
    %v228 = vpop.f32.mrb[0].mxu0
    %v229 = vadd.f32 %v158, %v228
    %v230 = vpop.f32.mrb[0].mxu0
    %v231 = vadd.f32 %v162, %v230
    %232 = vmatprep.mubr.bf16.mxu0 0
    %233 = vmatmul.mubr.bf16.gmra.mrb[0].mxu0 %v178
    %v234 = vpop.f32.mrb[0].mxu0
    %v235 = vadd.f32 %v158, %v234
    %v236 = vpop.f32.mrb[0].mxu0
    %v237 = vadd.f32 %v162, %v236
    %v238 = vpop.f32.mrb[0].mxu0
    %v239 = vadd.f32 %v158, %v238
    %v240 = vpop.f32.mrb[0].mxu0
    %v241 = vadd.f32 %v162, %v240
    %242 = vdwg.mxu0
    %243 = vmatprep.subr.bf16.mxu0 0
    %244 = vmatpush1.bf16.msra.mxu0 %v149
    %245 = vmatprep.subr.bf16.mxu0 0
    %246 = vmatpush1.bf16.msra.mxu0 %v152
    %247 = vmatprep.subr.bf16.mxu0 0
    %248 = vmatpush1.bf16.msra.mxu0 0
    %249 = vmatprep.subr.bf16.mxu0 0
    %250 = vmatpush1.bf16.msra.mxu0 0
    %251 = vmatprep.subr.bf16.mxu0 0
    %252 = vmatpush1.bf16.msra.mxu0 0
    %253 = vmatprep.subr.bf16.mxu0 0
    %254 = vmatpush1.bf16.msra.mxu0 0
    %255 = vmatprep.subr.bf16.mxu0 0
    %256 = vmatpush1.bf16.msra.mxu0 0
    %257 = vmatprep.subr.bf16.mxu0 0
    %258 = vmatpush1.bf16.msra.mxu0 0
    %259 = vmatprep.subr.bf16.mxu0 0
    %260 = vmatpush1.bf16.msra.mxu0 0
    %261 = vmatprep.subr.bf16.mxu0 0
    %262 = vmatpush1.bf16.msra.mxu0 0
    %263 = vmatprep.subr.bf16.mxu0 0
    %264 = vmatpush1.bf16.msra.mxu0 0
    %265 = vmatprep.subr.bf16.mxu0 0
    %266 = vmatpush1.bf16.msra.mxu0 0
    %267 = vmatprep.subr.bf16.mxu0 0
    %268 = vmatpush1.bf16.msra.mxu0 0
    %269 = vmatprep.subr.bf16.mxu0 0
    %270 = vmatpush1.bf16.msra.mxu0 0
    %271 = vmatprep.subr.bf16.mxu0 0
    %272 = vmatpush1.bf16.msra.mxu0 0
    %273 = vmatprep.subr.bf16.mxu0 0
    %274 = vmatpush1.bf16.msra.mxu0 0
    %275 = vmatprep.mubr.bf16.mxu0 0
    %276 = vmatmul.mubr.bf16.gmra.mrb[0].mxu0 %v172
    %v277 = vpop.f32.mrb[0].mxu0
    %v278 = vadd.f32 %v166, %v277
    %v279 = vpop.f32.mrb[0].mxu0
    %v280 = vpop.f32.mrb[0].mxu0
    %v281 = vadd.f32 %v166, %v280
    %v282 = vpop.f32.mrb[0].mxu0
    %283 = vmatprep.mubr.bf16.mxu0 0
    %284 = vmatmul.mubr.bf16.gmra.mrb[0].mxu0 %v175
    %v285 = vpop.f32.mrb[0].mxu0
    %v286 = vadd.f32 %v166, %v285
    %v287 = vpop.f32.mrb[0].mxu0
    %v288 = vpop.f32.mrb[0].mxu0
    %v289 = vadd.f32 %v166, %v288
    %v290 = vpop.f32.mrb[0].mxu0
    %291 = vmatprep.mubr.bf16.mxu0 0
    %292 = vmatmul.mubr.bf16.gmra.mrb[0].mxu0 %v178
    %v293 = vpop.f32.mrb[0].mxu0
    %v294 = vadd.f32 %v166, %v293
    %v295 = vpop.f32.mrb[0].mxu0
    %v296 = vpop.f32.mrb[0].mxu0
    %v297 = vadd.f32 %v166, %v296
    %v298 = vpop.f32.mrb[0].mxu0
    %299 = vdwg.mxu0
    %v300 = vmax.f32 %v215, 0.0
    %v301 = vmax.f32 %v217, 0.0
    %v302 = vmax.f32 %v219, 0.0
    %v303 = vmax.f32 %v221, 0.0
    %v304 = vmax.f32 %v225, 0.0
    %v305 = vmax.f32 %v227, 0.0
    %v306 = vmax.f32 %v229, 0.0
    %v307 = vmax.f32 %v231, 0.0
    %v308 = vmax.f32 %v235, 0.0
    %v309 = vmax.f32 %v237, 0.0
    %v310 = vmax.f32 %v239, 0.0
    %v311 = vmax.f32 %v241, 0.0
    %v312 = vld [vmem:[%s4] sm:$0xff]
    %v313 = vld [vmem:[%s4 + $0x10] sm:$0xff]
    %v314 = vld [vmem:[%s4 + $0x20] sm:$0xff]
    %v315 = vld [vmem:[%s4 + $0x30] sm:$0xff]
    %v316 = vld [vmem:[%s4 + $0x40] sm:$0xff]
    %v317 = vld [vmem:[%s4 + $0x50] sm:$0xff]
    %v318 = vld [vmem:[%s4 + $0x60] sm:$0xff]
    %v319 = vld [vmem:[%s4 + $0x70] sm:$0xff]
    %v320 = vld [vmem:[%s4 + $0x80] sm:$0xff]
    %v321 = vld [vmem:[%s4 + $0x90] sm:$0xff]
    %v322 = vld [vmem:[%s4 + $0xa0] sm:$0xff]
    %v323 = vld [vmem:[%s4 + $0xb0] sm:$0xff]
    %v324 = vld [vmem:[%s4 + $0xc0] sm:$0xff]
    %v325 = vld [vmem:[%s4 + $0xd0] sm:$0xff]
    %v326 = vld [vmem:[%s4 + $0xe0] sm:$0xff]
    %v327 = vld [vmem:[%s4 + $0xf0] sm:$0xff]
    %v328 = vld [vmem:[%s5 + $0x2] sm:$0x3]
    %v329 = vpack.c.bf16 %v302, %v300
    %v330 = vpack.c.bf16 %v306, %v304
    %v331 = vpack.c.bf16 %v310, %v308
    %v332 = vpack.c.bf16 %v313, %v312
    %v333 = vpack.c.bf16 %v315, %v314
    %v334 = vpack.c.bf16 %v317, %v316
    %v335 = vpack.c.bf16 %v319, %v318
    %v336 = vpack.c.bf16 %v321, %v320
    %v337 = vpack.c.bf16 %v323, %v322
    %v338 = vpack.c.bf16 %v325, %v324
    %v339 = vpack.c.bf16 %v327, %v326
    %v341 = vlaneseq
    %v342 = vshrl.u32 %v341, 7
    %v343 = vsub.s32 0, %v342
    %v344 = vrot.slane %v328, %v343
    %v345 = vlaneseq
    %v346 = vshrl.u32 %v345, 7
    %v347 = vsub.s32 1, %v346
    %v348 = vrot.slane %v328, %v347
    %349 = vrot.lane.b32.xlu0 %v344, 96
    %v350 = vpop.permute.xlu0 %349
    %351 = vrot.lane.b32.xlu0 %v348, 96
    %v352 = vpop.permute.xlu0 %351
    %vm353 = vcmask 785408
    %v354 = vsel %vm353, %v350, %v352
    %356 = vmatprep.subr.bf16.mxu0 0
    %357 = vmatpush1.bf16.msra.mxu0 %v332
    %358 = vmatprep.subr.bf16.mxu0 0
    %359 = vmatpush1.bf16.msra.mxu0 %v333
    %360 = vmatprep.subr.bf16.mxu0 0
    %361 = vmatpush1.bf16.msra.mxu0 %v334
    %362 = vmatprep.subr.bf16.mxu0 0
    %363 = vmatpush1.bf16.msra.mxu0 %v335
    %364 = vmatprep.subr.bf16.mxu0 0
    %365 = vmatpush1.bf16.msra.mxu0 %v336
    %366 = vmatprep.subr.bf16.mxu0 0
    %367 = vmatpush1.bf16.msra.mxu0 %v337
    %368 = vmatprep.subr.bf16.mxu0 0
    %369 = vmatpush1.bf16.msra.mxu0 %v338
    %370 = vmatprep.subr.bf16.mxu0 0
    %371 = vmatpush1.bf16.msra.mxu0 %v339
    %372 = vmatprep.subr.bf16.mxu0 0
    %373 = vmatpush1.bf16.msra.mxu0 0
    %374 = vmatprep.subr.bf16.mxu0 0
    %375 = vmatpush1.bf16.msra.mxu0 0
    %376 = vmatprep.subr.bf16.mxu0 0
    %377 = vmatpush1.bf16.msra.mxu0 0
    %378 = vmatprep.subr.bf16.mxu0 0
    %379 = vmatpush1.bf16.msra.mxu0 0
    %380 = vmatprep.subr.bf16.mxu0 0
    %381 = vmatpush1.bf16.msra.mxu0 0
    %382 = vmatprep.subr.bf16.mxu0 0
    %383 = vmatpush1.bf16.msra.mxu0 0
    %384 = vmatprep.subr.bf16.mxu0 0
    %385 = vmatpush1.bf16.msra.mxu0 0
    %386 = vmatprep.subr.bf16.mxu0 0
    %387 = vmatpush1.bf16.msra.mxu0 0
    %388 = vmatprep.mubr.bf16.mxu0 0
    %389 = vmatmul.mubr.bf16.gmra.mrb[0].mxu0 %v329
    %v390 = vpop.f32.mrb[0].mxu0
    %v391 = vadd.f32 %v354, %v390
    %v392 = vpop.f32.mrb[0].mxu0
    %v393 = vpop.f32.mrb[0].mxu0
    %v394 = vadd.f32 %v354, %v393
    %v395 = vpop.f32.mrb[0].mxu0
    %396 = vmatprep.mubr.bf16.mxu0 0
    %397 = vmatmul.mubr.bf16.gmra.mrb[0].mxu0 %v330
    %v398 = vpop.f32.mrb[0].mxu0
    %v399 = vadd.f32 %v354, %v398
    %v400 = vpop.f32.mrb[0].mxu0
    %v401 = vpop.f32.mrb[0].mxu0
    %v402 = vadd.f32 %v354, %v401
    %v403 = vpop.f32.mrb[0].mxu0
    %404 = vmatprep.mubr.bf16.mxu0 0
    %405 = vmatmul.mubr.bf16.gmra.mrb[0].mxu0 %v331
    %v406 = vpop.f32.mrb[0].mxu0
    %v407 = vadd.f32 %v354, %v406
    %v408 = vpop.f32.mrb[0].mxu0
    %v409 = vpop.f32.mrb[0].mxu0
    %v410 = vadd.f32 %v354, %v409
    %v411 = vpop.f32.mrb[0].mxu0
    %412 = vdwg.mxu0
    %v413 = vmax.f32 %v391, 0.0
    %v414 = vmax.f32 %v394, 0.0
    %v415 = vmax.f32 %v399, 0.0
    %v416 = vmax.f32 %v402, 0.0
    %v417 = vmax.f32 %v407, 0.0
    %v418 = vmax.f32 %v410, 0.0
    %v419 = vand.u32 2147483647, %v391
    %v420 = vand.u32 2147483647, %v394
    %v421 = vand.u32 2147483647, %v399
    %v422 = vand.u32 2147483647, %v402
    %v423 = vand.u32 2147483647, %v407
    %v424 = vand.u32 2147483647, %v410
    %v425 = vsub.f32 0.0, %v419
    %v426 = vsub.f32 0.0, %v420
    %v427 = vsub.f32 0.0, %v421
    %v428 = vsub.f32 0.0, %v422
    %v429 = vsub.f32 0.0, %v423
    %v430 = vsub.f32 0.0, %v424
    %v431 = vmul.f32 %v425, 1.442695
    %v432 = vpow.pop %v431
    %v433 = vmul.f32 %v426, 1.442695
    %v434 = vpow.pop %v433
    %v435 = vmul.f32 %v427, 1.442695
    %v436 = vpow.pop %v435
    %v437 = vmul.f32 %v428, 1.442695
    %v438 = vpow.pop %v437
    %v439 = vmul.f32 %v429, 1.442695
    %v440 = vpow.pop %v439
    %v441 = vmul.f32 %v430, 1.442695
    %v442 = vpow.pop %v441
    %v443 = vadd.f32 %v432, 1.0
    %v444 = vadd.f32 %v434, 1.0
    %v445 = vadd.f32 %v436, 1.0
    %v446 = vadd.f32 %v438, 1.0
    %v447 = vadd.f32 %v440, 1.0
    %v448 = vadd.f32 %v442, 1.0
    %v449 = vlog2.pop %v443
    %v450 = vmul.f32 %v449, 0.6931472
    %v451 = vlog2.pop %v444
    %v452 = vmul.f32 %v451, 0.6931472
    %v453 = vlog2.pop %v445
    %v454 = vmul.f32 %v453, 0.6931472
    %v455 = vlog2.pop %v446
    %v456 = vmul.f32 %v455, 0.6931472
    %v457 = vlog2.pop %v447
    %v458 = vmul.f32 %v457, 0.6931472
    %v459 = vlog2.pop %v448
    %v460 = vmul.f32 %v459, 0.6931472
    %v461 = vadd.f32 %v413, %v450
    %v462 = vadd.f32 %v414, %v452
    %v463 = vadd.f32 %v415, %v454
    %v464 = vadd.f32 %v416, %v456
    %v465 = vadd.f32 %v417, %v458
    %v466 = vadd.f32 %v418, %v460
    %v467 = vpack.c.bf16 %v303, %v301
    %v468 = vpack.c.bf16 %v307, %v305
    %v469 = vpack.c.bf16 %v311, %v309
    %470 = vmatprep.subr.bf16.mxu0 0
    %471 = vmatpush1.bf16.msra.mxu0 %v332
    %472 = vmatprep.subr.bf16.mxu0 0
    %473 = vmatpush1.bf16.msra.mxu0 %v333
    %474 = vmatprep.subr.bf16.mxu0 0
    %475 = vmatpush1.bf16.msra.mxu0 %v334
    %476 = vmatprep.subr.bf16.mxu0 0
    %477 = vmatpush1.bf16.msra.mxu0 %v335
    %478 = vmatprep.subr.bf16.mxu0 0
    %479 = vmatpush1.bf16.msra.mxu0 %v336
    %480 = vmatprep.subr.bf16.mxu0 0
    %481 = vmatpush1.bf16.msra.mxu0 %v337
    %482 = vmatprep.subr.bf16.mxu0 0
    %483 = vmatpush1.bf16.msra.mxu0 %v338
    %484 = vmatprep.subr.bf16.mxu0 0
    %485 = vmatpush1.bf16.msra.mxu0 %v339
    %486 = vmatprep.subr.bf16.mxu0 0
    %487 = vmatpush1.bf16.msra.mxu0 0
    %488 = vmatprep.subr.bf16.mxu0 0
    %489 = vmatpush1.bf16.msra.mxu0 0
    %490 = vmatprep.subr.bf16.mxu0 0
    %491 = vmatpush1.bf16.msra.mxu0 0
    %492 = vmatprep.subr.bf16.mxu0 0
    %493 = vmatpush1.bf16.msra.mxu0 0
    %494 = vmatprep.subr.bf16.mxu0 0
    %495 = vmatpush1.bf16.msra.mxu0 0
    %496 = vmatprep.subr.bf16.mxu0 0
    %497 = vmatpush1.bf16.msra.mxu0 0
    %498 = vmatprep.subr.bf16.mxu0 0
    %499 = vmatpush1.bf16.msra.mxu0 0
    %500 = vmatprep.subr.bf16.mxu0 0
    %501 = vmatpush1.bf16.msra.mxu0 0
    %502 = vmatprep.mubr.bf16.mxu0 0
    %503 = vmatmul.mubr.bf16.gmra.mrb[0].mxu0 %v467
    %v504 = vpop.f32.mrb[0].mxu0
    %v505 = vadd.f32 %v354, %v504
    %v506 = vpop.f32.mrb[0].mxu0
    %v507 = vpop.f32.mrb[0].mxu0
    %v508 = vadd.f32 %v354, %v507
    %v509 = vpop.f32.mrb[0].mxu0
    %510 = vmatprep.mubr.bf16.mxu0 0
    %511 = vmatmul.mubr.bf16.gmra.mrb[0].mxu0 %v468
    %v512 = vpop.f32.mrb[0].mxu0
    %v513 = vadd.f32 %v354, %v512
    %v514 = vpop.f32.mrb[0].mxu0
    %v515 = vpop.f32.mrb[0].mxu0
    %v516 = vadd.f32 %v354, %v515
    %v517 = vpop.f32.mrb[0].mxu0
    %518 = vmatprep.mubr.bf16.mxu0 0
    %519 = vmatmul.mubr.bf16.gmra.mrb[0].mxu0 %v469
    %v520 = vpop.f32.mrb[0].mxu0
    %v521 = vadd.f32 %v354, %v520
    %v522 = vpop.f32.mrb[0].mxu0
    %v523 = vpop.f32.mrb[0].mxu0
    %v524 = vadd.f32 %v354, %v523
    %v525 = vpop.f32.mrb[0].mxu0
    %526 = vdwg.mxu0
    %v527 = vmax.f32 %v505, 0.0
    %v528 = vmax.f32 %v508, 0.0
    %v529 = vmax.f32 %v513, 0.0
    %v530 = vmax.f32 %v516, 0.0
    %v531 = vmax.f32 %v521, 0.0
    %v532 = vmax.f32 %v524, 0.0
    %v533 = vand.u32 2147483647, %v505
    %v534 = vand.u32 2147483647, %v508
    %v535 = vand.u32 2147483647, %v513
    %v536 = vand.u32 2147483647, %v516
    %v537 = vand.u32 2147483647, %v521
    %v538 = vand.u32 2147483647, %v524
    %v539 = vsub.f32 0.0, %v533
    %v540 = vsub.f32 0.0, %v534
    %v541 = vsub.f32 0.0, %v535
    %v542 = vsub.f32 0.0, %v536
    %v543 = vsub.f32 0.0, %v537
    %v544 = vsub.f32 0.0, %v538
    %v545 = vmul.f32 %v539, 1.442695
    %v546 = vpow.pop %v545
    %v547 = vmul.f32 %v540, 1.442695
    %v548 = vpow.pop %v547
    %v549 = vmul.f32 %v541, 1.442695
    %v550 = vpow.pop %v549
    %v551 = vmul.f32 %v542, 1.442695
    %v552 = vpow.pop %v551
    %v553 = vmul.f32 %v543, 1.442695
    %v554 = vpow.pop %v553
    %v555 = vmul.f32 %v544, 1.442695
    %v556 = vpow.pop %v555
    %v557 = vadd.f32 %v546, 1.0
    %v558 = vadd.f32 %v548, 1.0
    %v559 = vadd.f32 %v550, 1.0
    %v560 = vadd.f32 %v552, 1.0
    %v561 = vadd.f32 %v554, 1.0
    %v562 = vadd.f32 %v556, 1.0
    %v563 = vlog2.pop %v557
    %v564 = vmul.f32 %v563, 0.6931472
    %v565 = vlog2.pop %v558
    %v566 = vmul.f32 %v565, 0.6931472
    %v567 = vlog2.pop %v559
    %v568 = vmul.f32 %v567, 0.6931472
    %v569 = vlog2.pop %v560
    %v570 = vmul.f32 %v569, 0.6931472
    %v571 = vlog2.pop %v561
    %v572 = vmul.f32 %v571, 0.6931472
    %v573 = vlog2.pop %v562
    %v574 = vmul.f32 %v573, 0.6931472
    %v575 = vadd.f32 %v527, %v564
    %v576 = vadd.f32 %v528, %v566
    %v577 = vadd.f32 %v529, %v568
    %v578 = vadd.f32 %v530, %v570
    %v579 = vadd.f32 %v531, %v572
    %v580 = vadd.f32 %v532, %v574
    %581 = vxpose.xlu0.b32.start [1/16] %v575, 128
    %582 = vxpose.xlu0.b32.cont [2/16] %v576, 128
    %583 = vxpose.xlu0.b32.cont [3/16] %v577, 128
    %584 = vxpose.xlu0.b32.cont [4/16] 0.0, 128
    %585 = vxpose.xlu0.b32.cont [5/16] 0.0, 128
    %586 = vxpose.xlu0.b32.cont [6/16] 0.0, 128
    %587 = vxpose.xlu0.b32.cont [7/16] 0.0, 128
    %588 = vxpose.xlu0.b32.cont [8/16] 0.0, 128
    %589 = vxpose.xlu0.b32.cont [9/16] 0.0, 128
    %590 = vxpose.xlu0.b32.cont [10/16] 0.0, 128
    %591 = vxpose.xlu0.b32.cont [11/16] 0.0, 128
    %592 = vxpose.xlu0.b32.cont [12/16] 0.0, 128
    %593 = vxpose.xlu0.b32.cont [13/16] 0.0, 128
    %594 = vxpose.xlu0.b32.cont [14/16] 0.0, 128
    %595 = vxpose.xlu0.b32.cont [15/16] 0.0, 128
    %596 = vxpose.xlu0.b32.end [16/16] 0.0, 128
    %v597 = vpop.trf.xlu0
    %v598 = vpop.trf.xlu0
    %v599 = vpop.trf.xlu0
    %v600 = vpop.trf.xlu0
    %v601 = vpop.trf.xlu0
    %v602 = vpop.trf.xlu0
    %v603 = vpop.trf.xlu0
    %v604 = vpop.trf.xlu0
    %v605 = vpop.trf.xlu0
    %v606 = vpop.trf.xlu0
    %v607 = vpop.trf.xlu0
    %v608 = vpop.trf.xlu0
    %v609 = vpop.trf.xlu0
    %v610 = vpop.trf.xlu0
    %v611 = vpop.trf.xlu0
    %v612 = vpop.trf.xlu0
    %vm613 = vcmask 138240
    %v615 = vsel %vm613, %v597, 0
    %v618 = vsel %vm613, %v598, 0
    %v621 = vsel %vm613, %v599, 0
    %v624 = vsel %vm613, %v600, 0
    %v627 = vsel %vm613, %v601, 0
    %v630 = vsel %vm613, %v602, 0
    %v633 = vsel %vm613, %v603, 0
    %v636 = vsel %vm613, %v604, 0
    %v639 = vsel %vm613, %v605, 0
    %v642 = vsel %vm613, %v606, 0
    %v645 = vsel %vm613, %v607, 0
    %v648 = vsel %vm613, %v608, 0
    %v651 = vsel %vm613, %v609, 0
    %v654 = vsel %vm613, %v610, 0
    %v657 = vsel %vm613, %v611, 0
    %v660 = vsel %vm613, %v612, 0
    %vm662 = vcmask 1040384
    %v664 = vsel %vm662, %v286, 0
    %666 = vmatprep.subr.mxu0 0.0
    %667 = vmatpush1.msra.mxu0 %v278
    %668 = vmatprep.subr.mxu0 0.0
    %669 = vmatpush1.msra.mxu0 %v281
    %670 = vmatprep.subr.mxu0 0.0
    %671 = vmatpush1.msra.mxu0 %v664
    %672 = vmatprep.subr.mxu0 0.0
    %673 = vmatpush1.msra.mxu0 0.0
    %674 = vmatprep.subr.mxu0 0.0
    %675 = vmatpush1.msra.mxu0 0.0
    %676 = vmatprep.subr.mxu0 0.0
    %677 = vmatpush1.msra.mxu0 0.0
    %678 = vmatprep.subr.mxu0 0.0
    %679 = vmatpush1.msra.mxu0 0.0
    %680 = vmatprep.subr.mxu0 0.0
    %681 = vmatpush1.msra.mxu0 0.0
    %682 = vmatprep.subr.mxu0 0.0
    %683 = vmatpush1.msra.mxu0 0.0
    %684 = vmatprep.subr.mxu0 0.0
    %685 = vmatpush1.msra.mxu0 0.0
    %686 = vmatprep.subr.mxu0 0.0
    %687 = vmatpush1.msra.mxu0 0.0
    %688 = vmatprep.subr.mxu0 0.0
    %689 = vmatpush1.msra.mxu0 0.0
    %690 = vmatprep.subr.mxu0 0.0
    %691 = vmatpush1.msra.mxu0 0.0
    %692 = vmatprep.subr.mxu0 0.0
    %693 = vmatpush1.msra.mxu0 0.0
    %694 = vmatprep.subr.mxu0 0.0
    %695 = vmatpush1.msra.mxu0 0.0
    %696 = vmatprep.subr.mxu0 0.0
    %697 = vmatpush1.msra.mxu0 0.0
    %698 = vmatprep.subr.mxu0 0.0
    %699 = vmatpush1.msra.mxu0 0.0
    %700 = vmatprep.subr.mxu0 0.0
    %701 = vmatpush1.msra.mxu0 0.0
    %702 = vmatprep.subr.mxu0 0.0
    %703 = vmatpush1.msra.mxu0 0.0
    %704 = vmatprep.subr.mxu0 0.0
    %705 = vmatpush1.msra.mxu0 0.0
    %706 = vmatprep.subr.mxu0 0.0
    %707 = vmatpush1.msra.mxu0 0.0
    %708 = vmatprep.subr.mxu0 0.0
    %709 = vmatpush1.msra.mxu0 0.0
    %710 = vmatprep.subr.mxu0 0.0
    %711 = vmatpush1.msra.mxu0 0.0
    %712 = vmatprep.subr.mxu0 0.0
    %713 = vmatpush1.msra.mxu0 0.0
    %714 = vmatprep.subr.mxu0 0.0
    %715 = vmatpush1.msra.mxu0 0.0
    %716 = vmatprep.subr.mxu0 0.0
    %717 = vmatpush1.msra.mxu0 0.0
    %718 = vmatprep.subr.mxu0 0.0
    %719 = vmatpush1.msra.mxu0 0.0
    %720 = vmatprep.subr.mxu0 0.0
    %721 = vmatpush1.msra.mxu0 0.0
    %722 = vmatprep.subr.mxu0 0.0
    %723 = vmatpush1.msra.mxu0 0.0
    %724 = vmatprep.subr.mxu0 0.0
    %725 = vmatpush1.msra.mxu0 0.0
    %726 = vmatprep.subr.mxu0 0.0
    %727 = vmatpush1.msra.mxu0 0.0
    %728 = vmatprep.subr.mxu0 0.0
    %729 = vmatpush1.msra.mxu0 0.0
    %730 = vmatprep.mubr.f32.mxu0 0.0
    %731 = vmatmul.mubr.f32.gmra.mrb[0].mxu0 %v615
    %v732 = vpop.f32.mrb[0].mxu0
    %v733 = vadd.f32 0.0, %v732
    %v734 = vpop.f32.mrb[0].mxu0
    %735 = vmatprep.mubr.f32.mxu0 0.0
    %736 = vmatmul.mubr.f32.gmra.mrb[0].mxu0 %v618
    %v737 = vpop.f32.mrb[0].mxu0
    %v738 = vadd.f32 0.0, %v737
    %v739 = vpop.f32.mrb[0].mxu0
    %740 = vmatprep.mubr.f32.mxu0 0.0
    %741 = vmatmul.mubr.f32.gmra.mrb[0].mxu0 %v621
    %v742 = vpop.f32.mrb[0].mxu0
    %v743 = vadd.f32 0.0, %v742
    %v744 = vpop.f32.mrb[0].mxu0
    %745 = vmatprep.mubr.f32.mxu0 0.0
    %746 = vmatmul.mubr.f32.gmra.mrb[0].mxu0 %v624
    %v747 = vpop.f32.mrb[0].mxu0
    %v748 = vadd.f32 0.0, %v747
    %v749 = vpop.f32.mrb[0].mxu0
    %750 = vmatprep.mubr.f32.mxu0 0.0
    %751 = vmatmul.mubr.f32.gmra.mrb[0].mxu0 %v627
    %v752 = vpop.f32.mrb[0].mxu0
    %v753 = vadd.f32 0.0, %v752
    %v754 = vpop.f32.mrb[0].mxu0
    %755 = vmatprep.mubr.f32.mxu0 0.0
    %756 = vmatmul.mubr.f32.gmra.mrb[0].mxu0 %v630
    %v757 = vpop.f32.mrb[0].mxu0
    %v758 = vadd.f32 0.0, %v757
    %v759 = vpop.f32.mrb[0].mxu0
    %760 = vmatprep.mubr.f32.mxu0 0.0
    %761 = vmatmul.mubr.f32.gmra.mrb[0].mxu0 %v633
    %v762 = vpop.f32.mrb[0].mxu0
    %v763 = vadd.f32 0.0, %v762
    %v764 = vpop.f32.mrb[0].mxu0
    %765 = vmatprep.mubr.f32.mxu0 0.0
    %766 = vmatmul.mubr.f32.gmra.mrb[0].mxu0 %v636
    %v767 = vpop.f32.mrb[0].mxu0
    %v768 = vadd.f32 0.0, %v767
    %v769 = vpop.f32.mrb[0].mxu0
    %770 = vmatprep.mubr.f32.mxu0 0.0
    %771 = vmatmul.mubr.f32.gmra.mrb[0].mxu0 %v639
    %v772 = vpop.f32.mrb[0].mxu0
    %v773 = vadd.f32 0.0, %v772
    %v774 = vpop.f32.mrb[0].mxu0
    %775 = vmatprep.mubr.f32.mxu0 0.0
    %776 = vmatmul.mubr.f32.gmra.mrb[0].mxu0 %v642
    %v777 = vpop.f32.mrb[0].mxu0
    %v778 = vadd.f32 0.0, %v777
    %v779 = vpop.f32.mrb[0].mxu0
    %780 = vmatprep.mubr.f32.mxu0 0.0
    %781 = vmatmul.mubr.f32.gmra.mrb[0].mxu0 %v645
    %v782 = vpop.f32.mrb[0].mxu0
    %v783 = vadd.f32 0.0, %v782
    %v784 = vpop.f32.mrb[0].mxu0
    %785 = vmatprep.mubr.f32.mxu0 0.0
    %786 = vmatmul.mubr.f32.gmra.mrb[0].mxu0 %v648
    %v787 = vpop.f32.mrb[0].mxu0
    %v788 = vadd.f32 0.0, %v787
    %v789 = vpop.f32.mrb[0].mxu0
    %790 = vmatprep.mubr.f32.mxu0 0.0
    %791 = vmatmul.mubr.f32.gmra.mrb[0].mxu0 %v651
    %v792 = vpop.f32.mrb[0].mxu0
    %v793 = vadd.f32 0.0, %v792
    %v794 = vpop.f32.mrb[0].mxu0
    %795 = vmatprep.mubr.f32.mxu0 0.0
    %796 = vmatmul.mubr.f32.gmra.mrb[0].mxu0 %v654
    %v797 = vpop.f32.mrb[0].mxu0
    %v798 = vadd.f32 0.0, %v797
    %v799 = vpop.f32.mrb[0].mxu0
    %800 = vmatprep.mubr.f32.mxu0 0.0
    %801 = vmatmul.mubr.f32.gmra.mrb[0].mxu0 %v657
    %v802 = vpop.f32.mrb[0].mxu0
    %v803 = vadd.f32 0.0, %v802
    %v804 = vpop.f32.mrb[0].mxu0
    %805 = vmatprep.mubr.f32.mxu0 0.0
    %806 = vmatmul.mubr.f32.gmra.mrb[0].mxu0 %v660
    %v807 = vpop.f32.mrb[0].mxu0
    %v808 = vadd.f32 0.0, %v807
    %v809 = vpop.f32.mrb[0].mxu0
    %810 = vdwg.mxu0
    %827 = vrot.lane.b32.xlu0 %v116, 96
    %v828 = vpop.permute.xlu0 %827
    %829 = vrot.lane.b32.xlu0 %v117, 96
    %v830 = vpop.permute.xlu0 %829
    %831 = vrot.lane.b32.xlu0 %v118, 96
    %v832 = vpop.permute.xlu0 %831
    %833 = vrot.lane.b32.xlu0 %v119, 96
    %v834 = vpop.permute.xlu0 %833
    %835 = vrot.lane.b32.xlu0 %v120, 96
    %v836 = vpop.permute.xlu0 %835
    %837 = vrot.lane.b32.xlu0 %v121, 96
    %v838 = vpop.permute.xlu0 %837
    %839 = vrot.lane.b32.xlu0 %v122, 96
    %v840 = vpop.permute.xlu0 %839
    %841 = vrot.lane.b32.xlu0 %v123, 96
    %v842 = vpop.permute.xlu0 %841
    %843 = vrot.lane.b32.xlu0 %v124, 96
    %v844 = vpop.permute.xlu0 %843
    %845 = vrot.lane.b32.xlu0 %v125, 96
    %v846 = vpop.permute.xlu0 %845
    %847 = vrot.lane.b32.xlu0 %v126, 96
    %v848 = vpop.permute.xlu0 %847
    %849 = vrot.lane.b32.xlu0 %v127, 96
    %v850 = vpop.permute.xlu0 %849
    %851 = vrot.lane.b32.xlu0 %v128, 96
    %v852 = vpop.permute.xlu0 %851
    %853 = vrot.lane.b32.xlu0 %v129, 96
    %v854 = vpop.permute.xlu0 %853
    %855 = vrot.lane.b32.xlu0 %v130, 96
    %v856 = vpop.permute.xlu0 %855
    %857 = vrot.lane.b32.xlu0 %v131, 96
    %v858 = vpop.permute.xlu0 %857
    %v875 = vmul.f32 %v733, %v828
    %v876 = vmul.f32 %v738, %v830
    %v877 = vmul.f32 %v743, %v832
    %v878 = vmul.f32 %v748, %v834
    %v879 = vmul.f32 %v753, %v836
    %v880 = vmul.f32 %v758, %v838
    %v881 = vmul.f32 %v763, %v840
    %v882 = vmul.f32 %v768, %v842
    %v883 = vmul.f32 %v773, %v844
    %v884 = vmul.f32 %v778, %v846
    %v885 = vmul.f32 %v783, %v848
    %v886 = vmul.f32 %v788, %v850
    %v887 = vmul.f32 %v793, %v852
    %v888 = vmul.f32 %v798, %v854
    %v889 = vmul.f32 %v803, %v856
    %v890 = vmul.f32 %v808, %v858
    %v891 = vpack.c.bf16 %v462, %v461
    %v892 = vpack.c.bf16 %v463, %v463
    %v893 = vpack.c.bf16 %v876, %v875
    %v894 = vpack.c.bf16 %v878, %v877
    %v895 = vpack.c.bf16 %v880, %v879
    %v896 = vpack.c.bf16 %v882, %v881
    %v897 = vpack.c.bf16 %v884, %v883
    %v898 = vpack.c.bf16 %v886, %v885
    %v899 = vpack.c.bf16 %v888, %v887
    %v900 = vpack.c.bf16 %v890, %v889
    %901 = vmatprep.subr.bf16.mxu0 0
    %902 = vmatpush1.bf16.msra.mxu0 %v893
    %903 = vmatprep.subr.bf16.mxu0 0
    %904 = vmatpush1.bf16.msra.mxu0 %v894
    %905 = vmatprep.subr.bf16.mxu0 0
    %906 = vmatpush1.bf16.msra.mxu0 %v895
    %907 = vmatprep.subr.bf16.mxu0 0
    %908 = vmatpush1.bf16.msra.mxu0 %v896
    %909 = vmatprep.subr.bf16.mxu0 0
    %910 = vmatpush1.bf16.msra.mxu0 %v897
    %911 = vmatprep.subr.bf16.mxu0 0
    %912 = vmatpush1.bf16.msra.mxu0 %v898
    %913 = vmatprep.subr.bf16.mxu0 0
    %914 = vmatpush1.bf16.msra.mxu0 %v899
    %915 = vmatprep.subr.bf16.mxu0 0
    %916 = vmatpush1.bf16.msra.mxu0 %v900
    %917 = vmatprep.subr.bf16.mxu0 0
    %918 = vmatpush1.bf16.msra.mxu0 0
    %919 = vmatprep.subr.bf16.mxu0 0
    %920 = vmatpush1.bf16.msra.mxu0 0
    %921 = vmatprep.subr.bf16.mxu0 0
    %922 = vmatpush1.bf16.msra.mxu0 0
    %923 = vmatprep.subr.bf16.mxu0 0
    %924 = vmatpush1.bf16.msra.mxu0 0
    %925 = vmatprep.subr.bf16.mxu0 0
    %926 = vmatpush1.bf16.msra.mxu0 0
    %927 = vmatprep.subr.bf16.mxu0 0
    %928 = vmatpush1.bf16.msra.mxu0 0
    %929 = vmatprep.subr.bf16.mxu0 0
    %930 = vmatpush1.bf16.msra.mxu0 0
    %931 = vmatprep.subr.bf16.mxu0 0
    %932 = vmatpush1.bf16.msra.mxu0 0
    %933 = vmatprep.mubr.bf16.mxu0 0
    %934 = vmatmul.mubr.bf16.gmra.mrb[0].mxu0 %v891
    %v935 = vpop.f32.mrb[0].mxu0
    %v936 = vadd.f32 0.0, %v935
    %v937 = vpop.f32.mrb[0].mxu0
    %v938 = vpop.f32.mrb[0].mxu0
    %v939 = vadd.f32 0.0, %v938
    %v940 = vpop.f32.mrb[0].mxu0
    %941 = vmatprep.mubr.bf16.mxu0 0
    %942 = vmatmul.mubr.bf16.gmra.mrb[0].mxu0 %v892
    %v943 = vpop.f32.mrb[0].mxu0
    %v944 = vadd.f32 0.0, %v943
    %v945 = vpop.f32.mrb[0].mxu0
    %v946 = vpop.f32.mrb[0].mxu0
    %v947 = vpop.f32.mrb[0].mxu0
    %948 = vdwg.mxu0
    %949 = vxpose.xlu0.b32.start [1/16] %v578, 128
    %950 = vxpose.xlu0.b32.cont [2/16] %v579, 128
    %951 = vxpose.xlu0.b32.cont [3/16] %v580, 128
    %952 = vxpose.xlu0.b32.cont [4/16] 0.0, 128
    %953 = vxpose.xlu0.b32.cont [5/16] 0.0, 128
    %954 = vxpose.xlu0.b32.cont [6/16] 0.0, 128
    %955 = vxpose.xlu0.b32.cont [7/16] 0.0, 128
    %956 = vxpose.xlu0.b32.cont [8/16] 0.0, 128
    %957 = vxpose.xlu0.b32.cont [9/16] 0.0, 128
    %958 = vxpose.xlu0.b32.cont [10/16] 0.0, 128
    %959 = vxpose.xlu0.b32.cont [11/16] 0.0, 128
    %960 = vxpose.xlu0.b32.cont [12/16] 0.0, 128
    %961 = vxpose.xlu0.b32.cont [13/16] 0.0, 128
    %962 = vxpose.xlu0.b32.cont [14/16] 0.0, 128
    %963 = vxpose.xlu0.b32.cont [15/16] 0.0, 128
    %964 = vxpose.xlu0.b32.end [16/16] 0.0, 128
    %v965 = vpop.trf.xlu0
    %v966 = vpop.trf.xlu0
    %v967 = vpop.trf.xlu0
    %v968 = vpop.trf.xlu0
    %v969 = vpop.trf.xlu0
    %v970 = vpop.trf.xlu0
    %v971 = vpop.trf.xlu0
    %v972 = vpop.trf.xlu0
    %v973 = vpop.trf.xlu0
    %v974 = vpop.trf.xlu0
    %v975 = vpop.trf.xlu0
    %v976 = vpop.trf.xlu0
    %v977 = vpop.trf.xlu0
    %v978 = vpop.trf.xlu0
    %v979 = vpop.trf.xlu0
    %v980 = vpop.trf.xlu0
    %v982 = vsel %vm613, %v965, 0
    %v985 = vsel %vm613, %v966, 0
    %v988 = vsel %vm613, %v967, 0
    %v991 = vsel %vm613, %v968, 0
    %v994 = vsel %vm613, %v969, 0
    %v997 = vsel %vm613, %v970, 0
    %v1000 = vsel %vm613, %v971, 0
    %v1003 = vsel %vm613, %v972, 0
    %v1006 = vsel %vm613, %v973, 0
    %v1009 = vsel %vm613, %v974, 0
    %v1012 = vsel %vm613, %v975, 0
    %v1015 = vsel %vm613, %v976, 0
    %v1018 = vsel %vm613, %v977, 0
    %v1021 = vsel %vm613, %v978, 0
    %v1024 = vsel %vm613, %v979, 0
    %v1027 = vsel %vm613, %v980, 0
    %v1030 = vsel %vm662, %v297, 0
    %1032 = vmatprep.subr.mxu0 0.0
    %1033 = vmatpush1.msra.mxu0 %v289
    %1034 = vmatprep.subr.mxu0 0.0
    %1035 = vmatpush1.msra.mxu0 %v294
    %1036 = vmatprep.subr.mxu0 0.0
    %1037 = vmatpush1.msra.mxu0 %v1030
    %1038 = vmatprep.subr.mxu0 0.0
    %1039 = vmatpush1.msra.mxu0 0.0
    %1040 = vmatprep.subr.mxu0 0.0
    %1041 = vmatpush1.msra.mxu0 0.0
    %1042 = vmatprep.subr.mxu0 0.0
    %1043 = vmatpush1.msra.mxu0 0.0
    %1044 = vmatprep.subr.mxu0 0.0
    %1045 = vmatpush1.msra.mxu0 0.0
    %1046 = vmatprep.subr.mxu0 0.0
    %1047 = vmatpush1.msra.mxu0 0.0
    %1048 = vmatprep.subr.mxu0 0.0
    %1049 = vmatpush1.msra.mxu0 0.0
    %1050 = vmatprep.subr.mxu0 0.0
    %1051 = vmatpush1.msra.mxu0 0.0
    %1052 = vmatprep.subr.mxu0 0.0
    %1053 = vmatpush1.msra.mxu0 0.0
    %1054 = vmatprep.subr.mxu0 0.0
    %1055 = vmatpush1.msra.mxu0 0.0
    %1056 = vmatprep.subr.mxu0 0.0
    %1057 = vmatpush1.msra.mxu0 0.0
    %1058 = vmatprep.subr.mxu0 0.0
    %1059 = vmatpush1.msra.mxu0 0.0
    %1060 = vmatprep.subr.mxu0 0.0
    %1061 = vmatpush1.msra.mxu0 0.0
    %1062 = vmatprep.subr.mxu0 0.0
    %1063 = vmatpush1.msra.mxu0 0.0
    %1064 = vmatprep.subr.mxu0 0.0
    %1065 = vmatpush1.msra.mxu0 0.0
    %1066 = vmatprep.subr.mxu0 0.0
    %1067 = vmatpush1.msra.mxu0 0.0
    %1068 = vmatprep.subr.mxu0 0.0
    %1069 = vmatpush1.msra.mxu0 0.0
    %1070 = vmatprep.subr.mxu0 0.0
    %1071 = vmatpush1.msra.mxu0 0.0
    %1072 = vmatprep.subr.mxu0 0.0
    %1073 = vmatpush1.msra.mxu0 0.0
    %1074 = vmatprep.subr.mxu0 0.0
    %1075 = vmatpush1.msra.mxu0 0.0
    %1076 = vmatprep.subr.mxu0 0.0
    %1077 = vmatpush1.msra.mxu0 0.0
    %1078 = vmatprep.subr.mxu0 0.0
    %1079 = vmatpush1.msra.mxu0 0.0
    %1080 = vmatprep.subr.mxu0 0.0
    %1081 = vmatpush1.msra.mxu0 0.0
    %1082 = vmatprep.subr.mxu0 0.0
    %1083 = vmatpush1.msra.mxu0 0.0
    %1084 = vmatprep.subr.mxu0 0.0
    %1085 = vmatpush1.msra.mxu0 0.0
    %1086 = vmatprep.subr.mxu0 0.0
    %1087 = vmatpush1.msra.mxu0 0.0
    %1088 = vmatprep.subr.mxu0 0.0
    %1089 = vmatpush1.msra.mxu0 0.0
    %1090 = vmatprep.subr.mxu0 0.0
    %1091 = vmatpush1.msra.mxu0 0.0
    %1092 = vmatprep.subr.mxu0 0.0
    %1093 = vmatpush1.msra.mxu0 0.0
    %1094 = vmatprep.subr.mxu0 0.0
    %1095 = vmatpush1.msra.mxu0 0.0
    %1096 = vmatprep.mubr.f32.mxu0 0.0
    %1097 = vmatmul.mubr.f32.gmra.mrb[0].mxu0 %v982
    %v1098 = vpop.f32.mrb[0].mxu0
    %v1099 = vadd.f32 0.0, %v1098
    %v1100 = vpop.f32.mrb[0].mxu0
    %1101 = vmatprep.mubr.f32.mxu0 0.0
    %1102 = vmatmul.mubr.f32.gmra.mrb[0].mxu0 %v985
    %v1103 = vpop.f32.mrb[0].mxu0
    %v1104 = vadd.f32 0.0, %v1103
    %v1105 = vpop.f32.mrb[0].mxu0
    %1106 = vmatprep.mubr.f32.mxu0 0.0
    %1107 = vmatmul.mubr.f32.gmra.mrb[0].mxu0 %v988
    %v1108 = vpop.f32.mrb[0].mxu0
    %v1109 = vadd.f32 0.0, %v1108
    %v1110 = vpop.f32.mrb[0].mxu0
    %1111 = vmatprep.mubr.f32.mxu0 0.0
    %1112 = vmatmul.mubr.f32.gmra.mrb[0].mxu0 %v991
    %v1113 = vpop.f32.mrb[0].mxu0
    %v1114 = vadd.f32 0.0, %v1113
    %v1115 = vpop.f32.mrb[0].mxu0
    %1116 = vmatprep.mubr.f32.mxu0 0.0
    %1117 = vmatmul.mubr.f32.gmra.mrb[0].mxu0 %v994
    %v1118 = vpop.f32.mrb[0].mxu0
    %v1119 = vadd.f32 0.0, %v1118
    %v1120 = vpop.f32.mrb[0].mxu0
    %1121 = vmatprep.mubr.f32.mxu0 0.0
    %1122 = vmatmul.mubr.f32.gmra.mrb[0].mxu0 %v997
    %v1123 = vpop.f32.mrb[0].mxu0
    %v1124 = vadd.f32 0.0, %v1123
    %v1125 = vpop.f32.mrb[0].mxu0
    %1126 = vmatprep.mubr.f32.mxu0 0.0
    %1127 = vmatmul.mubr.f32.gmra.mrb[0].mxu0 %v1000
    %v1128 = vpop.f32.mrb[0].mxu0
    %v1129 = vadd.f32 0.0, %v1128
    %v1130 = vpop.f32.mrb[0].mxu0
    %1131 = vmatprep.mubr.f32.mxu0 0.0
    %1132 = vmatmul.mubr.f32.gmra.mrb[0].mxu0 %v1003
    %v1133 = vpop.f32.mrb[0].mxu0
    %v1134 = vadd.f32 0.0, %v1133
    %v1135 = vpop.f32.mrb[0].mxu0
    %1136 = vmatprep.mubr.f32.mxu0 0.0
    %1137 = vmatmul.mubr.f32.gmra.mrb[0].mxu0 %v1006
    %v1138 = vpop.f32.mrb[0].mxu0
    %v1139 = vadd.f32 0.0, %v1138
    %v1140 = vpop.f32.mrb[0].mxu0
    %1141 = vmatprep.mubr.f32.mxu0 0.0
    %1142 = vmatmul.mubr.f32.gmra.mrb[0].mxu0 %v1009
    %v1143 = vpop.f32.mrb[0].mxu0
    %v1144 = vadd.f32 0.0, %v1143
    %v1145 = vpop.f32.mrb[0].mxu0
    %1146 = vmatprep.mubr.f32.mxu0 0.0
    %1147 = vmatmul.mubr.f32.gmra.mrb[0].mxu0 %v1012
    %v1148 = vpop.f32.mrb[0].mxu0
    %v1149 = vadd.f32 0.0, %v1148
    %v1150 = vpop.f32.mrb[0].mxu0
    %1151 = vmatprep.mubr.f32.mxu0 0.0
    %1152 = vmatmul.mubr.f32.gmra.mrb[0].mxu0 %v1015
    %v1153 = vpop.f32.mrb[0].mxu0
    %v1154 = vadd.f32 0.0, %v1153
    %v1155 = vpop.f32.mrb[0].mxu0
    %1156 = vmatprep.mubr.f32.mxu0 0.0
    %1157 = vmatmul.mubr.f32.gmra.mrb[0].mxu0 %v1018
    %v1158 = vpop.f32.mrb[0].mxu0
    %v1159 = vadd.f32 0.0, %v1158
    %v1160 = vpop.f32.mrb[0].mxu0
    %1161 = vmatprep.mubr.f32.mxu0 0.0
    %1162 = vmatmul.mubr.f32.gmra.mrb[0].mxu0 %v1021
    %v1163 = vpop.f32.mrb[0].mxu0
    %v1164 = vadd.f32 0.0, %v1163
    %v1165 = vpop.f32.mrb[0].mxu0
    %1166 = vmatprep.mubr.f32.mxu0 0.0
    %1167 = vmatmul.mubr.f32.gmra.mrb[0].mxu0 %v1024
    %v1168 = vpop.f32.mrb[0].mxu0
    %v1169 = vadd.f32 0.0, %v1168
    %v1170 = vpop.f32.mrb[0].mxu0
    %1171 = vmatprep.mubr.f32.mxu0 0.0
    %1172 = vmatmul.mubr.f32.gmra.mrb[0].mxu0 %v1027
    %v1173 = vpop.f32.mrb[0].mxu0
    %v1174 = vadd.f32 0.0, %v1173
    %v1175 = vpop.f32.mrb[0].mxu0
    %1176 = vdwg.mxu0
    %v1177 = vmul.f32 %v1099, %v828
    %v1178 = vmul.f32 %v1104, %v830
    %v1179 = vmul.f32 %v1109, %v832
    %v1180 = vmul.f32 %v1114, %v834
    %v1181 = vmul.f32 %v1119, %v836
    %v1182 = vmul.f32 %v1124, %v838
    %v1183 = vmul.f32 %v1129, %v840
    %v1184 = vmul.f32 %v1134, %v842
    %v1185 = vmul.f32 %v1139, %v844
    %v1186 = vmul.f32 %v1144, %v846
    %v1187 = vmul.f32 %v1149, %v848
    %v1188 = vmul.f32 %v1154, %v850
    %v1189 = vmul.f32 %v1159, %v852
    %v1190 = vmul.f32 %v1164, %v854
    %v1191 = vmul.f32 %v1169, %v856
    %v1192 = vmul.f32 %v1174, %v858
    %v1193 = vpack.c.bf16 %v465, %v464
    %v1194 = vpack.c.bf16 %v466, %v466
    %v1195 = vpack.c.bf16 %v1178, %v1177
    %v1196 = vpack.c.bf16 %v1180, %v1179
    %v1197 = vpack.c.bf16 %v1182, %v1181
    %v1198 = vpack.c.bf16 %v1184, %v1183
    %v1199 = vpack.c.bf16 %v1186, %v1185
    %v1200 = vpack.c.bf16 %v1188, %v1187
    %v1201 = vpack.c.bf16 %v1190, %v1189
    %v1202 = vpack.c.bf16 %v1192, %v1191
    %1203 = vmatprep.subr.bf16.mxu0 0
    %1204 = vmatpush1.bf16.msra.mxu0 %v1195
    %1205 = vmatprep.subr.bf16.mxu0 0
    %1206 = vmatpush1.bf16.msra.mxu0 %v1196
    %1207 = vmatprep.subr.bf16.mxu0 0
    %1208 = vmatpush1.bf16.msra.mxu0 %v1197
    %1209 = vmatprep.subr.bf16.mxu0 0
    %1210 = vmatpush1.bf16.msra.mxu0 %v1198
    %1211 = vmatprep.subr.bf16.mxu0 0
    %1212 = vmatpush1.bf16.msra.mxu0 %v1199
    %1213 = vmatprep.subr.bf16.mxu0 0
    %1214 = vmatpush1.bf16.msra.mxu0 %v1200
    %1215 = vmatprep.subr.bf16.mxu0 0
    %1216 = vmatpush1.bf16.msra.mxu0 %v1201
    %1217 = vmatprep.subr.bf16.mxu0 0
    %1218 = vmatpush1.bf16.msra.mxu0 %v1202
    %1219 = vmatprep.subr.bf16.mxu0 0
    %1220 = vmatpush1.bf16.msra.mxu0 0
    %1221 = vmatprep.subr.bf16.mxu0 0
    %1222 = vmatpush1.bf16.msra.mxu0 0
    %1223 = vmatprep.subr.bf16.mxu0 0
    %1224 = vmatpush1.bf16.msra.mxu0 0
    %1225 = vmatprep.subr.bf16.mxu0 0
    %1226 = vmatpush1.bf16.msra.mxu0 0
    %1227 = vmatprep.subr.bf16.mxu0 0
    %1228 = vmatpush1.bf16.msra.mxu0 0
    %1229 = vmatprep.subr.bf16.mxu0 0
    %1230 = vmatpush1.bf16.msra.mxu0 0
    %1231 = vmatprep.subr.bf16.mxu0 0
    %1232 = vmatpush1.bf16.msra.mxu0 0
    %1233 = vmatprep.subr.bf16.mxu0 0
    %1234 = vmatpush1.bf16.msra.mxu0 0
    %1235 = vmatprep.mubr.bf16.mxu0 0
    %1236 = vmatmul.mubr.bf16.gmra.mrb[0].mxu0 %v1193
    %v1237 = vpop.f32.mrb[0].mxu0
    %v1238 = vadd.f32 0.0, %v1237
    %v1239 = vpop.f32.mrb[0].mxu0
    %v1240 = vpop.f32.mrb[0].mxu0
    %v1241 = vadd.f32 0.0, %v1240
    %v1242 = vpop.f32.mrb[0].mxu0
    %1243 = vmatprep.mubr.bf16.mxu0 0
    %1244 = vmatmul.mubr.bf16.gmra.mrb[0].mxu0 %v1194
    %v1245 = vpop.f32.mrb[0].mxu0
    %v1246 = vadd.f32 0.0, %v1245
    %v1247 = vpop.f32.mrb[0].mxu0
    %v1248 = vpop.f32.mrb[0].mxu0
    %v1249 = vpop.f32.mrb[0].mxu0
    %1250 = vdwg.mxu0
    %v1251 = vpack.c.bf16 %v939, %v936
    %v1252 = vpack.c.bf16 %v1238, %v944
    %v1253 = vpack.c.bf16 %v1246, %v1241
    %v1254 = vld [vmem:[%s5 + $0x3] sm:$0x1]
    %v1256 = vlaneseq
    %v1257 = vshrl.u32 %v1256, 7
    %v1258 = vsub.s32 0, %v1257
    %v1259 = vrot.slane %v1254, %v1258
    %1262 = vrot.lane.b32.xlu0 %v149, 32
    %v1263 = vpop.permute.xlu0 %1262
    %1264 = vrot.lane.b32.xlu0 %v152, 32
    %v1265 = vpop.permute.xlu0 %1264
    %1268 = vrot.lane.b32.xlu0 %v1259, 96
    %v1269 = vpop.permute.xlu0 %1268
    %v1272 = vsel %vm170, %v1251, 0
    %v1275 = vsel %vm170, %v1252, 0
    %v1278 = vsel %vm170, %v1253, 0
    %1280 = vmatprep.subr.bf16.mxu0 0
    %1281 = vmatpush1.bf16.msra.mxu0 %v1263
    %1282 = vmatprep.subr.bf16.mxu0 0
    %1283 = vmatpush1.bf16.msra.mxu0 %v1265
    %1284 = vmatprep.subr.bf16.mxu0 0
    %1285 = vmatpush1.bf16.msra.mxu0 0
    %1286 = vmatprep.subr.bf16.mxu0 0
    %1287 = vmatpush1.bf16.msra.mxu0 0
    %1288 = vmatprep.subr.bf16.mxu0 0
    %1289 = vmatpush1.bf16.msra.mxu0 0
    %1290 = vmatprep.subr.bf16.mxu0 0
    %1291 = vmatpush1.bf16.msra.mxu0 0
    %1292 = vmatprep.subr.bf16.mxu0 0
    %1293 = vmatpush1.bf16.msra.mxu0 0
    %1294 = vmatprep.subr.bf16.mxu0 0
    %1295 = vmatpush1.bf16.msra.mxu0 0
    %1296 = vmatprep.subr.bf16.mxu0 0
    %1297 = vmatpush1.bf16.msra.mxu0 0
    %1298 = vmatprep.subr.bf16.mxu0 0
    %1299 = vmatpush1.bf16.msra.mxu0 0
    %1300 = vmatprep.subr.bf16.mxu0 0
    %1301 = vmatpush1.bf16.msra.mxu0 0
    %1302 = vmatprep.subr.bf16.mxu0 0
    %1303 = vmatpush1.bf16.msra.mxu0 0
    %1304 = vmatprep.subr.bf16.mxu0 0
    %1305 = vmatpush1.bf16.msra.mxu0 0
    %1306 = vmatprep.subr.bf16.mxu0 0
    %1307 = vmatpush1.bf16.msra.mxu0 0
    %1308 = vmatprep.subr.bf16.mxu0 0
    %1309 = vmatpush1.bf16.msra.mxu0 0
    %1310 = vmatprep.subr.bf16.mxu0 0
    %1311 = vmatpush1.bf16.msra.mxu0 0
    %1312 = vmatprep.mubr.bf16.mxu0 0
    %1313 = vmatmul.mubr.bf16.gmra.mrb[0].mxu0 %v1272
    %v1314 = vpop.f32.mrb[0].mxu0
    %v1315 = vadd.f32 %v1269, %v1314
    %v1316 = vpop.f32.mrb[0].mxu0
    %v1317 = vpop.f32.mrb[0].mxu0
    %v1318 = vadd.f32 %v1269, %v1317
    %v1319 = vpop.f32.mrb[0].mxu0
    %1320 = vmatprep.mubr.bf16.mxu0 0
    %1321 = vmatmul.mubr.bf16.gmra.mrb[0].mxu0 %v1275
    %v1322 = vpop.f32.mrb[0].mxu0
    %v1323 = vadd.f32 %v1269, %v1322
    %v1324 = vpop.f32.mrb[0].mxu0
    %v1325 = vpop.f32.mrb[0].mxu0
    %v1326 = vadd.f32 %v1269, %v1325
    %v1327 = vpop.f32.mrb[0].mxu0
    %1328 = vmatprep.mubr.bf16.mxu0 0
    %1329 = vmatmul.mubr.bf16.gmra.mrb[0].mxu0 %v1278
    %v1330 = vpop.f32.mrb[0].mxu0
    %v1331 = vadd.f32 %v1269, %v1330
    %v1332 = vpop.f32.mrb[0].mxu0
    %v1333 = vpop.f32.mrb[0].mxu0
    %v1334 = vadd.f32 %v1269, %v1333
    %v1335 = vpop.f32.mrb[0].mxu0
    %1336 = vdwg.mxu0
    %v1337 = vadd.f32 %v94, %v1315
    %v1338 = vadd.f32 %v97, %v1318
    %v1339 = vadd.f32 %v102, %v1323
    %v1340 = vadd.f32 %v105, %v1326
    %v1341 = vadd.f32 %v110, %v1331
    %v1342 = vadd.f32 %v113, %v1334
    %v1343 = vsel %vm170, %v1337, 0.0
    %1344 = vadd.xlane.f32.xlu0 %v1343
    %v1345 = vpop.xlane.xlu0 %1344
    %v1346 = vsel %vm170, %v1338, 0.0
    %1347 = vadd.xlane.f32.xlu0 %v1346
    %v1348 = vpop.xlane.xlu0 %1347
    %v1349 = vsel %vm170, %v1339, 0.0
    %1350 = vadd.xlane.f32.xlu0 %v1349
    %v1351 = vpop.xlane.xlu0 %1350
    %v1352 = vsel %vm170, %v1340, 0.0
    %1353 = vadd.xlane.f32.xlu0 %v1352
    %v1354 = vpop.xlane.xlu0 %1353
    %v1355 = vsel %vm170, %v1341, 0.0
    %1356 = vadd.xlane.f32.xlu0 %v1355
    %v1357 = vpop.xlane.xlu0 %1356
    %v1358 = vsel %vm170, %v1342, 0.0
    %1359 = vadd.xlane.f32.xlu0 %v1358
    %v1360 = vpop.xlane.xlu0 %1359
    %v1361 = vrcp.pop 32.0
    %v1362 = vmul.f32 %v1345, %v1361
    %v1363 = vmul.f32 %v1348, %v1361
    %v1364 = vmul.f32 %v1351, %v1361
    %v1365 = vmul.f32 %v1354, %v1361
    %v1366 = vmul.f32 %v1357, %v1361
    %v1367 = vmul.f32 %v1360, %v1361
    %v1368 = vsub.f32 %v1337, %v1362
    %v1369 = vsub.f32 %v1338, %v1363
    %v1370 = vsub.f32 %v1339, %v1364
    %v1371 = vsub.f32 %v1340, %v1365
    %v1372 = vsub.f32 %v1341, %v1366
    %v1373 = vsub.f32 %v1342, %v1367
    %v1374 = vmul.f32 %v1368, %v1368
    %v1375 = vmul.f32 %v1369, %v1369
    %v1376 = vmul.f32 %v1370, %v1370
    %v1377 = vmul.f32 %v1371, %v1371
    %v1378 = vmul.f32 %v1372, %v1372
    %v1379 = vmul.f32 %v1373, %v1373
    %v1380 = vsel %vm170, %v1374, 0.0
    %1381 = vadd.xlane.f32.xlu0 %v1380
    %v1382 = vpop.xlane.xlu0 %1381
    %v1383 = vsel %vm170, %v1375, 0.0
    %1384 = vadd.xlane.f32.xlu0 %v1383
    %v1385 = vpop.xlane.xlu0 %1384
    %v1386 = vsel %vm170, %v1376, 0.0
    %1387 = vadd.xlane.f32.xlu0 %v1386
    %v1388 = vpop.xlane.xlu0 %1387
    %v1389 = vsel %vm170, %v1377, 0.0
    %1390 = vadd.xlane.f32.xlu0 %v1389
    %v1391 = vpop.xlane.xlu0 %1390
    %v1392 = vsel %vm170, %v1378, 0.0
    %1393 = vadd.xlane.f32.xlu0 %v1392
    %v1394 = vpop.xlane.xlu0 %1393
    %v1395 = vsel %vm170, %v1379, 0.0
    %1396 = vadd.xlane.f32.xlu0 %v1395
    %v1397 = vpop.xlane.xlu0 %1396
    %v1398 = vmul.f32 %v1382, %v1361
    %v1399 = vmul.f32 %v1385, %v1361
    %v1400 = vmul.f32 %v1388, %v1361
    %v1401 = vmul.f32 %v1391, %v1361
    %v1402 = vmul.f32 %v1394, %v1361
    %v1403 = vmul.f32 %v1397, %v1361
    %v1404 = vadd.f32 %v1398, 1e-05
    %v1405 = vadd.f32 %v1399, 1e-05
    %v1406 = vadd.f32 %v1400, 1e-05
    %v1407 = vadd.f32 %v1401, 1e-05
    %v1408 = vadd.f32 %v1402, 1e-05
    %v1409 = vadd.f32 %v1403, 1e-05
    %v1410 = vrsqrt.pop %v1404
    %v1411 = vrsqrt.pop %v1405
    %v1412 = vrsqrt.pop %v1406
    %v1413 = vrsqrt.pop %v1407
    %v1414 = vrsqrt.pop %v1408
    %v1415 = vrsqrt.pop %v1409
    %v1416 = vmul.f32 %v1368, %v1410
    %v1417 = vmul.f32 %v1369, %v1411
    %v1418 = vmul.f32 %v1370, %v1412
    %v1419 = vmul.f32 %v1371, %v1413
    %v1420 = vmul.f32 %v1372, %v1414
    %v1421 = vmul.f32 %v1373, %v1415
    %1422 = vrot.lane.b32.xlu0 %v1259, 64
    %v1423 = vpop.permute.xlu0 %1422
    %v1425 = vmul.f32 %v1416, %v1423
    %v1426 = vmul.f32 %v1417, %v1423
    %v1427 = vmul.f32 %v1418, %v1423
    %v1428 = vmul.f32 %v1419, %v1423
    %v1429 = vmul.f32 %v1420, %v1423
    %v1430 = vmul.f32 %v1421, %v1423
    %1431 = vrot.lane.b32.xlu0 %v1259, 32
    %v1432 = vpop.permute.xlu0 %1431
    %v1434 = vadd.f32 %v1425, %v1432
    %v1435 = vadd.f32 %v1426, %v1432
    %v1436 = vadd.f32 %v1427, %v1432
    %v1437 = vadd.f32 %v1428, %v1432
    %v1438 = vadd.f32 %v1429, %v1432
    %v1439 = vadd.f32 %v1430, %v1432
    %v1440 = vpack.c.bf16 %v1435, %v1434
    %v1441 = vpack.c.bf16 %v1437, %v1436
    %v1442 = vpack.c.bf16 %v1439, %v1438
    %v1443 = vld [vmem:[%s5 + $0x4] sm:$0x1]
    %v1445 = vlaneseq
    %v1446 = vshrl.u32 %v1445, 7
    %v1447 = vsub.s32 0, %v1446
    %v1448 = vrot.slane %v1443, %v1447
    %1450 = vrot.lane.b32.xlu0 %v149, 96
    %v1451 = vpop.permute.xlu0 %1450
    %1452 = vrot.lane.b32.xlu0 %v152, 96
    %v1453 = vpop.permute.xlu0 %1452
    %v1457 = vsel %vm170, %v1440, 0
    %v1460 = vsel %vm170, %v1441, 0
    %v1463 = vsel %vm170, %v1442, 0
    %1465 = vmatprep.subr.bf16.mxu0 0
    %1466 = vmatpush1.bf16.msra.mxu0 %v1451
    %1467 = vmatprep.subr.bf16.mxu0 0
    %1468 = vmatpush1.bf16.msra.mxu0 %v1453
    %1469 = vmatprep.subr.bf16.mxu0 0
    %1470 = vmatpush1.bf16.msra.mxu0 0
    %1471 = vmatprep.subr.bf16.mxu0 0
    %1472 = vmatpush1.bf16.msra.mxu0 0
    %1473 = vmatprep.subr.bf16.mxu0 0
    %1474 = vmatpush1.bf16.msra.mxu0 0
    %1475 = vmatprep.subr.bf16.mxu0 0
    %1476 = vmatpush1.bf16.msra.mxu0 0
    %1477 = vmatprep.subr.bf16.mxu0 0
    %1478 = vmatpush1.bf16.msra.mxu0 0
    %1479 = vmatprep.subr.bf16.mxu0 0
    %1480 = vmatpush1.bf16.msra.mxu0 0
    %1481 = vmatprep.subr.bf16.mxu0 0
    %1482 = vmatpush1.bf16.msra.mxu0 0
    %1483 = vmatprep.subr.bf16.mxu0 0
    %1484 = vmatpush1.bf16.msra.mxu0 0
    %1485 = vmatprep.subr.bf16.mxu0 0
    %1486 = vmatpush1.bf16.msra.mxu0 0
    %1487 = vmatprep.subr.bf16.mxu0 0
    %1488 = vmatpush1.bf16.msra.mxu0 0
    %1489 = vmatprep.subr.bf16.mxu0 0
    %1490 = vmatpush1.bf16.msra.mxu0 0
    %1491 = vmatprep.subr.bf16.mxu0 0
    %1492 = vmatpush1.bf16.msra.mxu0 0
    %1493 = vmatprep.subr.bf16.mxu0 0
    %1494 = vmatpush1.bf16.msra.mxu0 0
    %1495 = vmatprep.subr.bf16.mxu0 0
    %1496 = vmatpush1.bf16.msra.mxu0 0
    %1497 = vmatprep.mubr.bf16.mxu0 0
    %1498 = vmatmul.mubr.bf16.gmra.mrb[0].mxu0 %v1457
    %v1499 = vpop.f32.mrb[0].mxu0
    %v1500 = vadd.f32 %v1448, %v1499
    %v1501 = vpop.f32.mrb[0].mxu0
    %v1502 = vpop.f32.mrb[0].mxu0
    %v1503 = vadd.f32 %v1448, %v1502
    %v1504 = vpop.f32.mrb[0].mxu0
    %1505 = vmatprep.mubr.bf16.mxu0 0
    %1506 = vmatmul.mubr.bf16.gmra.mrb[0].mxu0 %v1460
    %v1507 = vpop.f32.mrb[0].mxu0
    %v1508 = vadd.f32 %v1448, %v1507
    %v1509 = vpop.f32.mrb[0].mxu0
    %v1510 = vpop.f32.mrb[0].mxu0
    %v1511 = vadd.f32 %v1448, %v1510
    %v1512 = vpop.f32.mrb[0].mxu0
    %1513 = vmatprep.mubr.bf16.mxu0 0
    %1514 = vmatmul.mubr.bf16.gmra.mrb[0].mxu0 %v1463
    %v1515 = vpop.f32.mrb[0].mxu0
    %v1516 = vadd.f32 %v1448, %v1515
    %v1517 = vpop.f32.mrb[0].mxu0
    %v1518 = vpop.f32.mrb[0].mxu0
    %v1519 = vadd.f32 %v1448, %v1518
    %v1520 = vpop.f32.mrb[0].mxu0
    %1521 = vdwg.mxu0
    %v1522 = vmul.f32 %v1500, 0.5
    %v1523 = vmul.f32 %v1503, 0.5
    %v1524 = vmul.f32 %v1508, 0.5
    %v1525 = vmul.f32 %v1511, 0.5
    %v1526 = vmul.f32 %v1516, 0.5
    %v1527 = vmul.f32 %v1519, 0.5
    %v1528 = vmul.f32 %v1500, 0.70710677
    %v1529 = vmul.f32 %v1503, 0.70710677
    %v1530 = vmul.f32 %v1508, 0.70710677
    %v1531 = vmul.f32 %v1511, 0.70710677
    %v1532 = vmul.f32 %v1516, 0.70710677
    %v1533 = vmul.f32 %v1519, 0.70710677
    %v1534 = verf.f32.pop %v1528
    %v1535 = verf.f32.pop %v1529
    %v1536 = verf.f32.pop %v1530
    %v1537 = verf.f32.pop %v1531
    %v1538 = verf.f32.pop %v1532
    %v1539 = verf.f32.pop %v1533
    %v1540 = vadd.f32 %v1534, 1.0
    %v1541 = vadd.f32 %v1535, 1.0
    %v1542 = vadd.f32 %v1536, 1.0
    %v1543 = vadd.f32 %v1537, 1.0
    %v1544 = vadd.f32 %v1538, 1.0
    %v1545 = vadd.f32 %v1539, 1.0
    %v1546 = vmul.f32 %v1522, %v1540
    %v1547 = vmul.f32 %v1523, %v1541
    %v1548 = vmul.f32 %v1524, %v1542
    %v1549 = vmul.f32 %v1525, %v1543
    %v1550 = vmul.f32 %v1526, %v1544
    %v1551 = vmul.f32 %v1527, %v1545
    %v1552 = vld [vmem:[%s4 + $0x8] sm:$0xff]
    %v1553 = vld [vmem:[%s4 + $0x18] sm:$0xff]
    %v1554 = vld [vmem:[%s4 + $0x28] sm:$0xff]
    %v1555 = vld [vmem:[%s4 + $0x38] sm:$0xff]
    %v1556 = vld [vmem:[%s4 + $0x48] sm:$0xff]
    %v1557 = vld [vmem:[%s4 + $0x58] sm:$0xff]
    %v1558 = vld [vmem:[%s4 + $0x68] sm:$0xff]
    %v1559 = vld [vmem:[%s4 + $0x78] sm:$0xff]
    %v1560 = vpack.c.bf16 %v1547, %v1546
    %v1561 = vpack.c.bf16 %v1549, %v1548
    %v1562 = vpack.c.bf16 %v1551, %v1550
    %v1563 = vpack.c.bf16 %v1553, %v1552
    %v1564 = vpack.c.bf16 %v1555, %v1554
    %v1565 = vpack.c.bf16 %v1557, %v1556
    %v1566 = vpack.c.bf16 %v1559, %v1558
    %1567 = vrot.lane.b32.xlu0 %v1448, 64
    %v1568 = vpop.permute.xlu0 %1567
    %vm1570 = vcmask 523264
    %v1572 = vsel %vm1570, %v1560, 0
    %v1575 = vsel %vm1570, %v1561, 0
    %v1578 = vsel %vm1570, %v1562, 0
    %1580 = vmatprep.subr.bf16.mxu0 0
    %1581 = vmatpush1.bf16.msra.mxu0 %v1563
    %1582 = vmatprep.subr.bf16.mxu0 0
    %1583 = vmatpush1.bf16.msra.mxu0 %v1564
    %1584 = vmatprep.subr.bf16.mxu0 0
    %1585 = vmatpush1.bf16.msra.mxu0 %v1565
    %1586 = vmatprep.subr.bf16.mxu0 0
    %1587 = vmatpush1.bf16.msra.mxu0 %v1566
    %1588 = vmatprep.subr.bf16.mxu0 0
    %1589 = vmatpush1.bf16.msra.mxu0 0
    %1590 = vmatprep.subr.bf16.mxu0 0
    %1591 = vmatpush1.bf16.msra.mxu0 0
    %1592 = vmatprep.subr.bf16.mxu0 0
    %1593 = vmatpush1.bf16.msra.mxu0 0
    %1594 = vmatprep.subr.bf16.mxu0 0
    %1595 = vmatpush1.bf16.msra.mxu0 0
    %1596 = vmatprep.subr.bf16.mxu0 0
    %1597 = vmatpush1.bf16.msra.mxu0 0
    %1598 = vmatprep.subr.bf16.mxu0 0
    %1599 = vmatpush1.bf16.msra.mxu0 0
    %1600 = vmatprep.subr.bf16.mxu0 0
    %1601 = vmatpush1.bf16.msra.mxu0 0
    %1602 = vmatprep.subr.bf16.mxu0 0
    %1603 = vmatpush1.bf16.msra.mxu0 0
    %1604 = vmatprep.subr.bf16.mxu0 0
    %1605 = vmatpush1.bf16.msra.mxu0 0
    %1606 = vmatprep.subr.bf16.mxu0 0
    %1607 = vmatpush1.bf16.msra.mxu0 0
    %1608 = vmatprep.subr.bf16.mxu0 0
    %1609 = vmatpush1.bf16.msra.mxu0 0
    %1610 = vmatprep.subr.bf16.mxu0 0
    %1611 = vmatpush1.bf16.msra.mxu0 0
    %1612 = vmatprep.mubr.bf16.mxu0 0
    %1613 = vmatmul.mubr.bf16.gmra.mrb[0].mxu0 %v1572
    %v1614 = vpop.f32.mrb[0].mxu0
    %v1615 = vadd.f32 %v1568, %v1614
    %v1616 = vpop.f32.mrb[0].mxu0
    %v1617 = vpop.f32.mrb[0].mxu0
    %v1618 = vadd.f32 %v1568, %v1617
    %v1619 = vpop.f32.mrb[0].mxu0
    %1620 = vmatprep.mubr.bf16.mxu0 0
    %1621 = vmatmul.mubr.bf16.gmra.mrb[0].mxu0 %v1575
    %v1622 = vpop.f32.mrb[0].mxu0
    %v1623 = vadd.f32 %v1568, %v1622
    %v1624 = vpop.f32.mrb[0].mxu0
    %v1625 = vpop.f32.mrb[0].mxu0
    %v1626 = vadd.f32 %v1568, %v1625
    %v1627 = vpop.f32.mrb[0].mxu0
    %1628 = vmatprep.mubr.bf16.mxu0 0
    %1629 = vmatmul.mubr.bf16.gmra.mrb[0].mxu0 %v1578
    %v1630 = vpop.f32.mrb[0].mxu0
    %v1631 = vadd.f32 %v1568, %v1630
    %v1632 = vpop.f32.mrb[0].mxu0
    %v1633 = vpop.f32.mrb[0].mxu0
    %v1634 = vadd.f32 %v1568, %v1633
    %v1635 = vpop.f32.mrb[0].mxu0
    %1636 = vdwg.mxu0
    %v1637 = vadd.f32 %v1434, %v1615
    %v1638 = vadd.f32 %v1435, %v1618
    %v1639 = vadd.f32 %v1436, %v1623
    %v1640 = vadd.f32 %v1437, %v1626
    %v1641 = vadd.f32 %v1438, %v1631
    %v1642 = vadd.f32 %v1439, %v1634
    %v1643 = vld [vmem:[%s5 + $0x5] sm:$0x1]
    %v1644 = vsel %vm170, %v1637, 0.0
    %1645 = vadd.xlane.f32.xlu0 %v1644
    %v1646 = vpop.xlane.xlu0 %1645
    %v1647 = vsel %vm170, %v1638, 0.0
    %1648 = vadd.xlane.f32.xlu0 %v1647
    %v1649 = vpop.xlane.xlu0 %1648
    %v1650 = vsel %vm170, %v1639, 0.0
    %1651 = vadd.xlane.f32.xlu0 %v1650
    %v1652 = vpop.xlane.xlu0 %1651
    %v1653 = vsel %vm170, %v1640, 0.0
    %1654 = vadd.xlane.f32.xlu0 %v1653
    %v1655 = vpop.xlane.xlu0 %1654
    %v1656 = vsel %vm170, %v1641, 0.0
    %1657 = vadd.xlane.f32.xlu0 %v1656
    %v1658 = vpop.xlane.xlu0 %1657
    %v1659 = vsel %vm170, %v1642, 0.0
    %1660 = vadd.xlane.f32.xlu0 %v1659
    %v1661 = vpop.xlane.xlu0 %1660
    %v1662 = vmul.f32 %v1646, %v1361
    %v1663 = vmul.f32 %v1649, %v1361
    %v1664 = vmul.f32 %v1652, %v1361
    %v1665 = vmul.f32 %v1655, %v1361
    %v1666 = vmul.f32 %v1658, %v1361
    %v1667 = vmul.f32 %v1661, %v1361
    %v1668 = vsub.f32 %v1637, %v1662
    %v1669 = vsub.f32 %v1638, %v1663
    %v1670 = vsub.f32 %v1639, %v1664
    %v1671 = vsub.f32 %v1640, %v1665
    %v1672 = vsub.f32 %v1641, %v1666
    %v1673 = vsub.f32 %v1642, %v1667
    %v1674 = vmul.f32 %v1668, %v1668
    %v1675 = vmul.f32 %v1669, %v1669
    %v1676 = vmul.f32 %v1670, %v1670
    %v1677 = vmul.f32 %v1671, %v1671
    %v1678 = vmul.f32 %v1672, %v1672
    %v1679 = vmul.f32 %v1673, %v1673
    %v1680 = vsel %vm170, %v1674, 0.0
    %1681 = vadd.xlane.f32.xlu0 %v1680
    %v1682 = vpop.xlane.xlu0 %1681
    %v1683 = vsel %vm170, %v1675, 0.0
    %1684 = vadd.xlane.f32.xlu0 %v1683
    %v1685 = vpop.xlane.xlu0 %1684
    %v1686 = vsel %vm170, %v1676, 0.0
    %1687 = vadd.xlane.f32.xlu0 %v1686
    %v1688 = vpop.xlane.xlu0 %1687
    %v1689 = vsel %vm170, %v1677, 0.0
    %1690 = vadd.xlane.f32.xlu0 %v1689
    %v1691 = vpop.xlane.xlu0 %1690
    %v1692 = vsel %vm170, %v1678, 0.0
    %1693 = vadd.xlane.f32.xlu0 %v1692
    %v1694 = vpop.xlane.xlu0 %1693
    %v1695 = vsel %vm170, %v1679, 0.0
    %1696 = vadd.xlane.f32.xlu0 %v1695
    %v1697 = vpop.xlane.xlu0 %1696
    %v1698 = vmul.f32 %v1682, %v1361
    %v1699 = vmul.f32 %v1685, %v1361
    %v1700 = vmul.f32 %v1688, %v1361
    %v1701 = vmul.f32 %v1691, %v1361
    %v1702 = vmul.f32 %v1694, %v1361
    %v1703 = vmul.f32 %v1697, %v1361
    %v1704 = vadd.f32 %v1698, 1e-05
    %v1705 = vadd.f32 %v1699, 1e-05
    %v1706 = vadd.f32 %v1700, 1e-05
    %v1707 = vadd.f32 %v1701, 1e-05
    %v1708 = vadd.f32 %v1702, 1e-05
    %v1709 = vadd.f32 %v1703, 1e-05
    %v1710 = vrsqrt.pop %v1704
    %v1711 = vrsqrt.pop %v1705
    %v1712 = vrsqrt.pop %v1706
    %v1713 = vrsqrt.pop %v1707
    %v1714 = vrsqrt.pop %v1708
    %v1715 = vrsqrt.pop %v1709
    %v1716 = vmul.f32 %v1668, %v1710
    %v1717 = vmul.f32 %v1669, %v1711
    %v1718 = vmul.f32 %v1670, %v1712
    %v1719 = vmul.f32 %v1671, %v1713
    %v1720 = vmul.f32 %v1672, %v1714
    %v1721 = vmul.f32 %v1673, %v1715
    %1722 = vrot.lane.b32.xlu0 %v1448, 32
    %v1723 = vpop.permute.xlu0 %1722
    %v1725 = vmul.f32 %v1716, %v1723
    %v1726 = vmul.f32 %v1717, %v1723
    %v1727 = vmul.f32 %v1718, %v1723
    %v1728 = vmul.f32 %v1719, %v1723
    %v1729 = vmul.f32 %v1720, %v1723
    %v1730 = vmul.f32 %v1721, %v1723
    %v1732 = vlaneseq
    %v1733 = vshrl.u32 %v1732, 7
    %v1734 = vsub.s32 0, %v1733
    %v1735 = vrot.slane %v1643, %v1734
    %v1737 = vadd.f32 %v1725, %v1735
    %v1738 = vadd.f32 %v1726, %v1735
    %v1739 = vadd.f32 %v1727, %v1735
    %v1740 = vadd.f32 %v1728, %v1735
    %v1741 = vadd.f32 %v1729, %v1735
    %v1742 = vadd.f32 %v1730, %v1735
    %s1743 = scalar_lea.vmem %s3, 96
    %v1744 = vld [vmem:[%s1743] sm:$0xff]
    %v1745 = vld [vmem:[%s1743 + $0x8] sm:$0xff]
    %v1746 = vld [vmem:[%s1743 + $0x10] sm:$0xff]
    %v1747 = vld [vmem:[%s1743 + $0x18] sm:$0xff]
    %v1748 = vld [vmem:[%s1743 + $0x20] sm:$0xff]
    %v1749 = vld [vmem:[%s1743 + $0x28] sm:$0xff]
    %v1750 = vld [vmem:[%s1743 + $0x30] sm:$0xff]
    %v1751 = vld [vmem:[%s1743 + $0x38] sm:$0xff]
    %v1752 = vld [vmem:[%s1743 + $0x40] sm:$0xff]
    %v1753 = vld [vmem:[%s1743 + $0x48] sm:$0xff]
    %v1754 = vld [vmem:[%s1743 + $0x50] sm:$0xff]
    %v1755 = vld [vmem:[%s1743 + $0x58] sm:$0xff]
    %v1756 = vpack.c.bf16 %v1738, %v1737
    %v1757 = vpack.c.bf16 %v1740, %v1739
    %v1758 = vpack.c.bf16 %v1742, %v1741
    %v1759 = vpack.c.bf16 %v1747, %v1744
    %v1760 = vpack.c.bf16 %v1748, %v1745
    %v1761 = vpack.c.bf16 %v1749, %v1746
    %v1762 = vpack.c.bf16 %v1753, %v1750
    %v1763 = vpack.c.bf16 %v1754, %v1751
    %v1764 = vpack.c.bf16 %v1755, %v1752
    %s1765 = scalar_lea.vmem %s5, 6
    %v1766 = vld [vmem:[%s1765] sm:$0x7]
    %v1768 = vlaneseq
    %v1769 = vshrl.u32 %v1768, 7
    %v1770 = vsub.s32 0, %v1769
    %v1771 = vrot.slane %v1766, %v1770
    %v1772 = vlaneseq
    %v1773 = vshrl.u32 %v1772, 7
    %v1774 = vsub.s32 1, %v1773
    %v1775 = vrot.slane %v1766, %v1774
    %v1776 = vlaneseq
    %v1777 = vshrl.u32 %v1776, 7
    %v1778 = vsub.s32 2, %v1777
    %v1779 = vrot.slane %v1766, %v1778
    %v1784 = vsel %vm170, %v1756, 0
    %v1787 = vsel %vm170, %v1757, 0
    %v1790 = vsel %vm170, %v1758, 0
    %1792 = vmatprep.subr.bf16.mxu0 %v1760
    %1793 = vmatpush1.bf16.msra.mxu0 %v1759
    %1794 = vmatprep.subr.bf16.mxu0 %v1763
    %1795 = vmatpush1.bf16.msra.mxu0 %v1762
    %1796 = vmatprep.subr.bf16.mxu0 0
    %1797 = vmatpush1.bf16.msra.mxu0 0
    %1798 = vmatprep.subr.bf16.mxu0 0
    %1799 = vmatpush1.bf16.msra.mxu0 0
    %1800 = vmatprep.subr.bf16.mxu0 0
    %1801 = vmatpush1.bf16.msra.mxu0 0
    %1802 = vmatprep.subr.bf16.mxu0 0
    %1803 = vmatpush1.bf16.msra.mxu0 0
    %1804 = vmatprep.subr.bf16.mxu0 0
    %1805 = vmatpush1.bf16.msra.mxu0 0
    %1806 = vmatprep.subr.bf16.mxu0 0
    %1807 = vmatpush1.bf16.msra.mxu0 0
    %1808 = vmatprep.subr.bf16.mxu0 0
    %1809 = vmatpush1.bf16.msra.mxu0 0
    %1810 = vmatprep.subr.bf16.mxu0 0
    %1811 = vmatpush1.bf16.msra.mxu0 0
    %1812 = vmatprep.subr.bf16.mxu0 0
    %1813 = vmatpush1.bf16.msra.mxu0 0
    %1814 = vmatprep.subr.bf16.mxu0 0
    %1815 = vmatpush1.bf16.msra.mxu0 0
    %1816 = vmatprep.subr.bf16.mxu0 0
    %1817 = vmatpush1.bf16.msra.mxu0 0
    %1818 = vmatprep.subr.bf16.mxu0 0
    %1819 = vmatpush1.bf16.msra.mxu0 0
    %1820 = vmatprep.subr.bf16.mxu0 0
    %1821 = vmatpush1.bf16.msra.mxu0 0
    %1822 = vmatprep.subr.bf16.mxu0 0
    %1823 = vmatpush1.bf16.msra.mxu0 0
    %1824 = vmatprep.mubr.bf16.mxu0 0
    %1825 = vmatmul.mubr.bf16.gmra.mrb[0].mxu0 %v1784
    %v1826 = vpop.f32.mrb[0].mxu0
    %v1827 = vadd.f32 %v1771, %v1826
    %v1828 = vpop.f32.mrb[0].mxu0
    %v1829 = vadd.f32 %v1775, %v1828
    %v1830 = vpop.f32.mrb[0].mxu0
    %v1831 = vadd.f32 %v1771, %v1830
    %v1832 = vpop.f32.mrb[0].mxu0
    %v1833 = vadd.f32 %v1775, %v1832
    %1834 = vmatprep.mubr.bf16.mxu0 0
    %1835 = vmatmul.mubr.bf16.gmra.mrb[0].mxu0 %v1787
    %v1836 = vpop.f32.mrb[0].mxu0
    %v1837 = vadd.f32 %v1771, %v1836
    %v1838 = vpop.f32.mrb[0].mxu0
    %v1839 = vadd.f32 %v1775, %v1838
    %v1840 = vpop.f32.mrb[0].mxu0
    %v1841 = vadd.f32 %v1771, %v1840
    %v1842 = vpop.f32.mrb[0].mxu0
    %v1843 = vadd.f32 %v1775, %v1842
    %1844 = vmatprep.mubr.bf16.mxu0 0
    %1845 = vmatmul.mubr.bf16.gmra.mrb[0].mxu0 %v1790
    %v1846 = vpop.f32.mrb[0].mxu0
    %v1847 = vadd.f32 %v1771, %v1846
    %v1848 = vpop.f32.mrb[0].mxu0
    %v1849 = vadd.f32 %v1775, %v1848
    %v1850 = vpop.f32.mrb[0].mxu0
    %v1851 = vadd.f32 %v1771, %v1850
    %v1852 = vpop.f32.mrb[0].mxu0
    %v1853 = vadd.f32 %v1775, %v1852
    %1854 = vdwg.mxu0
    %1855 = vmatprep.subr.bf16.mxu0 0
    %1856 = vmatpush1.bf16.msra.mxu0 %v1761
    %1857 = vmatprep.subr.bf16.mxu0 0
    %1858 = vmatpush1.bf16.msra.mxu0 %v1764
    %1859 = vmatprep.subr.bf16.mxu0 0
    %1860 = vmatpush1.bf16.msra.mxu0 0
    %1861 = vmatprep.subr.bf16.mxu0 0
    %1862 = vmatpush1.bf16.msra.mxu0 0
    %1863 = vmatprep.subr.bf16.mxu0 0
    %1864 = vmatpush1.bf16.msra.mxu0 0
    %1865 = vmatprep.subr.bf16.mxu0 0
    %1866 = vmatpush1.bf16.msra.mxu0 0
    %1867 = vmatprep.subr.bf16.mxu0 0
    %1868 = vmatpush1.bf16.msra.mxu0 0
    %1869 = vmatprep.subr.bf16.mxu0 0
    %1870 = vmatpush1.bf16.msra.mxu0 0
    %1871 = vmatprep.subr.bf16.mxu0 0
    %1872 = vmatpush1.bf16.msra.mxu0 0
    %1873 = vmatprep.subr.bf16.mxu0 0
    %1874 = vmatpush1.bf16.msra.mxu0 0
    %1875 = vmatprep.subr.bf16.mxu0 0
    %1876 = vmatpush1.bf16.msra.mxu0 0
    %1877 = vmatprep.subr.bf16.mxu0 0
    %1878 = vmatpush1.bf16.msra.mxu0 0
    %1879 = vmatprep.subr.bf16.mxu0 0
    %1880 = vmatpush1.bf16.msra.mxu0 0
    %1881 = vmatprep.subr.bf16.mxu0 0
    %1882 = vmatpush1.bf16.msra.mxu0 0
    %1883 = vmatprep.subr.bf16.mxu0 0
    %1884 = vmatpush1.bf16.msra.mxu0 0
    %1885 = vmatprep.subr.bf16.mxu0 0
    %1886 = vmatpush1.bf16.msra.mxu0 0
    %1887 = vmatprep.mubr.bf16.mxu0 0
    %1888 = vmatmul.mubr.bf16.gmra.mrb[0].mxu0 %v1784
    %v1889 = vpop.f32.mrb[0].mxu0
    %v1890 = vadd.f32 %v1779, %v1889
    %v1891 = vpop.f32.mrb[0].mxu0
    %v1892 = vpop.f32.mrb[0].mxu0
    %v1893 = vadd.f32 %v1779, %v1892
    %v1894 = vpop.f32.mrb[0].mxu0
    %1895 = vmatprep.mubr.bf16.mxu0 0
    %1896 = vmatmul.mubr.bf16.gmra.mrb[0].mxu0 %v1787
    %v1897 = vpop.f32.mrb[0].mxu0
    %v1898 = vadd.f32 %v1779, %v1897
    %v1899 = vpop.f32.mrb[0].mxu0
    %v1900 = vpop.f32.mrb[0].mxu0
    %v1901 = vadd.f32 %v1779, %v1900
    %v1902 = vpop.f32.mrb[0].mxu0
    %1903 = vmatprep.mubr.bf16.mxu0 0
    %1904 = vmatmul.mubr.bf16.gmra.mrb[0].mxu0 %v1790
    %v1905 = vpop.f32.mrb[0].mxu0
    %v1906 = vadd.f32 %v1779, %v1905
    %v1907 = vpop.f32.mrb[0].mxu0
    %v1908 = vpop.f32.mrb[0].mxu0
    %v1909 = vadd.f32 %v1779, %v1908
    %v1910 = vpop.f32.mrb[0].mxu0
    %1911 = vdwg.mxu0
    %v1912 = vmax.f32 %v1827, 0.0
    %v1913 = vmax.f32 %v1829, 0.0
    %v1914 = vmax.f32 %v1831, 0.0
    %v1915 = vmax.f32 %v1833, 0.0
    %v1916 = vmax.f32 %v1837, 0.0
    %v1917 = vmax.f32 %v1839, 0.0
    %v1918 = vmax.f32 %v1841, 0.0
    %v1919 = vmax.f32 %v1843, 0.0
    %v1920 = vmax.f32 %v1847, 0.0
    %v1921 = vmax.f32 %v1849, 0.0
    %v1922 = vmax.f32 %v1851, 0.0
    %v1923 = vmax.f32 %v1853, 0.0
    %s1924 = scalar_lea.vmem %s4, 256
    %v1925 = vld [vmem:[%s1924] sm:$0xff]
    %v1926 = vld [vmem:[%s1924 + $0x10] sm:$0xff]
    %v1927 = vld [vmem:[%s1924 + $0x20] sm:$0xff]
    %v1928 = vld [vmem:[%s1924 + $0x30] sm:$0xff]
    %v1929 = vld [vmem:[%s1924 + $0x40] sm:$0xff]
    %v1930 = vld [vmem:[%s1924 + $0x50] sm:$0xff]
    %v1931 = vld [vmem:[%s1924 + $0x60] sm:$0xff]
    %v1932 = vld [vmem:[%s1924 + $0x70] sm:$0xff]
    %v1933 = vld [vmem:[%s1924 + $0x80] sm:$0xff]
    %v1934 = vld [vmem:[%s1924 + $0x90] sm:$0xff]
    %v1935 = vld [vmem:[%s1924 + $0xa0] sm:$0xff]
    %v1936 = vld [vmem:[%s1924 + $0xb0] sm:$0xff]
    %v1937 = vld [vmem:[%s1924 + $0xc0] sm:$0xff]
    %v1938 = vld [vmem:[%s1924 + $0xd0] sm:$0xff]
    %v1939 = vld [vmem:[%s1924 + $0xe0] sm:$0xff]
    %v1940 = vld [vmem:[%s1924 + $0xf0] sm:$0xff]
    %v1941 = vld [vmem:[%s1765 + $0x2] sm:$0x3]
    %v1942 = vpack.c.bf16 %v1914, %v1912
    %v1943 = vpack.c.bf16 %v1918, %v1916
    %v1944 = vpack.c.bf16 %v1922, %v1920
    %v1945 = vpack.c.bf16 %v1926, %v1925
    %v1946 = vpack.c.bf16 %v1928, %v1927
    %v1947 = vpack.c.bf16 %v1930, %v1929
    %v1948 = vpack.c.bf16 %v1932, %v1931
    %v1949 = vpack.c.bf16 %v1934, %v1933
    %v1950 = vpack.c.bf16 %v1936, %v1935
    %v1951 = vpack.c.bf16 %v1938, %v1937
    %v1952 = vpack.c.bf16 %v1940, %v1939
    %v1954 = vlaneseq
    %v1955 = vshrl.u32 %v1954, 7
    %v1956 = vsub.s32 0, %v1955
    %v1957 = vrot.slane %v1941, %v1956
    %v1958 = vlaneseq
    %v1959 = vshrl.u32 %v1958, 7
    %v1960 = vsub.s32 1, %v1959
    %v1961 = vrot.slane %v1941, %v1960
    %1962 = vrot.lane.b32.xlu0 %v1957, 96
    %v1963 = vpop.permute.xlu0 %1962
    %1964 = vrot.lane.b32.xlu0 %v1961, 96
    %v1965 = vpop.permute.xlu0 %1964
    %v1966 = vsel %vm353, %v1963, %v1965
    %1968 = vmatprep.subr.bf16.mxu0 0
    %1969 = vmatpush1.bf16.msra.mxu0 %v1945
    %1970 = vmatprep.subr.bf16.mxu0 0
    %1971 = vmatpush1.bf16.msra.mxu0 %v1946
    %1972 = vmatprep.subr.bf16.mxu0 0
    %1973 = vmatpush1.bf16.msra.mxu0 %v1947
    %1974 = vmatprep.subr.bf16.mxu0 0
    %1975 = vmatpush1.bf16.msra.mxu0 %v1948
    %1976 = vmatprep.subr.bf16.mxu0 0
    %1977 = vmatpush1.bf16.msra.mxu0 %v1949
    %1978 = vmatprep.subr.bf16.mxu0 0
    %1979 = vmatpush1.bf16.msra.mxu0 %v1950
    %1980 = vmatprep.subr.bf16.mxu0 0
    %1981 = vmatpush1.bf16.msra.mxu0 %v1951
    %1982 = vmatprep.subr.bf16.mxu0 0
    %1983 = vmatpush1.bf16.msra.mxu0 %v1952
    %1984 = vmatprep.subr.bf16.mxu0 0
    %1985 = vmatpush1.bf16.msra.mxu0 0
    %1986 = vmatprep.subr.bf16.mxu0 0
    %1987 = vmatpush1.bf16.msra.mxu0 0
    %1988 = vmatprep.subr.bf16.mxu0 0
    %1989 = vmatpush1.bf16.msra.mxu0 0
    %1990 = vmatprep.subr.bf16.mxu0 0
    %1991 = vmatpush1.bf16.msra.mxu0 0
    %1992 = vmatprep.subr.bf16.mxu0 0
    %1993 = vmatpush1.bf16.msra.mxu0 0
    %1994 = vmatprep.subr.bf16.mxu0 0
    %1995 = vmatpush1.bf16.msra.mxu0 0
    %1996 = vmatprep.subr.bf16.mxu0 0
    %1997 = vmatpush1.bf16.msra.mxu0 0
    %1998 = vmatprep.subr.bf16.mxu0 0
    %1999 = vmatpush1.bf16.msra.mxu0 0
    %2000 = vmatprep.mubr.bf16.mxu0 0
    %2001 = vmatmul.mubr.bf16.gmra.mrb[0].mxu0 %v1942
    %v2002 = vpop.f32.mrb[0].mxu0
    %v2003 = vadd.f32 %v1966, %v2002
    %v2004 = vpop.f32.mrb[0].mxu0
    %v2005 = vpop.f32.mrb[0].mxu0
    %v2006 = vadd.f32 %v1966, %v2005
    %v2007 = vpop.f32.mrb[0].mxu0
    %2008 = vmatprep.mubr.bf16.mxu0 0
    %2009 = vmatmul.mubr.bf16.gmra.mrb[0].mxu0 %v1943
    %v2010 = vpop.f32.mrb[0].mxu0
    %v2011 = vadd.f32 %v1966, %v2010
    %v2012 = vpop.f32.mrb[0].mxu0
    %v2013 = vpop.f32.mrb[0].mxu0
    %v2014 = vadd.f32 %v1966, %v2013
    %v2015 = vpop.f32.mrb[0].mxu0
    %2016 = vmatprep.mubr.bf16.mxu0 0
    %2017 = vmatmul.mubr.bf16.gmra.mrb[0].mxu0 %v1944
    %v2018 = vpop.f32.mrb[0].mxu0
    %v2019 = vadd.f32 %v1966, %v2018
    %v2020 = vpop.f32.mrb[0].mxu0
    %v2021 = vpop.f32.mrb[0].mxu0
    %v2022 = vadd.f32 %v1966, %v2021
    %v2023 = vpop.f32.mrb[0].mxu0
    %2024 = vdwg.mxu0
    %v2025 = vmax.f32 %v2003, 0.0
    %v2026 = vmax.f32 %v2006, 0.0
    %v2027 = vmax.f32 %v2011, 0.0
    %v2028 = vmax.f32 %v2014, 0.0
    %v2029 = vmax.f32 %v2019, 0.0
    %v2030 = vmax.f32 %v2022, 0.0
    %v2031 = vand.u32 2147483647, %v2003
    %v2032 = vand.u32 2147483647, %v2006
    %v2033 = vand.u32 2147483647, %v2011
    %v2034 = vand.u32 2147483647, %v2014
    %v2035 = vand.u32 2147483647, %v2019
    %v2036 = vand.u32 2147483647, %v2022
    %v2037 = vsub.f32 0.0, %v2031
    %v2038 = vsub.f32 0.0, %v2032
    %v2039 = vsub.f32 0.0, %v2033
    %v2040 = vsub.f32 0.0, %v2034
    %v2041 = vsub.f32 0.0, %v2035
    %v2042 = vsub.f32 0.0, %v2036
    %v2043 = vmul.f32 %v2037, 1.442695
    %v2044 = vpow.pop %v2043
    %v2045 = vmul.f32 %v2038, 1.442695
    %v2046 = vpow.pop %v2045
    %v2047 = vmul.f32 %v2039, 1.442695
    %v2048 = vpow.pop %v2047
    %v2049 = vmul.f32 %v2040, 1.442695
    %v2050 = vpow.pop %v2049
    %v2051 = vmul.f32 %v2041, 1.442695
    %v2052 = vpow.pop %v2051
    %v2053 = vmul.f32 %v2042, 1.442695
    %v2054 = vpow.pop %v2053
    %v2055 = vadd.f32 %v2044, 1.0
    %v2056 = vadd.f32 %v2046, 1.0
    %v2057 = vadd.f32 %v2048, 1.0
    %v2058 = vadd.f32 %v2050, 1.0
    %v2059 = vadd.f32 %v2052, 1.0
    %v2060 = vadd.f32 %v2054, 1.0
    %v2061 = vlog2.pop %v2055
    %v2062 = vmul.f32 %v2061, 0.6931472
    %v2063 = vlog2.pop %v2056
    %v2064 = vmul.f32 %v2063, 0.6931472
    %v2065 = vlog2.pop %v2057
    %v2066 = vmul.f32 %v2065, 0.6931472
    %v2067 = vlog2.pop %v2058
    %v2068 = vmul.f32 %v2067, 0.6931472
    %v2069 = vlog2.pop %v2059
    %v2070 = vmul.f32 %v2069, 0.6931472
    %v2071 = vlog2.pop %v2060
    %v2072 = vmul.f32 %v2071, 0.6931472
    %v2073 = vadd.f32 %v2025, %v2062
    %v2074 = vadd.f32 %v2026, %v2064
    %v2075 = vadd.f32 %v2027, %v2066
    %v2076 = vadd.f32 %v2028, %v2068
    %v2077 = vadd.f32 %v2029, %v2070
    %v2078 = vadd.f32 %v2030, %v2072
    %v2079 = vpack.c.bf16 %v1915, %v1913
    %v2080 = vpack.c.bf16 %v1919, %v1917
    %v2081 = vpack.c.bf16 %v1923, %v1921
    %2082 = vmatprep.subr.bf16.mxu0 0
    %2083 = vmatpush1.bf16.msra.mxu0 %v1945
    %2084 = vmatprep.subr.bf16.mxu0 0
    %2085 = vmatpush1.bf16.msra.mxu0 %v1946
    %2086 = vmatprep.subr.bf16.mxu0 0
    %2087 = vmatpush1.bf16.msra.mxu0 %v1947
    %2088 = vmatprep.subr.bf16.mxu0 0
    %2089 = vmatpush1.bf16.msra.mxu0 %v1948
    %2090 = vmatprep.subr.bf16.mxu0 0
    %2091 = vmatpush1.bf16.msra.mxu0 %v1949
    %2092 = vmatprep.subr.bf16.mxu0 0
    %2093 = vmatpush1.bf16.msra.mxu0 %v1950
    %2094 = vmatprep.subr.bf16.mxu0 0
    %2095 = vmatpush1.bf16.msra.mxu0 %v1951
    %2096 = vmatprep.subr.bf16.mxu0 0
    %2097 = vmatpush1.bf16.msra.mxu0 %v1952
    %2098 = vmatprep.subr.bf16.mxu0 0
    %2099 = vmatpush1.bf16.msra.mxu0 0
    %2100 = vmatprep.subr.bf16.mxu0 0
    %2101 = vmatpush1.bf16.msra.mxu0 0
    %2102 = vmatprep.subr.bf16.mxu0 0
    %2103 = vmatpush1.bf16.msra.mxu0 0
    %2104 = vmatprep.subr.bf16.mxu0 0
    %2105 = vmatpush1.bf16.msra.mxu0 0
    %2106 = vmatprep.subr.bf16.mxu0 0
    %2107 = vmatpush1.bf16.msra.mxu0 0
    %2108 = vmatprep.subr.bf16.mxu0 0
    %2109 = vmatpush1.bf16.msra.mxu0 0
    %2110 = vmatprep.subr.bf16.mxu0 0
    %2111 = vmatpush1.bf16.msra.mxu0 0
    %2112 = vmatprep.subr.bf16.mxu0 0
    %2113 = vmatpush1.bf16.msra.mxu0 0
    %2114 = vmatprep.mubr.bf16.mxu0 0
    %2115 = vmatmul.mubr.bf16.gmra.mrb[0].mxu0 %v2079
    %v2116 = vpop.f32.mrb[0].mxu0
    %v2117 = vadd.f32 %v1966, %v2116
    %v2118 = vpop.f32.mrb[0].mxu0
    %v2119 = vpop.f32.mrb[0].mxu0
    %v2120 = vadd.f32 %v1966, %v2119
    %v2121 = vpop.f32.mrb[0].mxu0
    %2122 = vmatprep.mubr.bf16.mxu0 0
    %2123 = vmatmul.mubr.bf16.gmra.mrb[0].mxu0 %v2080
    %v2124 = vpop.f32.mrb[0].mxu0
    %v2125 = vadd.f32 %v1966, %v2124
    %v2126 = vpop.f32.mrb[0].mxu0
    %v2127 = vpop.f32.mrb[0].mxu0
    %v2128 = vadd.f32 %v1966, %v2127
    %v2129 = vpop.f32.mrb[0].mxu0
    %2130 = vmatprep.mubr.bf16.mxu0 0
    %2131 = vmatmul.mubr.bf16.gmra.mrb[0].mxu0 %v2081
    %v2132 = vpop.f32.mrb[0].mxu0
    %v2133 = vadd.f32 %v1966, %v2132
    %v2134 = vpop.f32.mrb[0].mxu0
    %v2135 = vpop.f32.mrb[0].mxu0
    %v2136 = vadd.f32 %v1966, %v2135
    %v2137 = vpop.f32.mrb[0].mxu0
    %2138 = vdwg.mxu0
    %v2139 = vmax.f32 %v2117, 0.0
    %v2140 = vmax.f32 %v2120, 0.0
    %v2141 = vmax.f32 %v2125, 0.0
    %v2142 = vmax.f32 %v2128, 0.0
    %v2143 = vmax.f32 %v2133, 0.0
    %v2144 = vmax.f32 %v2136, 0.0
    %v2145 = vand.u32 2147483647, %v2117
    %v2146 = vand.u32 2147483647, %v2120
    %v2147 = vand.u32 2147483647, %v2125
    %v2148 = vand.u32 2147483647, %v2128
    %v2149 = vand.u32 2147483647, %v2133
    %v2150 = vand.u32 2147483647, %v2136
    %v2151 = vsub.f32 0.0, %v2145
    %v2152 = vsub.f32 0.0, %v2146
    %v2153 = vsub.f32 0.0, %v2147
    %v2154 = vsub.f32 0.0, %v2148
    %v2155 = vsub.f32 0.0, %v2149
    %v2156 = vsub.f32 0.0, %v2150
    %v2157 = vmul.f32 %v2151, 1.442695
    %v2158 = vpow.pop %v2157
    %v2159 = vmul.f32 %v2152, 1.442695
    %v2160 = vpow.pop %v2159
    %v2161 = vmul.f32 %v2153, 1.442695
    %v2162 = vpow.pop %v2161
    %v2163 = vmul.f32 %v2154, 1.442695
    %v2164 = vpow.pop %v2163
    %v2165 = vmul.f32 %v2155, 1.442695
    %v2166 = vpow.pop %v2165
    %v2167 = vmul.f32 %v2156, 1.442695
    %v2168 = vpow.pop %v2167
    %v2169 = vadd.f32 %v2158, 1.0
    %v2170 = vadd.f32 %v2160, 1.0
    %v2171 = vadd.f32 %v2162, 1.0
    %v2172 = vadd.f32 %v2164, 1.0
    %v2173 = vadd.f32 %v2166, 1.0
    %v2174 = vadd.f32 %v2168, 1.0
    %v2175 = vlog2.pop %v2169
    %v2176 = vmul.f32 %v2175, 0.6931472
    %v2177 = vlog2.pop %v2170
    %v2178 = vmul.f32 %v2177, 0.6931472
    %v2179 = vlog2.pop %v2171
    %v2180 = vmul.f32 %v2179, 0.6931472
    %v2181 = vlog2.pop %v2172
    %v2182 = vmul.f32 %v2181, 0.6931472
    %v2183 = vlog2.pop %v2173
    %v2184 = vmul.f32 %v2183, 0.6931472
    %v2185 = vlog2.pop %v2174
    %v2186 = vmul.f32 %v2185, 0.6931472
    %v2187 = vadd.f32 %v2139, %v2176
    %v2188 = vadd.f32 %v2140, %v2178
    %v2189 = vadd.f32 %v2141, %v2180
    %v2190 = vadd.f32 %v2142, %v2182
    %v2191 = vadd.f32 %v2143, %v2184
    %v2192 = vadd.f32 %v2144, %v2186
    %2193 = vxpose.xlu0.b32.start [1/16] %v2187, 128
    %2194 = vxpose.xlu0.b32.cont [2/16] %v2188, 128
    %2195 = vxpose.xlu0.b32.cont [3/16] %v2189, 128
    %2196 = vxpose.xlu0.b32.cont [4/16] 0.0, 128
    %2197 = vxpose.xlu0.b32.cont [5/16] 0.0, 128
    %2198 = vxpose.xlu0.b32.cont [6/16] 0.0, 128
    %2199 = vxpose.xlu0.b32.cont [7/16] 0.0, 128
    %2200 = vxpose.xlu0.b32.cont [8/16] 0.0, 128
    %2201 = vxpose.xlu0.b32.cont [9/16] 0.0, 128
    %2202 = vxpose.xlu0.b32.cont [10/16] 0.0, 128
    %2203 = vxpose.xlu0.b32.cont [11/16] 0.0, 128
    %2204 = vxpose.xlu0.b32.cont [12/16] 0.0, 128
    %2205 = vxpose.xlu0.b32.cont [13/16] 0.0, 128
    %2206 = vxpose.xlu0.b32.cont [14/16] 0.0, 128
    %2207 = vxpose.xlu0.b32.cont [15/16] 0.0, 128
    %2208 = vxpose.xlu0.b32.end [16/16] 0.0, 128
    %v2209 = vpop.trf.xlu0
    %v2210 = vpop.trf.xlu0
    %v2211 = vpop.trf.xlu0
    %v2212 = vpop.trf.xlu0
    %v2213 = vpop.trf.xlu0
    %v2214 = vpop.trf.xlu0
    %v2215 = vpop.trf.xlu0
    %v2216 = vpop.trf.xlu0
    %v2217 = vpop.trf.xlu0
    %v2218 = vpop.trf.xlu0
    %v2219 = vpop.trf.xlu0
    %v2220 = vpop.trf.xlu0
    %v2221 = vpop.trf.xlu0
    %v2222 = vpop.trf.xlu0
    %v2223 = vpop.trf.xlu0
    %v2224 = vpop.trf.xlu0
    %v2226 = vsel %vm613, %v2209, 0
    %v2229 = vsel %vm613, %v2210, 0
    %v2232 = vsel %vm613, %v2211, 0
    %v2235 = vsel %vm613, %v2212, 0
    %v2238 = vsel %vm613, %v2213, 0
    %v2241 = vsel %vm613, %v2214, 0
    %v2244 = vsel %vm613, %v2215, 0
    %v2247 = vsel %vm613, %v2216, 0
    %v2250 = vsel %vm613, %v2217, 0
    %v2253 = vsel %vm613, %v2218, 0
    %v2256 = vsel %vm613, %v2219, 0
    %v2259 = vsel %vm613, %v2220, 0
    %v2262 = vsel %vm613, %v2221, 0
    %v2265 = vsel %vm613, %v2222, 0
    %v2268 = vsel %vm613, %v2223, 0
    %v2271 = vsel %vm613, %v2224, 0
    %v2274 = vsel %vm662, %v1898, 0
    %2276 = vmatprep.subr.mxu0 0.0
    %2277 = vmatpush1.msra.mxu0 %v1890
    %2278 = vmatprep.subr.mxu0 0.0
    %2279 = vmatpush1.msra.mxu0 %v1893
    %2280 = vmatprep.subr.mxu0 0.0
    %2281 = vmatpush1.msra.mxu0 %v2274
    %2282 = vmatprep.subr.mxu0 0.0
    %2283 = vmatpush1.msra.mxu0 0.0
    %2284 = vmatprep.subr.mxu0 0.0
    %2285 = vmatpush1.msra.mxu0 0.0
    %2286 = vmatprep.subr.mxu0 0.0
    %2287 = vmatpush1.msra.mxu0 0.0
    %2288 = vmatprep.subr.mxu0 0.0
    %2289 = vmatpush1.msra.mxu0 0.0
    %2290 = vmatprep.subr.mxu0 0.0
    %2291 = vmatpush1.msra.mxu0 0.0
    %2292 = vmatprep.subr.mxu0 0.0
    %2293 = vmatpush1.msra.mxu0 0.0
    %2294 = vmatprep.subr.mxu0 0.0
    %2295 = vmatpush1.msra.mxu0 0.0
    %2296 = vmatprep.subr.mxu0 0.0
    %2297 = vmatpush1.msra.mxu0 0.0
    %2298 = vmatprep.subr.mxu0 0.0
    %2299 = vmatpush1.msra.mxu0 0.0
    %2300 = vmatprep.subr.mxu0 0.0
    %2301 = vmatpush1.msra.mxu0 0.0
    %2302 = vmatprep.subr.mxu0 0.0
    %2303 = vmatpush1.msra.mxu0 0.0
    %2304 = vmatprep.subr.mxu0 0.0
    %2305 = vmatpush1.msra.mxu0 0.0
    %2306 = vmatprep.subr.mxu0 0.0
    %2307 = vmatpush1.msra.mxu0 0.0
    %2308 = vmatprep.subr.mxu0 0.0
    %2309 = vmatpush1.msra.mxu0 0.0
    %2310 = vmatprep.subr.mxu0 0.0
    %2311 = vmatpush1.msra.mxu0 0.0
    %2312 = vmatprep.subr.mxu0 0.0
    %2313 = vmatpush1.msra.mxu0 0.0
    %2314 = vmatprep.subr.mxu0 0.0
    %2315 = vmatpush1.msra.mxu0 0.0
    %2316 = vmatprep.subr.mxu0 0.0
    %2317 = vmatpush1.msra.mxu0 0.0
    %2318 = vmatprep.subr.mxu0 0.0
    %2319 = vmatpush1.msra.mxu0 0.0
    %2320 = vmatprep.subr.mxu0 0.0
    %2321 = vmatpush1.msra.mxu0 0.0
    %2322 = vmatprep.subr.mxu0 0.0
    %2323 = vmatpush1.msra.mxu0 0.0
    %2324 = vmatprep.subr.mxu0 0.0
    %2325 = vmatpush1.msra.mxu0 0.0
    %2326 = vmatprep.subr.mxu0 0.0
    %2327 = vmatpush1.msra.mxu0 0.0
    %2328 = vmatprep.subr.mxu0 0.0
    %2329 = vmatpush1.msra.mxu0 0.0
    %2330 = vmatprep.subr.mxu0 0.0
    %2331 = vmatpush1.msra.mxu0 0.0
    %2332 = vmatprep.subr.mxu0 0.0
    %2333 = vmatpush1.msra.mxu0 0.0
    %2334 = vmatprep.subr.mxu0 0.0
    %2335 = vmatpush1.msra.mxu0 0.0
    %2336 = vmatprep.subr.mxu0 0.0
    %2337 = vmatpush1.msra.mxu0 0.0
    %2338 = vmatprep.subr.mxu0 0.0
    %2339 = vmatpush1.msra.mxu0 0.0
    %2340 = vmatprep.mubr.f32.mxu0 0.0
    %2341 = vmatmul.mubr.f32.gmra.mrb[0].mxu0 %v2226
    %v2342 = vpop.f32.mrb[0].mxu0
    %v2343 = vadd.f32 0.0, %v2342
    %v2344 = vpop.f32.mrb[0].mxu0
    %2345 = vmatprep.mubr.f32.mxu0 0.0
    %2346 = vmatmul.mubr.f32.gmra.mrb[0].mxu0 %v2229
    %v2347 = vpop.f32.mrb[0].mxu0
    %v2348 = vadd.f32 0.0, %v2347
    %v2349 = vpop.f32.mrb[0].mxu0
    %2350 = vmatprep.mubr.f32.mxu0 0.0
    %2351 = vmatmul.mubr.f32.gmra.mrb[0].mxu0 %v2232
    %v2352 = vpop.f32.mrb[0].mxu0
    %v2353 = vadd.f32 0.0, %v2352
    %v2354 = vpop.f32.mrb[0].mxu0
    %2355 = vmatprep.mubr.f32.mxu0 0.0
    %2356 = vmatmul.mubr.f32.gmra.mrb[0].mxu0 %v2235
    %v2357 = vpop.f32.mrb[0].mxu0
    %v2358 = vadd.f32 0.0, %v2357
    %v2359 = vpop.f32.mrb[0].mxu0
    %2360 = vmatprep.mubr.f32.mxu0 0.0
    %2361 = vmatmul.mubr.f32.gmra.mrb[0].mxu0 %v2238
    %v2362 = vpop.f32.mrb[0].mxu0
    %v2363 = vadd.f32 0.0, %v2362
    %v2364 = vpop.f32.mrb[0].mxu0
    %2365 = vmatprep.mubr.f32.mxu0 0.0
    %2366 = vmatmul.mubr.f32.gmra.mrb[0].mxu0 %v2241
    %v2367 = vpop.f32.mrb[0].mxu0
    %v2368 = vadd.f32 0.0, %v2367
    %v2369 = vpop.f32.mrb[0].mxu0
    %2370 = vmatprep.mubr.f32.mxu0 0.0
    %2371 = vmatmul.mubr.f32.gmra.mrb[0].mxu0 %v2244
    %v2372 = vpop.f32.mrb[0].mxu0
    %v2373 = vadd.f32 0.0, %v2372
    %v2374 = vpop.f32.mrb[0].mxu0
    %2375 = vmatprep.mubr.f32.mxu0 0.0
    %2376 = vmatmul.mubr.f32.gmra.mrb[0].mxu0 %v2247
    %v2377 = vpop.f32.mrb[0].mxu0
    %v2378 = vadd.f32 0.0, %v2377
    %v2379 = vpop.f32.mrb[0].mxu0
    %2380 = vmatprep.mubr.f32.mxu0 0.0
    %2381 = vmatmul.mubr.f32.gmra.mrb[0].mxu0 %v2250
    %v2382 = vpop.f32.mrb[0].mxu0
    %v2383 = vadd.f32 0.0, %v2382
    %v2384 = vpop.f32.mrb[0].mxu0
    %2385 = vmatprep.mubr.f32.mxu0 0.0
    %2386 = vmatmul.mubr.f32.gmra.mrb[0].mxu0 %v2253
    %v2387 = vpop.f32.mrb[0].mxu0
    %v2388 = vadd.f32 0.0, %v2387
    %v2389 = vpop.f32.mrb[0].mxu0
    %2390 = vmatprep.mubr.f32.mxu0 0.0
    %2391 = vmatmul.mubr.f32.gmra.mrb[0].mxu0 %v2256
    %v2392 = vpop.f32.mrb[0].mxu0
    %v2393 = vadd.f32 0.0, %v2392
    %v2394 = vpop.f32.mrb[0].mxu0
    %2395 = vmatprep.mubr.f32.mxu0 0.0
    %2396 = vmatmul.mubr.f32.gmra.mrb[0].mxu0 %v2259
    %v2397 = vpop.f32.mrb[0].mxu0
    %v2398 = vadd.f32 0.0, %v2397
    %v2399 = vpop.f32.mrb[0].mxu0
    %2400 = vmatprep.mubr.f32.mxu0 0.0
    %2401 = vmatmul.mubr.f32.gmra.mrb[0].mxu0 %v2262
    %v2402 = vpop.f32.mrb[0].mxu0
    %v2403 = vadd.f32 0.0, %v2402
    %v2404 = vpop.f32.mrb[0].mxu0
    %2405 = vmatprep.mubr.f32.mxu0 0.0
    %2406 = vmatmul.mubr.f32.gmra.mrb[0].mxu0 %v2265
    %v2407 = vpop.f32.mrb[0].mxu0
    %v2408 = vadd.f32 0.0, %v2407
    %v2409 = vpop.f32.mrb[0].mxu0
    %2410 = vmatprep.mubr.f32.mxu0 0.0
    %2411 = vmatmul.mubr.f32.gmra.mrb[0].mxu0 %v2268
    %v2412 = vpop.f32.mrb[0].mxu0
    %v2413 = vadd.f32 0.0, %v2412
    %v2414 = vpop.f32.mrb[0].mxu0
    %2415 = vmatprep.mubr.f32.mxu0 0.0
    %2416 = vmatmul.mubr.f32.gmra.mrb[0].mxu0 %v2271
    %v2417 = vpop.f32.mrb[0].mxu0
    %v2418 = vadd.f32 0.0, %v2417
    %v2419 = vpop.f32.mrb[0].mxu0
    %2420 = vdwg.mxu0
    %v2421 = vmul.f32 %v2343, %v828
    %v2422 = vmul.f32 %v2348, %v830
    %v2423 = vmul.f32 %v2353, %v832
    %v2424 = vmul.f32 %v2358, %v834
    %v2425 = vmul.f32 %v2363, %v836
    %v2426 = vmul.f32 %v2368, %v838
    %v2427 = vmul.f32 %v2373, %v840
    %v2428 = vmul.f32 %v2378, %v842
    %v2429 = vmul.f32 %v2383, %v844
    %v2430 = vmul.f32 %v2388, %v846
    %v2431 = vmul.f32 %v2393, %v848
    %v2432 = vmul.f32 %v2398, %v850
    %v2433 = vmul.f32 %v2403, %v852
    %v2434 = vmul.f32 %v2408, %v854
    %v2435 = vmul.f32 %v2413, %v856
    %v2436 = vmul.f32 %v2418, %v858
    %v2437 = vpack.c.bf16 %v2074, %v2073
    %v2438 = vpack.c.bf16 %v2075, %v2075
    %v2439 = vpack.c.bf16 %v2422, %v2421
    %v2440 = vpack.c.bf16 %v2424, %v2423
    %v2441 = vpack.c.bf16 %v2426, %v2425
    %v2442 = vpack.c.bf16 %v2428, %v2427
    %v2443 = vpack.c.bf16 %v2430, %v2429
    %v2444 = vpack.c.bf16 %v2432, %v2431
    %v2445 = vpack.c.bf16 %v2434, %v2433
    %v2446 = vpack.c.bf16 %v2436, %v2435
    %2447 = vmatprep.subr.bf16.mxu0 0
    %2448 = vmatpush1.bf16.msra.mxu0 %v2439
    %2449 = vmatprep.subr.bf16.mxu0 0
    %2450 = vmatpush1.bf16.msra.mxu0 %v2440
    %2451 = vmatprep.subr.bf16.mxu0 0
    %2452 = vmatpush1.bf16.msra.mxu0 %v2441
    %2453 = vmatprep.subr.bf16.mxu0 0
    %2454 = vmatpush1.bf16.msra.mxu0 %v2442
    %2455 = vmatprep.subr.bf16.mxu0 0
    %2456 = vmatpush1.bf16.msra.mxu0 %v2443
    %2457 = vmatprep.subr.bf16.mxu0 0
    %2458 = vmatpush1.bf16.msra.mxu0 %v2444
    %2459 = vmatprep.subr.bf16.mxu0 0
    %2460 = vmatpush1.bf16.msra.mxu0 %v2445
    %2461 = vmatprep.subr.bf16.mxu0 0
    %2462 = vmatpush1.bf16.msra.mxu0 %v2446
    %2463 = vmatprep.subr.bf16.mxu0 0
    %2464 = vmatpush1.bf16.msra.mxu0 0
    %2465 = vmatprep.subr.bf16.mxu0 0
    %2466 = vmatpush1.bf16.msra.mxu0 0
    %2467 = vmatprep.subr.bf16.mxu0 0
    %2468 = vmatpush1.bf16.msra.mxu0 0
    %2469 = vmatprep.subr.bf16.mxu0 0
    %2470 = vmatpush1.bf16.msra.mxu0 0
    %2471 = vmatprep.subr.bf16.mxu0 0
    %2472 = vmatpush1.bf16.msra.mxu0 0
    %2473 = vmatprep.subr.bf16.mxu0 0
    %2474 = vmatpush1.bf16.msra.mxu0 0
    %2475 = vmatprep.subr.bf16.mxu0 0
    %2476 = vmatpush1.bf16.msra.mxu0 0
    %2477 = vmatprep.subr.bf16.mxu0 0
    %2478 = vmatpush1.bf16.msra.mxu0 0
    %2479 = vmatprep.mubr.bf16.mxu0 0
    %2480 = vmatmul.mubr.bf16.gmra.mrb[0].mxu0 %v2437
    %v2481 = vpop.f32.mrb[0].mxu0
    %v2482 = vadd.f32 0.0, %v2481
    %v2483 = vpop.f32.mrb[0].mxu0
    %v2484 = vpop.f32.mrb[0].mxu0
    %v2485 = vadd.f32 0.0, %v2484
    %v2486 = vpop.f32.mrb[0].mxu0
    %2487 = vmatprep.mubr.bf16.mxu0 0
    %2488 = vmatmul.mubr.bf16.gmra.mrb[0].mxu0 %v2438
    %v2489 = vpop.f32.mrb[0].mxu0
    %v2490 = vadd.f32 0.0, %v2489
    %v2491 = vpop.f32.mrb[0].mxu0
    %v2492 = vpop.f32.mrb[0].mxu0
    %v2493 = vpop.f32.mrb[0].mxu0
    %2494 = vdwg.mxu0
    %2495 = vxpose.xlu0.b32.start [1/16] %v2190, 128
    %2496 = vxpose.xlu0.b32.cont [2/16] %v2191, 128
    %2497 = vxpose.xlu0.b32.cont [3/16] %v2192, 128
    %2498 = vxpose.xlu0.b32.cont [4/16] 0.0, 128
    %2499 = vxpose.xlu0.b32.cont [5/16] 0.0, 128
    %2500 = vxpose.xlu0.b32.cont [6/16] 0.0, 128
    %2501 = vxpose.xlu0.b32.cont [7/16] 0.0, 128
    %2502 = vxpose.xlu0.b32.cont [8/16] 0.0, 128
    %2503 = vxpose.xlu0.b32.cont [9/16] 0.0, 128
    %2504 = vxpose.xlu0.b32.cont [10/16] 0.0, 128
    %2505 = vxpose.xlu0.b32.cont [11/16] 0.0, 128
    %2506 = vxpose.xlu0.b32.cont [12/16] 0.0, 128
    %2507 = vxpose.xlu0.b32.cont [13/16] 0.0, 128
    %2508 = vxpose.xlu0.b32.cont [14/16] 0.0, 128
    %2509 = vxpose.xlu0.b32.cont [15/16] 0.0, 128
    %2510 = vxpose.xlu0.b32.end [16/16] 0.0, 128
    %v2511 = vpop.trf.xlu0
    %v2512 = vpop.trf.xlu0
    %v2513 = vpop.trf.xlu0
    %v2514 = vpop.trf.xlu0
    %v2515 = vpop.trf.xlu0
    %v2516 = vpop.trf.xlu0
    %v2517 = vpop.trf.xlu0
    %v2518 = vpop.trf.xlu0
    %v2519 = vpop.trf.xlu0
    %v2520 = vpop.trf.xlu0
    %v2521 = vpop.trf.xlu0
    %v2522 = vpop.trf.xlu0
    %v2523 = vpop.trf.xlu0
    %v2524 = vpop.trf.xlu0
    %v2525 = vpop.trf.xlu0
    %v2526 = vpop.trf.xlu0
    %v2528 = vsel %vm613, %v2511, 0
    %v2531 = vsel %vm613, %v2512, 0
    %v2534 = vsel %vm613, %v2513, 0
    %v2537 = vsel %vm613, %v2514, 0
    %v2540 = vsel %vm613, %v2515, 0
    %v2543 = vsel %vm613, %v2516, 0
    %v2546 = vsel %vm613, %v2517, 0
    %v2549 = vsel %vm613, %v2518, 0
    %v2552 = vsel %vm613, %v2519, 0
    %v2555 = vsel %vm613, %v2520, 0
    %v2558 = vsel %vm613, %v2521, 0
    %v2561 = vsel %vm613, %v2522, 0
    %v2564 = vsel %vm613, %v2523, 0
    %v2567 = vsel %vm613, %v2524, 0
    %v2570 = vsel %vm613, %v2525, 0
    %v2573 = vsel %vm613, %v2526, 0
    %v2576 = vsel %vm662, %v1909, 0
    %2578 = vmatprep.subr.mxu0 0.0
    %2579 = vmatpush1.msra.mxu0 %v1901
    %2580 = vmatprep.subr.mxu0 0.0
    %2581 = vmatpush1.msra.mxu0 %v1906
    %2582 = vmatprep.subr.mxu0 0.0
    %2583 = vmatpush1.msra.mxu0 %v2576
    %2584 = vmatprep.subr.mxu0 0.0
    %2585 = vmatpush1.msra.mxu0 0.0
    %2586 = vmatprep.subr.mxu0 0.0
    %2587 = vmatpush1.msra.mxu0 0.0
    %2588 = vmatprep.subr.mxu0 0.0
    %2589 = vmatpush1.msra.mxu0 0.0
    %2590 = vmatprep.subr.mxu0 0.0
    %2591 = vmatpush1.msra.mxu0 0.0
    %2592 = vmatprep.subr.mxu0 0.0
    %2593 = vmatpush1.msra.mxu0 0.0
    %2594 = vmatprep.subr.mxu0 0.0
    %2595 = vmatpush1.msra.mxu0 0.0
    %2596 = vmatprep.subr.mxu0 0.0
    %2597 = vmatpush1.msra.mxu0 0.0
    %2598 = vmatprep.subr.mxu0 0.0
    %2599 = vmatpush1.msra.mxu0 0.0
    %2600 = vmatprep.subr.mxu0 0.0
    %2601 = vmatpush1.msra.mxu0 0.0
    %2602 = vmatprep.subr.mxu0 0.0
    %2603 = vmatpush1.msra.mxu0 0.0
    %2604 = vmatprep.subr.mxu0 0.0
    %2605 = vmatpush1.msra.mxu0 0.0
    %2606 = vmatprep.subr.mxu0 0.0
    %2607 = vmatpush1.msra.mxu0 0.0
    %2608 = vmatprep.subr.mxu0 0.0
    %2609 = vmatpush1.msra.mxu0 0.0
    %2610 = vmatprep.subr.mxu0 0.0
    %2611 = vmatpush1.msra.mxu0 0.0
    %2612 = vmatprep.subr.mxu0 0.0
    %2613 = vmatpush1.msra.mxu0 0.0
    %2614 = vmatprep.subr.mxu0 0.0
    %2615 = vmatpush1.msra.mxu0 0.0
    %2616 = vmatprep.subr.mxu0 0.0
    %2617 = vmatpush1.msra.mxu0 0.0
    %2618 = vmatprep.subr.mxu0 0.0
    %2619 = vmatpush1.msra.mxu0 0.0
    %2620 = vmatprep.subr.mxu0 0.0
    %2621 = vmatpush1.msra.mxu0 0.0
    %2622 = vmatprep.subr.mxu0 0.0
    %2623 = vmatpush1.msra.mxu0 0.0
    %2624 = vmatprep.subr.mxu0 0.0
    %2625 = vmatpush1.msra.mxu0 0.0
    %2626 = vmatprep.subr.mxu0 0.0
    %2627 = vmatpush1.msra.mxu0 0.0
    %2628 = vmatprep.subr.mxu0 0.0
    %2629 = vmatpush1.msra.mxu0 0.0
    %2630 = vmatprep.subr.mxu0 0.0
    %2631 = vmatpush1.msra.mxu0 0.0
    %2632 = vmatprep.subr.mxu0 0.0
    %2633 = vmatpush1.msra.mxu0 0.0
    %2634 = vmatprep.subr.mxu0 0.0
    %2635 = vmatpush1.msra.mxu0 0.0
    %2636 = vmatprep.subr.mxu0 0.0
    %2637 = vmatpush1.msra.mxu0 0.0
    %2638 = vmatprep.subr.mxu0 0.0
    %2639 = vmatpush1.msra.mxu0 0.0
    %2640 = vmatprep.subr.mxu0 0.0
    %2641 = vmatpush1.msra.mxu0 0.0
    %2642 = vmatprep.mubr.f32.mxu0 0.0
    %2643 = vmatmul.mubr.f32.gmra.mrb[0].mxu0 %v2528
    %v2644 = vpop.f32.mrb[0].mxu0
    %v2645 = vadd.f32 0.0, %v2644
    %v2646 = vpop.f32.mrb[0].mxu0
    %2647 = vmatprep.mubr.f32.mxu0 0.0
    %2648 = vmatmul.mubr.f32.gmra.mrb[0].mxu0 %v2531
    %v2649 = vpop.f32.mrb[0].mxu0
    %v2650 = vadd.f32 0.0, %v2649
    %v2651 = vpop.f32.mrb[0].mxu0
    %2652 = vmatprep.mubr.f32.mxu0 0.0
    %2653 = vmatmul.mubr.f32.gmra.mrb[0].mxu0 %v2534
    %v2654 = vpop.f32.mrb[0].mxu0
    %v2655 = vadd.f32 0.0, %v2654
    %v2656 = vpop.f32.mrb[0].mxu0
    %2657 = vmatprep.mubr.f32.mxu0 0.0
    %2658 = vmatmul.mubr.f32.gmra.mrb[0].mxu0 %v2537
    %v2659 = vpop.f32.mrb[0].mxu0
    %v2660 = vadd.f32 0.0, %v2659
    %v2661 = vpop.f32.mrb[0].mxu0
    %2662 = vmatprep.mubr.f32.mxu0 0.0
    %2663 = vmatmul.mubr.f32.gmra.mrb[0].mxu0 %v2540
    %v2664 = vpop.f32.mrb[0].mxu0
    %v2665 = vadd.f32 0.0, %v2664
    %v2666 = vpop.f32.mrb[0].mxu0
    %2667 = vmatprep.mubr.f32.mxu0 0.0
    %2668 = vmatmul.mubr.f32.gmra.mrb[0].mxu0 %v2543
    %v2669 = vpop.f32.mrb[0].mxu0
    %v2670 = vadd.f32 0.0, %v2669
    %v2671 = vpop.f32.mrb[0].mxu0
    %2672 = vmatprep.mubr.f32.mxu0 0.0
    %2673 = vmatmul.mubr.f32.gmra.mrb[0].mxu0 %v2546
    %v2674 = vpop.f32.mrb[0].mxu0
    %v2675 = vadd.f32 0.0, %v2674
    %v2676 = vpop.f32.mrb[0].mxu0
    %2677 = vmatprep.mubr.f32.mxu0 0.0
    %2678 = vmatmul.mubr.f32.gmra.mrb[0].mxu0 %v2549
    %v2679 = vpop.f32.mrb[0].mxu0
    %v2680 = vadd.f32 0.0, %v2679
    %v2681 = vpop.f32.mrb[0].mxu0
    %2682 = vmatprep.mubr.f32.mxu0 0.0
    %2683 = vmatmul.mubr.f32.gmra.mrb[0].mxu0 %v2552
    %v2684 = vpop.f32.mrb[0].mxu0
    %v2685 = vadd.f32 0.0, %v2684
    %v2686 = vpop.f32.mrb[0].mxu0
    %2687 = vmatprep.mubr.f32.mxu0 0.0
    %2688 = vmatmul.mubr.f32.gmra.mrb[0].mxu0 %v2555
    %v2689 = vpop.f32.mrb[0].mxu0
    %v2690 = vadd.f32 0.0, %v2689
    %v2691 = vpop.f32.mrb[0].mxu0
    %2692 = vmatprep.mubr.f32.mxu0 0.0
    %2693 = vmatmul.mubr.f32.gmra.mrb[0].mxu0 %v2558
    %v2694 = vpop.f32.mrb[0].mxu0
    %v2695 = vadd.f32 0.0, %v2694
    %v2696 = vpop.f32.mrb[0].mxu0
    %2697 = vmatprep.mubr.f32.mxu0 0.0
    %2698 = vmatmul.mubr.f32.gmra.mrb[0].mxu0 %v2561
    %v2699 = vpop.f32.mrb[0].mxu0
    %v2700 = vadd.f32 0.0, %v2699
    %v2701 = vpop.f32.mrb[0].mxu0
    %2702 = vmatprep.mubr.f32.mxu0 0.0
    %2703 = vmatmul.mubr.f32.gmra.mrb[0].mxu0 %v2564
    %v2704 = vpop.f32.mrb[0].mxu0
    %v2705 = vadd.f32 0.0, %v2704
    %v2706 = vpop.f32.mrb[0].mxu0
    %2707 = vmatprep.mubr.f32.mxu0 0.0
    %2708 = vmatmul.mubr.f32.gmra.mrb[0].mxu0 %v2567
    %v2709 = vpop.f32.mrb[0].mxu0
    %v2710 = vadd.f32 0.0, %v2709
    %v2711 = vpop.f32.mrb[0].mxu0
    %2712 = vmatprep.mubr.f32.mxu0 0.0
    %2713 = vmatmul.mubr.f32.gmra.mrb[0].mxu0 %v2570
    %v2714 = vpop.f32.mrb[0].mxu0
    %v2715 = vadd.f32 0.0, %v2714
    %v2716 = vpop.f32.mrb[0].mxu0
    %2717 = vmatprep.mubr.f32.mxu0 0.0
    %2718 = vmatmul.mubr.f32.gmra.mrb[0].mxu0 %v2573
    %v2719 = vpop.f32.mrb[0].mxu0
    %v2720 = vadd.f32 0.0, %v2719
    %v2721 = vpop.f32.mrb[0].mxu0
    %2722 = vdwg.mxu0
    %v2723 = vmul.f32 %v2645, %v828
    %v2724 = vmul.f32 %v2650, %v830
    %v2725 = vmul.f32 %v2655, %v832
    %v2726 = vmul.f32 %v2660, %v834
    %v2727 = vmul.f32 %v2665, %v836
    %v2728 = vmul.f32 %v2670, %v838
    %v2729 = vmul.f32 %v2675, %v840
    %v2730 = vmul.f32 %v2680, %v842
    %v2731 = vmul.f32 %v2685, %v844
    %v2732 = vmul.f32 %v2690, %v846
    %v2733 = vmul.f32 %v2695, %v848
    %v2734 = vmul.f32 %v2700, %v850
    %v2735 = vmul.f32 %v2705, %v852
    %v2736 = vmul.f32 %v2710, %v854
    %v2737 = vmul.f32 %v2715, %v856
    %v2738 = vmul.f32 %v2720, %v858
    %v2739 = vpack.c.bf16 %v2077, %v2076
    %v2740 = vpack.c.bf16 %v2078, %v2078
    %v2741 = vpack.c.bf16 %v2724, %v2723
    %v2742 = vpack.c.bf16 %v2726, %v2725
    %v2743 = vpack.c.bf16 %v2728, %v2727
    %v2744 = vpack.c.bf16 %v2730, %v2729
    %v2745 = vpack.c.bf16 %v2732, %v2731
    %v2746 = vpack.c.bf16 %v2734, %v2733
    %v2747 = vpack.c.bf16 %v2736, %v2735
    %v2748 = vpack.c.bf16 %v2738, %v2737
    %2749 = vmatprep.subr.bf16.mxu0 0
    %2750 = vmatpush1.bf16.msra.mxu0 %v2741
    %2751 = vmatprep.subr.bf16.mxu0 0
    %2752 = vmatpush1.bf16.msra.mxu0 %v2742
    %2753 = vmatprep.subr.bf16.mxu0 0
    %2754 = vmatpush1.bf16.msra.mxu0 %v2743
    %2755 = vmatprep.subr.bf16.mxu0 0
    %2756 = vmatpush1.bf16.msra.mxu0 %v2744
    %2757 = vmatprep.subr.bf16.mxu0 0
    %2758 = vmatpush1.bf16.msra.mxu0 %v2745
    %2759 = vmatprep.subr.bf16.mxu0 0
    %2760 = vmatpush1.bf16.msra.mxu0 %v2746
    %2761 = vmatprep.subr.bf16.mxu0 0
    %2762 = vmatpush1.bf16.msra.mxu0 %v2747
    %2763 = vmatprep.subr.bf16.mxu0 0
    %2764 = vmatpush1.bf16.msra.mxu0 %v2748
    %2765 = vmatprep.subr.bf16.mxu0 0
    %2766 = vmatpush1.bf16.msra.mxu0 0
    %2767 = vmatprep.subr.bf16.mxu0 0
    %2768 = vmatpush1.bf16.msra.mxu0 0
    %2769 = vmatprep.subr.bf16.mxu0 0
    %2770 = vmatpush1.bf16.msra.mxu0 0
    %2771 = vmatprep.subr.bf16.mxu0 0
    %2772 = vmatpush1.bf16.msra.mxu0 0
    %2773 = vmatprep.subr.bf16.mxu0 0
    %2774 = vmatpush1.bf16.msra.mxu0 0
    %2775 = vmatprep.subr.bf16.mxu0 0
    %2776 = vmatpush1.bf16.msra.mxu0 0
    %2777 = vmatprep.subr.bf16.mxu0 0
    %2778 = vmatpush1.bf16.msra.mxu0 0
    %2779 = vmatprep.subr.bf16.mxu0 0
    %2780 = vmatpush1.bf16.msra.mxu0 0
    %2781 = vmatprep.mubr.bf16.mxu0 0
    %2782 = vmatmul.mubr.bf16.gmra.mrb[0].mxu0 %v2739
    %v2783 = vpop.f32.mrb[0].mxu0
    %v2784 = vadd.f32 0.0, %v2783
    %v2785 = vpop.f32.mrb[0].mxu0
    %v2786 = vpop.f32.mrb[0].mxu0
    %v2787 = vadd.f32 0.0, %v2786
    %v2788 = vpop.f32.mrb[0].mxu0
    %2789 = vmatprep.mubr.bf16.mxu0 0
    %2790 = vmatmul.mubr.bf16.gmra.mrb[0].mxu0 %v2740
    %v2791 = vpop.f32.mrb[0].mxu0
    %v2792 = vadd.f32 0.0, %v2791
    %v2793 = vpop.f32.mrb[0].mxu0
    %v2794 = vpop.f32.mrb[0].mxu0
    %v2795 = vpop.f32.mrb[0].mxu0
    %2796 = vdwg.mxu0
    %v2797 = vpack.c.bf16 %v2485, %v2482
    %v2798 = vpack.c.bf16 %v2784, %v2490
    %v2799 = vpack.c.bf16 %v2792, %v2787
    %v2800 = vld [vmem:[%s1765 + $0x3] sm:$0x1]
    %v2802 = vlaneseq
    %v2803 = vshrl.u32 %v2802, 7
    %v2804 = vsub.s32 0, %v2803
    %v2805 = vrot.slane %v2800, %v2804
    %2808 = vrot.lane.b32.xlu0 %v1761, 32
    %v2809 = vpop.permute.xlu0 %2808
    %2810 = vrot.lane.b32.xlu0 %v1764, 32
    %v2811 = vpop.permute.xlu0 %2810
    %2814 = vrot.lane.b32.xlu0 %v2805, 96
    %v2815 = vpop.permute.xlu0 %2814
    %v2818 = vsel %vm170, %v2797, 0
    %v2821 = vsel %vm170, %v2798, 0
    %v2824 = vsel %vm170, %v2799, 0
    %2826 = vmatprep.subr.bf16.mxu0 0
    %2827 = vmatpush1.bf16.msra.mxu0 %v2809
    %2828 = vmatprep.subr.bf16.mxu0 0
    %2829 = vmatpush1.bf16.msra.mxu0 %v2811
    %2830 = vmatprep.subr.bf16.mxu0 0
    %2831 = vmatpush1.bf16.msra.mxu0 0
    %2832 = vmatprep.subr.bf16.mxu0 0
    %2833 = vmatpush1.bf16.msra.mxu0 0
    %2834 = vmatprep.subr.bf16.mxu0 0
    %2835 = vmatpush1.bf16.msra.mxu0 0
    %2836 = vmatprep.subr.bf16.mxu0 0
    %2837 = vmatpush1.bf16.msra.mxu0 0
    %2838 = vmatprep.subr.bf16.mxu0 0
    %2839 = vmatpush1.bf16.msra.mxu0 0
    %2840 = vmatprep.subr.bf16.mxu0 0
    %2841 = vmatpush1.bf16.msra.mxu0 0
    %2842 = vmatprep.subr.bf16.mxu0 0
    %2843 = vmatpush1.bf16.msra.mxu0 0
    %2844 = vmatprep.subr.bf16.mxu0 0
    %2845 = vmatpush1.bf16.msra.mxu0 0
    %2846 = vmatprep.subr.bf16.mxu0 0
    %2847 = vmatpush1.bf16.msra.mxu0 0
    %2848 = vmatprep.subr.bf16.mxu0 0
    %2849 = vmatpush1.bf16.msra.mxu0 0
    %2850 = vmatprep.subr.bf16.mxu0 0
    %2851 = vmatpush1.bf16.msra.mxu0 0
    %2852 = vmatprep.subr.bf16.mxu0 0
    %2853 = vmatpush1.bf16.msra.mxu0 0
    %2854 = vmatprep.subr.bf16.mxu0 0
    %2855 = vmatpush1.bf16.msra.mxu0 0
    %2856 = vmatprep.subr.bf16.mxu0 0
    %2857 = vmatpush1.bf16.msra.mxu0 0
    %2858 = vmatprep.mubr.bf16.mxu0 0
    %2859 = vmatmul.mubr.bf16.gmra.mrb[0].mxu0 %v2818
    %v2860 = vpop.f32.mrb[0].mxu0
    %v2861 = vadd.f32 %v2815, %v2860
    %v2862 = vpop.f32.mrb[0].mxu0
    %v2863 = vpop.f32.mrb[0].mxu0
    %v2864 = vadd.f32 %v2815, %v2863
    %v2865 = vpop.f32.mrb[0].mxu0
    %2866 = vmatprep.mubr.bf16.mxu0 0
    %2867 = vmatmul.mubr.bf16.gmra.mrb[0].mxu0 %v2821
    %v2868 = vpop.f32.mrb[0].mxu0
    %v2869 = vadd.f32 %v2815, %v2868
    %v2870 = vpop.f32.mrb[0].mxu0
    %v2871 = vpop.f32.mrb[0].mxu0
    %v2872 = vadd.f32 %v2815, %v2871
    %v2873 = vpop.f32.mrb[0].mxu0
    %2874 = vmatprep.mubr.bf16.mxu0 0
    %2875 = vmatmul.mubr.bf16.gmra.mrb[0].mxu0 %v2824
    %v2876 = vpop.f32.mrb[0].mxu0
    %v2877 = vadd.f32 %v2815, %v2876
    %v2878 = vpop.f32.mrb[0].mxu0
    %v2879 = vpop.f32.mrb[0].mxu0
    %v2880 = vadd.f32 %v2815, %v2879
    %v2881 = vpop.f32.mrb[0].mxu0
    %2882 = vdwg.mxu0
    %v2883 = vadd.f32 %v1737, %v2861
    %v2884 = vadd.f32 %v1738, %v2864
    %v2885 = vadd.f32 %v1739, %v2869
    %v2886 = vadd.f32 %v1740, %v2872
    %v2887 = vadd.f32 %v1741, %v2877
    %v2888 = vadd.f32 %v1742, %v2880
    %v2889 = vsel %vm170, %v2883, 0.0
    %2890 = vadd.xlane.f32.xlu0 %v2889
    %v2891 = vpop.xlane.xlu0 %2890
    %v2892 = vsel %vm170, %v2884, 0.0
    %2893 = vadd.xlane.f32.xlu0 %v2892
    %v2894 = vpop.xlane.xlu0 %2893
    %v2895 = vsel %vm170, %v2885, 0.0
    %2896 = vadd.xlane.f32.xlu0 %v2895
    %v2897 = vpop.xlane.xlu0 %2896
    %v2898 = vsel %vm170, %v2886, 0.0
    %2899 = vadd.xlane.f32.xlu0 %v2898
    %v2900 = vpop.xlane.xlu0 %2899
    %v2901 = vsel %vm170, %v2887, 0.0
    %2902 = vadd.xlane.f32.xlu0 %v2901
    %v2903 = vpop.xlane.xlu0 %2902
    %v2904 = vsel %vm170, %v2888, 0.0
    %2905 = vadd.xlane.f32.xlu0 %v2904
    %v2906 = vpop.xlane.xlu0 %2905
    %v2907 = vmul.f32 %v2891, %v1361
    %v2908 = vmul.f32 %v2894, %v1361
    %v2909 = vmul.f32 %v2897, %v1361
    %v2910 = vmul.f32 %v2900, %v1361
    %v2911 = vmul.f32 %v2903, %v1361
    %v2912 = vmul.f32 %v2906, %v1361
    %v2913 = vsub.f32 %v2883, %v2907
    %v2914 = vsub.f32 %v2884, %v2908
    %v2915 = vsub.f32 %v2885, %v2909
    %v2916 = vsub.f32 %v2886, %v2910
    %v2917 = vsub.f32 %v2887, %v2911
    %v2918 = vsub.f32 %v2888, %v2912
    %v2919 = vmul.f32 %v2913, %v2913
    %v2920 = vmul.f32 %v2914, %v2914
    %v2921 = vmul.f32 %v2915, %v2915
    %v2922 = vmul.f32 %v2916, %v2916
    %v2923 = vmul.f32 %v2917, %v2917
    %v2924 = vmul.f32 %v2918, %v2918
    %v2925 = vsel %vm170, %v2919, 0.0
    %2926 = vadd.xlane.f32.xlu0 %v2925
    %v2927 = vpop.xlane.xlu0 %2926
    %v2928 = vsel %vm170, %v2920, 0.0
    %2929 = vadd.xlane.f32.xlu0 %v2928
    %v2930 = vpop.xlane.xlu0 %2929
    %v2931 = vsel %vm170, %v2921, 0.0
    %2932 = vadd.xlane.f32.xlu0 %v2931
    %v2933 = vpop.xlane.xlu0 %2932
    %v2934 = vsel %vm170, %v2922, 0.0
    %2935 = vadd.xlane.f32.xlu0 %v2934
    %v2936 = vpop.xlane.xlu0 %2935
    %v2937 = vsel %vm170, %v2923, 0.0
    %2938 = vadd.xlane.f32.xlu0 %v2937
    %v2939 = vpop.xlane.xlu0 %2938
    %v2940 = vsel %vm170, %v2924, 0.0
    %2941 = vadd.xlane.f32.xlu0 %v2940
    %v2942 = vpop.xlane.xlu0 %2941
    %v2943 = vmul.f32 %v2927, %v1361
    %v2944 = vmul.f32 %v2930, %v1361
    %v2945 = vmul.f32 %v2933, %v1361
    %v2946 = vmul.f32 %v2936, %v1361
    %v2947 = vmul.f32 %v2939, %v1361
    %v2948 = vmul.f32 %v2942, %v1361
    %v2949 = vadd.f32 %v2943, 1e-05
    %v2950 = vadd.f32 %v2944, 1e-05
    %v2951 = vadd.f32 %v2945, 1e-05
    %v2952 = vadd.f32 %v2946, 1e-05
    %v2953 = vadd.f32 %v2947, 1e-05
    %v2954 = vadd.f32 %v2948, 1e-05
    %v2955 = vrsqrt.pop %v2949
    %v2956 = vrsqrt.pop %v2950
    %v2957 = vrsqrt.pop %v2951
    %v2958 = vrsqrt.pop %v2952
    %v2959 = vrsqrt.pop %v2953
    %v2960 = vrsqrt.pop %v2954
    %v2961 = vmul.f32 %v2913, %v2955
    %v2962 = vmul.f32 %v2914, %v2956
    %v2963 = vmul.f32 %v2915, %v2957
    %v2964 = vmul.f32 %v2916, %v2958
    %v2965 = vmul.f32 %v2917, %v2959
    %v2966 = vmul.f32 %v2918, %v2960
    %2967 = vrot.lane.b32.xlu0 %v2805, 64
    %v2968 = vpop.permute.xlu0 %2967
    %v2970 = vmul.f32 %v2961, %v2968
    %v2971 = vmul.f32 %v2962, %v2968
    %v2972 = vmul.f32 %v2963, %v2968
    %v2973 = vmul.f32 %v2964, %v2968
    %v2974 = vmul.f32 %v2965, %v2968
    %v2975 = vmul.f32 %v2966, %v2968
    %2976 = vrot.lane.b32.xlu0 %v2805, 32
    %v2977 = vpop.permute.xlu0 %2976
    %v2979 = vadd.f32 %v2970, %v2977
    %v2980 = vadd.f32 %v2971, %v2977
    %v2981 = vadd.f32 %v2972, %v2977
    %v2982 = vadd.f32 %v2973, %v2977
    %v2983 = vadd.f32 %v2974, %v2977
    %v2984 = vadd.f32 %v2975, %v2977
    %v2985 = vpack.c.bf16 %v2980, %v2979
    %v2986 = vpack.c.bf16 %v2982, %v2981
    %v2987 = vpack.c.bf16 %v2984, %v2983
    %v2988 = vld [vmem:[%s1765 + $0x4] sm:$0x1]
    %v2990 = vlaneseq
    %v2991 = vshrl.u32 %v2990, 7
    %v2992 = vsub.s32 0, %v2991
    %v2993 = vrot.slane %v2988, %v2992
    %2995 = vrot.lane.b32.xlu0 %v1761, 96
    %v2996 = vpop.permute.xlu0 %2995
    %2997 = vrot.lane.b32.xlu0 %v1764, 96
    %v2998 = vpop.permute.xlu0 %2997
    %v3002 = vsel %vm170, %v2985, 0
    %v3005 = vsel %vm170, %v2986, 0
    %v3008 = vsel %vm170, %v2987, 0
    %3010 = vmatprep.subr.bf16.mxu0 0
    %3011 = vmatpush1.bf16.msra.mxu0 %v2996
    %3012 = vmatprep.subr.bf16.mxu0 0
    %3013 = vmatpush1.bf16.msra.mxu0 %v2998
    %3014 = vmatprep.subr.bf16.mxu0 0
    %3015 = vmatpush1.bf16.msra.mxu0 0
    %3016 = vmatprep.subr.bf16.mxu0 0
    %3017 = vmatpush1.bf16.msra.mxu0 0
    %3018 = vmatprep.subr.bf16.mxu0 0
    %3019 = vmatpush1.bf16.msra.mxu0 0
    %3020 = vmatprep.subr.bf16.mxu0 0
    %3021 = vmatpush1.bf16.msra.mxu0 0
    %3022 = vmatprep.subr.bf16.mxu0 0
    %3023 = vmatpush1.bf16.msra.mxu0 0
    %3024 = vmatprep.subr.bf16.mxu0 0
    %3025 = vmatpush1.bf16.msra.mxu0 0
    %3026 = vmatprep.subr.bf16.mxu0 0
    %3027 = vmatpush1.bf16.msra.mxu0 0
    %3028 = vmatprep.subr.bf16.mxu0 0
    %3029 = vmatpush1.bf16.msra.mxu0 0
    %3030 = vmatprep.subr.bf16.mxu0 0
    %3031 = vmatpush1.bf16.msra.mxu0 0
    %3032 = vmatprep.subr.bf16.mxu0 0
    %3033 = vmatpush1.bf16.msra.mxu0 0
    %3034 = vmatprep.subr.bf16.mxu0 0
    %3035 = vmatpush1.bf16.msra.mxu0 0
    %3036 = vmatprep.subr.bf16.mxu0 0
    %3037 = vmatpush1.bf16.msra.mxu0 0
    %3038 = vmatprep.subr.bf16.mxu0 0
    %3039 = vmatpush1.bf16.msra.mxu0 0
    %3040 = vmatprep.subr.bf16.mxu0 0
    %3041 = vmatpush1.bf16.msra.mxu0 0
    %3042 = vmatprep.mubr.bf16.mxu0 0
    %3043 = vmatmul.mubr.bf16.gmra.mrb[0].mxu0 %v3002
    %v3044 = vpop.f32.mrb[0].mxu0
    %v3045 = vadd.f32 %v2993, %v3044
    %v3046 = vpop.f32.mrb[0].mxu0
    %v3047 = vpop.f32.mrb[0].mxu0
    %v3048 = vadd.f32 %v2993, %v3047
    %v3049 = vpop.f32.mrb[0].mxu0
    %3050 = vmatprep.mubr.bf16.mxu0 0
    %3051 = vmatmul.mubr.bf16.gmra.mrb[0].mxu0 %v3005
    %v3052 = vpop.f32.mrb[0].mxu0
    %v3053 = vadd.f32 %v2993, %v3052
    %v3054 = vpop.f32.mrb[0].mxu0
    %v3055 = vpop.f32.mrb[0].mxu0
    %v3056 = vadd.f32 %v2993, %v3055
    %v3057 = vpop.f32.mrb[0].mxu0
    %3058 = vmatprep.mubr.bf16.mxu0 0
    %3059 = vmatmul.mubr.bf16.gmra.mrb[0].mxu0 %v3008
    %v3060 = vpop.f32.mrb[0].mxu0
    %v3061 = vadd.f32 %v2993, %v3060
    %v3062 = vpop.f32.mrb[0].mxu0
    %v3063 = vpop.f32.mrb[0].mxu0
    %v3064 = vadd.f32 %v2993, %v3063
    %v3065 = vpop.f32.mrb[0].mxu0
    %3066 = vdwg.mxu0
    %v3067 = vmul.f32 %v3045, 0.5
    %v3068 = vmul.f32 %v3048, 0.5
    %v3069 = vmul.f32 %v3053, 0.5
    %v3070 = vmul.f32 %v3056, 0.5
    %v3071 = vmul.f32 %v3061, 0.5
    %v3072 = vmul.f32 %v3064, 0.5
    %v3073 = vmul.f32 %v3045, 0.70710677
    %v3074 = vmul.f32 %v3048, 0.70710677
    %v3075 = vmul.f32 %v3053, 0.70710677
    %v3076 = vmul.f32 %v3056, 0.70710677
    %v3077 = vmul.f32 %v3061, 0.70710677
    %v3078 = vmul.f32 %v3064, 0.70710677
    %v3079 = verf.f32.pop %v3073
    %v3080 = verf.f32.pop %v3074
    %v3081 = verf.f32.pop %v3075
    %v3082 = verf.f32.pop %v3076
    %v3083 = verf.f32.pop %v3077
    %v3084 = verf.f32.pop %v3078
    %v3085 = vadd.f32 %v3079, 1.0
    %v3086 = vadd.f32 %v3080, 1.0
    %v3087 = vadd.f32 %v3081, 1.0
    %v3088 = vadd.f32 %v3082, 1.0
    %v3089 = vadd.f32 %v3083, 1.0
    %v3090 = vadd.f32 %v3084, 1.0
    %v3091 = vmul.f32 %v3067, %v3085
    %v3092 = vmul.f32 %v3068, %v3086
    %v3093 = vmul.f32 %v3069, %v3087
    %v3094 = vmul.f32 %v3070, %v3088
    %v3095 = vmul.f32 %v3071, %v3089
    %v3096 = vmul.f32 %v3072, %v3090
    %v3097 = vld [vmem:[%s1924 + $0x8] sm:$0xff]
    %v3098 = vld [vmem:[%s1924 + $0x18] sm:$0xff]
    %v3099 = vld [vmem:[%s1924 + $0x28] sm:$0xff]
    %v3100 = vld [vmem:[%s1924 + $0x38] sm:$0xff]
    %v3101 = vld [vmem:[%s1924 + $0x48] sm:$0xff]
    %v3102 = vld [vmem:[%s1924 + $0x58] sm:$0xff]
    %v3103 = vld [vmem:[%s1924 + $0x68] sm:$0xff]
    %v3104 = vld [vmem:[%s1924 + $0x78] sm:$0xff]
    %v3105 = vpack.c.bf16 %v3092, %v3091
    %v3106 = vpack.c.bf16 %v3094, %v3093
    %v3107 = vpack.c.bf16 %v3096, %v3095
    %v3108 = vpack.c.bf16 %v3098, %v3097
    %v3109 = vpack.c.bf16 %v3100, %v3099
    %v3110 = vpack.c.bf16 %v3102, %v3101
    %v3111 = vpack.c.bf16 %v3104, %v3103
    %3112 = vrot.lane.b32.xlu0 %v2993, 64
    %v3113 = vpop.permute.xlu0 %3112
    %v3116 = vsel %vm1570, %v3105, 0
    %v3119 = vsel %vm1570, %v3106, 0
    %v3122 = vsel %vm1570, %v3107, 0
    %3124 = vmatprep.subr.bf16.mxu0 0
    %3125 = vmatpush1.bf16.msra.mxu0 %v3108
    %3126 = vmatprep.subr.bf16.mxu0 0
    %3127 = vmatpush1.bf16.msra.mxu0 %v3109
    %3128 = vmatprep.subr.bf16.mxu0 0
    %3129 = vmatpush1.bf16.msra.mxu0 %v3110
    %3130 = vmatprep.subr.bf16.mxu0 0
    %3131 = vmatpush1.bf16.msra.mxu0 %v3111
    %3132 = vmatprep.subr.bf16.mxu0 0
    %3133 = vmatpush1.bf16.msra.mxu0 0
    %3134 = vmatprep.subr.bf16.mxu0 0
    %3135 = vmatpush1.bf16.msra.mxu0 0
    %3136 = vmatprep.subr.bf16.mxu0 0
    %3137 = vmatpush1.bf16.msra.mxu0 0
    %3138 = vmatprep.subr.bf16.mxu0 0
    %3139 = vmatpush1.bf16.msra.mxu0 0
    %3140 = vmatprep.subr.bf16.mxu0 0
    %3141 = vmatpush1.bf16.msra.mxu0 0
    %3142 = vmatprep.subr.bf16.mxu0 0
    %3143 = vmatpush1.bf16.msra.mxu0 0
    %3144 = vmatprep.subr.bf16.mxu0 0
    %3145 = vmatpush1.bf16.msra.mxu0 0
    %3146 = vmatprep.subr.bf16.mxu0 0
    %3147 = vmatpush1.bf16.msra.mxu0 0
    %3148 = vmatprep.subr.bf16.mxu0 0
    %3149 = vmatpush1.bf16.msra.mxu0 0
    %3150 = vmatprep.subr.bf16.mxu0 0
    %3151 = vmatpush1.bf16.msra.mxu0 0
    %3152 = vmatprep.subr.bf16.mxu0 0
    %3153 = vmatpush1.bf16.msra.mxu0 0
    %3154 = vmatprep.subr.bf16.mxu0 0
    %3155 = vmatpush1.bf16.msra.mxu0 0
    %3156 = vmatprep.mubr.bf16.mxu0 0
    %3157 = vmatmul.mubr.bf16.gmra.mrb[0].mxu0 %v3116
    %v3158 = vpop.f32.mrb[0].mxu0
    %v3159 = vadd.f32 %v3113, %v3158
    %v3160 = vpop.f32.mrb[0].mxu0
    %v3161 = vpop.f32.mrb[0].mxu0
    %v3162 = vpop.f32.mrb[0].mxu0
    %3163 = vmatprep.mubr.bf16.mxu0 0
    %3164 = vmatmul.mubr.bf16.gmra.mrb[0].mxu0 %v3119
    %v3165 = vpop.f32.mrb[0].mxu0
    %v3166 = vpop.f32.mrb[0].mxu0
    %v3167 = vpop.f32.mrb[0].mxu0
    %v3168 = vadd.f32 %v3113, %v3167
    %v3169 = vpop.f32.mrb[0].mxu0
    %3170 = vmatprep.mubr.bf16.mxu0 0
    %3171 = vmatmul.mubr.bf16.gmra.mrb[0].mxu0 %v3122
    %v3172 = vpop.f32.mrb[0].mxu0
    %v3173 = vpop.f32.mrb[0].mxu0
    %v3174 = vpop.f32.mrb[0].mxu0
    %v3175 = vpop.f32.mrb[0].mxu0
    %3176 = vdwg.mxu0
    %v3177 = vadd.f32 %v2979, %v3159
    %v3178 = vadd.f32 %v2982, %v3168
    %v3179 = vld [vmem:[%s1765 + $0x5] sm:$0x1]
    %v3180 = vsel %vm170, %v3177, 0.0
    %3181 = vadd.xlane.f32.xlu0 %v3180
    %v3182 = vpop.xlane.xlu0 %3181
    %v3183 = vsel %vm170, %v3178, 0.0
    %3184 = vadd.xlane.f32.xlu0 %v3183
    %v3185 = vpop.xlane.xlu0 %3184
    %v3186 = vmul.f32 %v3182, %v1361
    %v3187 = vmul.f32 %v3185, %v1361
    %v3188 = vsub.f32 %v3177, %v3186
    %v3189 = vsub.f32 %v3178, %v3187
    %v3190 = vmul.f32 %v3188, %v3188
    %v3191 = vmul.f32 %v3189, %v3189
    %v3192 = vsel %vm170, %v3190, 0.0
    %3193 = vadd.xlane.f32.xlu0 %v3192
    %v3194 = vpop.xlane.xlu0 %3193
    %v3195 = vsel %vm170, %v3191, 0.0
    %3196 = vadd.xlane.f32.xlu0 %v3195
    %v3197 = vpop.xlane.xlu0 %3196
    %v3198 = vmul.f32 %v3194, %v1361
    %v3199 = vmul.f32 %v3197, %v1361
    %v3200 = vadd.f32 %v3198, 1e-05
    %v3201 = vadd.f32 %v3199, 1e-05
    %v3202 = vrsqrt.pop %v3200
    %v3203 = vrsqrt.pop %v3201
    %v3204 = vmul.f32 %v3188, %v3202
    %v3205 = vmul.f32 %v3189, %v3203
    %3206 = vrot.lane.b32.xlu0 %v2993, 32
    %v3207 = vpop.permute.xlu0 %3206
    %v3209 = vmul.f32 %v3204, %v3207
    %v3210 = vmul.f32 %v3205, %v3207
    %v3212 = vlaneseq
    %v3213 = vshrl.u32 %v3212, 7
    %v3214 = vsub.s32 0, %v3213
    %v3215 = vrot.slane %v3179, %v3214
    %v3217 = vadd.f32 %v3209, %v3215
    %v3218 = vadd.f32 %v3210, %v3215
    %v3219 = vld [vmem:[%s2 + $0x51] sm:$0x1]
    %v3220 = vld [vmem:[%s2 + $0x52] sm:$0x1]
    %v3221 = vld [vmem:[%s2 + $0x30] sm:$0xff]
    %v3222 = vld [vmem:[%s2 + $0x38] sm:$0xff]
    %v3223 = vld [vmem:[%s2 + $0x40] sm:$0xff]
    %v3224 = vld [vmem:[%s2 + $0x48] sm:$0xff]
    %v3225 = vld [vmem:[%s2 + $0x50] sm:$0x1]
    %vm3226 = vcmask 253952
    %v3227 = vsel %vm3226, %v3217, 0.0
    %3228 = vadd.xlane.f32.xlu0 %v3227
    %v3229 = vpop.xlane.xlu0 %3228
    %v3230 = vmul.f32 %v3229, %v1361
    %v3231 = vsub.f32 %v3217, %v3230
    %v3232 = vmul.f32 %v3231, %v3231
    %v3233 = vsel %vm3226, %v3232, 0.0
    %3234 = vadd.xlane.f32.xlu0 %v3233
    %v3235 = vpop.xlane.xlu0 %3234
    %v3236 = vmul.f32 %v3235, %v1361
    %v3237 = vadd.f32 %v3236, 1e-05
    %v3238 = vrsqrt.pop %v3237
    %v3239 = vmul.f32 %v3231, %v3238
    %v3240 = vmul.f32 %v3239, %v3219
    %v3241 = vadd.f32 %v3240, %v3220
    %v3242 = vpack.c.bf16 %v3241, %v3241
    %v3243 = vpack.c.bf16 %v3222, %v3221
    %v3244 = vpack.c.bf16 %v3224, %v3223
    %v3246 = vsel %vm170, %v3242, 0
    %3248 = vmatprep.subr.bf16.mxu0 0
    %3249 = vmatpush1.bf16.msra.mxu0 %v3243
    %3250 = vmatprep.subr.bf16.mxu0 0
    %3251 = vmatpush1.bf16.msra.mxu0 %v3244
    %3252 = vmatprep.subr.bf16.mxu0 0
    %3253 = vmatpush1.bf16.msra.mxu0 0
    %3254 = vmatprep.subr.bf16.mxu0 0
    %3255 = vmatpush1.bf16.msra.mxu0 0
    %3256 = vmatprep.subr.bf16.mxu0 0
    %3257 = vmatpush1.bf16.msra.mxu0 0
    %3258 = vmatprep.subr.bf16.mxu0 0
    %3259 = vmatpush1.bf16.msra.mxu0 0
    %3260 = vmatprep.subr.bf16.mxu0 0
    %3261 = vmatpush1.bf16.msra.mxu0 0
    %3262 = vmatprep.subr.bf16.mxu0 0
    %3263 = vmatpush1.bf16.msra.mxu0 0
    %3264 = vmatprep.subr.bf16.mxu0 0
    %3265 = vmatpush1.bf16.msra.mxu0 0
    %3266 = vmatprep.subr.bf16.mxu0 0
    %3267 = vmatpush1.bf16.msra.mxu0 0
    %3268 = vmatprep.subr.bf16.mxu0 0
    %3269 = vmatpush1.bf16.msra.mxu0 0
    %3270 = vmatprep.subr.bf16.mxu0 0
    %3271 = vmatpush1.bf16.msra.mxu0 0
    %3272 = vmatprep.subr.bf16.mxu0 0
    %3273 = vmatpush1.bf16.msra.mxu0 0
    %3274 = vmatprep.subr.bf16.mxu0 0
    %3275 = vmatpush1.bf16.msra.mxu0 0
    %3276 = vmatprep.subr.bf16.mxu0 0
    %3277 = vmatpush1.bf16.msra.mxu0 0
    %3278 = vmatprep.subr.bf16.mxu0 0
    %3279 = vmatpush1.bf16.msra.mxu0 0
    %3280 = vmatprep.mubr.bf16.mxu0 0
    %3281 = vmatmul.mubr.bf16.gmra.mrb[0].mxu0 %v3246
    %v3282 = vpop.f32.mrb[0].mxu0
    %v3283 = vadd.f32 %v3225, %v3282
    %v3284 = vpop.f32.mrb[0].mxu0
    %v3285 = vpop.f32.mrb[0].mxu0
    %v3286 = vpop.f32.mrb[0].mxu0
    %3287 = vdwg.mxu0
    %3288 = vst [vmem:[#allocation2] sm:$0x1] %v3283
    %v3289 = vsel %vm3226, %v3218, 0.0
    %3290 = vadd.xlane.f32.xlu0 %v3289
    %v3291 = vpop.xlane.xlu0 %3290
    %v3292 = vmul.f32 %v3291, %v1361
    %v3293 = vsub.f32 %v3218, %v3292
    %v3294 = vmul.f32 %v3293, %v3293
    %v3295 = vsel %vm3226, %v3294, 0.0
    %3296 = vadd.xlane.f32.xlu0 %v3295
    %v3297 = vpop.xlane.xlu0 %3296
    %v3298 = vmul.f32 %v3297, %v1361
    %v3299 = vadd.f32 %v3298, 1e-05
    %v3300 = vrsqrt.pop %v3299
    %v3301 = vmul.f32 %v3293, %v3300
    %v3302 = vmul.f32 %v3301, %v3219
    %v3303 = vadd.f32 %v3302, %v3220
    %v3304 = vpack.c.bf16 %v3303, %v3303
    %v3306 = vsel %vm170, %v3304, 0
    %3308 = vmatprep.subr.bf16.mxu0 0
    %3309 = vmatpush1.bf16.msra.mxu0 %v3243
    %3310 = vmatprep.subr.bf16.mxu0 0
    %3311 = vmatpush1.bf16.msra.mxu0 %v3244
    %3312 = vmatprep.subr.bf16.mxu0 0
    %3313 = vmatpush1.bf16.msra.mxu0 0
    %3314 = vmatprep.subr.bf16.mxu0 0
    %3315 = vmatpush1.bf16.msra.mxu0 0
    %3316 = vmatprep.subr.bf16.mxu0 0
    %3317 = vmatpush1.bf16.msra.mxu0 0
    %3318 = vmatprep.subr.bf16.mxu0 0
    %3319 = vmatpush1.bf16.msra.mxu0 0
    %3320 = vmatprep.subr.bf16.mxu0 0
    %3321 = vmatpush1.bf16.msra.mxu0 0
    %3322 = vmatprep.subr.bf16.mxu0 0
    %3323 = vmatpush1.bf16.msra.mxu0 0
    %3324 = vmatprep.subr.bf16.mxu0 0
    %3325 = vmatpush1.bf16.msra.mxu0 0
    %3326 = vmatprep.subr.bf16.mxu0 0
    %3327 = vmatpush1.bf16.msra.mxu0 0
    %3328 = vmatprep.subr.bf16.mxu0 0
    %3329 = vmatpush1.bf16.msra.mxu0 0
    %3330 = vmatprep.subr.bf16.mxu0 0
    %3331 = vmatpush1.bf16.msra.mxu0 0
    %3332 = vmatprep.subr.bf16.mxu0 0
    %3333 = vmatpush1.bf16.msra.mxu0 0
    %3334 = vmatprep.subr.bf16.mxu0 0
    %3335 = vmatpush1.bf16.msra.mxu0 0
    %3336 = vmatprep.subr.bf16.mxu0 0
    %3337 = vmatpush1.bf16.msra.mxu0 0
    %3338 = vmatprep.subr.bf16.mxu0 0
    %3339 = vmatpush1.bf16.msra.mxu0 0
    %3340 = vmatprep.mubr.bf16.mxu0 0
    %3341 = vmatmul.mubr.bf16.gmra.mrb[0].mxu0 %v3306
    %v3342 = vpop.f32.mrb[0].mxu0
    %v3343 = vadd.f32 %v3225, %v3342
    %v3344 = vpop.f32.mrb[0].mxu0
    %v3345 = vpop.f32.mrb[0].mxu0
    %v3346 = vpop.f32.mrb[0].mxu0
    %3347 = vdwg.mxu0
    %3348 = vst [vmem:[#allocation2 + $0x1] sm:$0x1] %v3343
    // Predicated region
    $region26: #{model_forward.1} parent=1 // pred_check
      _
    $region27: #{model_forward.1} parent=1 // pred_check_branch
      %3350 = sbr.rel (0) target = $region29
    $region28: #{model_forward.1} parent=1 // pred_region
      %s3352 = ssub.s32 32, 32
      %3353 = vsyncadd [#allocation3], %s3352
      %s3355 = sshll.u32 [#allocation2], 4
      %s3356 = int_to_ptr.vmem [resolvable:$true] %s3355
      %3358 = dma.vmem_to_hbm [thread:$0]  %s3356, 32, %s6, [#allocation3]
    $region29: #{model_forward.1} parent=1 // pred_fallthru
      _
    // Predicated region
    $region30: #{model_forward.1} parent=1 // pred_check
      _
    $region31: #{model_forward.1} parent=1 // pred_check_branch
      %3360 = sbr.rel (0) target = $region33
    $region32: #{model_forward.1} parent=1 // pred_region
      %3361 = dma.done [#allocation3], 32
    $region33: #{model_forward.1} parent=1 // pred_fallthru
      _
    %3362 = vsyncpa [#allocation3], 1

</llo_original>
